<compile_context>
chip_gen: v7x
topology: tpu7x:2x2x1
jax: 0.10.0
libtpu: 0.0.40
codegen_flags: <defaults>
</compile_context>

<pallas_src>
import jax
import jax.numpy as jnp
import numpy as np
from jax import lax
from jax.experimental import pallas as pl
from jax.experimental.pallas import tpu as pltpu

EPS = 1e-3


def add_conv1x1_bn_kernel(x1_ref, x2_ref, w_ref, gb_ref, o_ref):
    # x1/x2: [Cin, P]   w: [BC, Cin]   gb: [BC, 2] (gamma|beta)   o: [BC, P]
    s = x1_ref[...] + x2_ref[...]                                   # elementwise add (VPU)
    y = jnp.dot(w_ref[...], s, preferred_element_type=jnp.float32)  # 1x1 conv == matmul (MXU)

    # BatchNorm (training mode): per-channel stats over the P = N*H*W axis.
    # Two-pass variance (numerically safer than E[y^2] - mean^2).
    inv_p = 1.0 / y.shape[-1]
    mean = jnp.sum(y, axis=-1, keepdims=True) * inv_p               # [BC, 1]
    d = y - mean
    var = jnp.sum(d * d, axis=-1, keepdims=True) * inv_p            # [BC, 1]
    inv = lax.rsqrt(var + EPS)                                      # EUP

    gamma = gb_ref[:, 0:1]                                          # [BC, 1]
    beta = gb_ref[:, 1:2]                                           # [BC, 1]
    o_ref[...] = d * (gamma * inv) + beta


def _num_tensorcores():
    """Best-effort number of TensorCores per device (v7x -> 2, v5e/v6e -> 1)."""
    try:
        info = pltpu.get_tpu_info()
        for attr in ("num_cores", "core_count", "num_tensorcores", "tensorcore_count"):
            v = getattr(info, attr, None)
            if isinstance(v, int) and v > 0:
                return v
    except Exception:
        pass
    try:
        kind = jax.devices()[0].device_kind.lower()
        if "v7" in kind:
            return 2
    except Exception:
        pass
    return 1


def add_conv_bn(x318_nchw, x303_nchw, conv_w_oihw, gamma, beta):
    N, Cin, H, W = x318_nchw.shape
    Cout = conv_w_oihw.shape[0]
    assert N == 1, "channels-major free reshape assumes N == 1 (module spec shape)"
    P = N * H * W

    # Free reshapes (no transposes, no extra HBM round-trips).
    x1 = x318_nchw.reshape(Cin, P).astype(jnp.float32)
    x2 = x303_nchw.reshape(Cin, P).astype(jnp.float32)
    w = conv_w_oihw.reshape(Cout, Cin).astype(jnp.float32)
    gb = jnp.stack(
        [gamma.reshape(Cout).astype(jnp.float32),
         beta.reshape(Cout).astype(jnp.float32)], axis=-1)          # [Cout, 2]

    # One block per TensorCore: grid=(1,) on v5e/v6e, grid=(2,) on v7x.
    n_cores = _num_tensorcores()
    if n_cores > 1 and Cout % n_cores == 0 and (Cout // n_cores) % 8 == 0:
        n_blocks = n_cores
    else:
        n_blocks = 1
    BC = Cout // n_blocks
    grid = (n_blocks,)

    bytes_accessed = (2 * Cin * P + Cout * Cin + 2 * Cout + Cout * P) * 4
    cost = pl.CostEstimate(
        flops=2 * P * Cin * Cout,
        transcendentals=Cout,
        bytes_accessed=bytes_accessed,
    )

    out_flat = pl.pallas_call(
        add_conv1x1_bn_kernel,
        out_shape=jax.ShapeDtypeStruct((Cout, P), jnp.float32),
        grid=grid,
        in_specs=[
            pl.BlockSpec((Cin, P), lambda i: (0, 0)),    # x1 (full, resident)
            pl.BlockSpec((Cin, P), lambda i: (0, 0)),    # x2 (full, resident)
            pl.BlockSpec((BC, Cin), lambda i: (i, 0)),   # weight block
            pl.BlockSpec((BC, 2), lambda i: (i, 0)),     # packed gamma|beta block
        ],
        out_specs=pl.BlockSpec((BC, P), lambda i: (i, 0)),
        compiler_params=pltpu.CompilerParams(
            dimension_semantics=("parallel",)),
        cost_estimate=cost,
    )(x1, x2, w, gb)

    # [Cout, P] -> NCHW [N, Cout, H, W] (free reshape, N == 1).
    return out_flat.reshape(N, Cout, H, W)


def _reference(x318, x303, conv_w, gamma, beta):
    s = x318 + x303
    y = lax.conv_general_dilated(
        s, conv_w, window_strides=(1, 1), padding="VALID",
        dimension_numbers=("NCHW", "OIHW", "NCHW"))
    mean = jnp.mean(y, axis=(0, 2, 3), keepdims=True)
    var = jnp.mean((y - mean) ** 2, axis=(0, 2, 3), keepdims=True)
    return ((y - mean) * lax.rsqrt(var + EPS)
            * gamma.reshape(1, -1, 1, 1) + beta.reshape(1, -1, 1, 1))


if __name__ == "__main__":
    key = jax.random.PRNGKey(0)
    k1, k2, k3 = jax.random.split(key, 3)

    N, Cin, H, W = 1, 160, 14, 14
    Cout = 960

    x318 = jax.random.normal(k1, (N, Cin, H, W), dtype=jnp.float32)
    x303 = jax.random.normal(k2, (N, Cin, H, W), dtype=jnp.float32)

    # Conv2d(160, 960, 1x1, bias=False): kaiming-uniform-like deterministic init
    fan_in = Cin * 1 * 1
    bound = (1.0 / fan_in) ** 0.5
    conv_w = jax.random.uniform(
        k3, (Cout, Cin, 1, 1), dtype=jnp.float32, minval=-bound, maxval=bound)

    # BatchNorm2d affine params (PyTorch init: weight=1, bias=0)
    gamma = jnp.ones((Cout,), dtype=jnp.float32)
    beta = jnp.zeros((Cout,), dtype=jnp.float32)

    out = add_conv_bn(x318, x303, conv_w, gamma, beta)
    jax.block_until_ready(out)

    assert out.shape == (N, Cout, H, W), out.shape

    ref = _reference(x318, x303, conv_w, gamma, beta)
    jax.block_until_ready(ref)
    assert np.allclose(np.asarray(out), np.asarray(ref), rtol=1e-3, atol=1e-3), \
        float(np.max(np.abs(np.asarray(out) - np.asarray(ref))))

    print("KERNEL_OK")
</pallas_src>

<mosaic_0001>
module attributes {stable_mosaic.version = 11 : i64} {
  func.func @add_conv1x1_bn_kernel(%arg0: i32, %arg1: memref<160x196xf32, #tpu.memory_space<vmem>>, %arg2: memref<160x196xf32, #tpu.memory_space<vmem>>, %arg3: memref<960x160xf32, #tpu.memory_space<vmem>>, %arg4: memref<960x2xf32, #tpu.memory_space<vmem>>, %arg5: memref<960x196xf32, #tpu.memory_space<vmem>>) attributes {dimension_semantics = [#tpu.dimension_semantics<parallel>], iteration_bounds = array<i64: 1>, scalar_prefetch = 0 : i64, scratch_operands = 0 : i64, tpu.core_type = #tpu.core_type<tc>, window_params = [{pipeline_mode = #tpu.pipeline_mode<synchronous>, transform_indices = @transform_0, window_bounds = array<i64: 160, 196>}, {pipeline_mode = #tpu.pipeline_mode<synchronous>, transform_indices = @transform_1, window_bounds = array<i64: 160, 196>}, {transform_indices = @transform_2, window_bounds = array<i64: 960, 160>}, {transform_indices = @transform_3, window_bounds = array<i64: 960, 2>}, {transform_indices = @transform_4, window_bounds = array<i64: 960, 196>}]} {
    %c0 = arith.constant 0 : index
    %c0_0 = arith.constant 0 : index
    %0 = vector.load %arg1[%c0, %c0_0] : memref<160x196xf32, #tpu.memory_space<vmem>>, vector<160x196xf32>
    %c0_1 = arith.constant 0 : index
    %c0_2 = arith.constant 0 : index
    %1 = vector.load %arg2[%c0_1, %c0_2] : memref<160x196xf32, #tpu.memory_space<vmem>>, vector<160x196xf32>
    %2 = arith.addf %0, %1 : vector<160x196xf32>
    %c0_3 = arith.constant 0 : index
    %c0_4 = arith.constant 0 : index
    %3 = vector.load %arg3[%c0_3, %c0_4] : memref<960x160xf32, #tpu.memory_space<vmem>>, vector<960x160xf32>
    %cst = arith.constant dense<0.000000e+00> : vector<960x196xf32>
    %4 = tpu.matmul %3, %2, %cst {dimension_numbers = #tpu.dot_dimension_numbers<[1], [0], [0], [1], [0, 0, 1, 1], [], []>} : vector<960x160xf32>, vector<160x196xf32>, vector<960x196xf32> -> vector<960x196xf32>
    %cst_5 = arith.constant dense<0.000000e+00> : vector<960xf32>
    %5 = vector.multi_reduction <add>, %4, %cst_5 [1] : vector<960x196xf32> to vector<960xf32>
    %6 = vector.shape_cast %5 : vector<960xf32> to vector<960x1xf32>
    %cst_6 = arith.constant 0.00510204071 : f32
    %7 = vector.broadcast %cst_6 : f32 to vector<960x1xf32>
    %8 = arith.mulf %6, %7 : vector<960x1xf32>
    %9 = vector.broadcast %8 : vector<960x1xf32> to vector<960x196xf32>
    %10 = arith.subf %4, %9 : vector<960x196xf32>
    %11 = arith.mulf %10, %10 : vector<960x196xf32>
    %cst_7 = arith.constant dense<0.000000e+00> : vector<960xf32>
    %12 = vector.multi_reduction <add>, %11, %cst_7 [1] : vector<960x196xf32> to vector<960xf32>
    %13 = vector.shape_cast %12 : vector<960xf32> to vector<960x1xf32>
    %cst_8 = arith.constant 0.00510204071 : f32
    %14 = vector.broadcast %cst_8 : f32 to vector<960x1xf32>
    %15 = arith.mulf %13, %14 : vector<960x1xf32>
    %cst_9 = arith.constant 1.000000e-03 : f32
    %16 = vector.broadcast %cst_9 : f32 to vector<960x1xf32>
    %17 = arith.addf %15, %16 : vector<960x1xf32>
    %18 = math.rsqrt %17 : vector<960x1xf32>
    %c0_10 = arith.constant 0 : index
    %c0_11 = arith.constant 0 : index
    %19 = vector.load %arg4[%c0_10, %c0_11] : memref<960x2xf32, #tpu.memory_space<vmem>>, vector<960x1xf32>
    %c0_12 = arith.constant 0 : index
    %c1 = arith.constant 1 : index
    %20 = vector.load %arg4[%c0_12, %c1] : memref<960x2xf32, #tpu.memory_space<vmem>>, vector<960x1xf32>
    %21 = arith.mulf %19, %18 : vector<960x1xf32>
    %22 = vector.broadcast %21 : vector<960x1xf32> to vector<960x196xf32>
    %23 = arith.mulf %10, %22 : vector<960x196xf32>
    %24 = vector.broadcast %20 : vector<960x1xf32> to vector<960x196xf32>
    %25 = arith.addf %23, %24 : vector<960x196xf32>
    %c0_13 = arith.constant 0 : index
    %c0_14 = arith.constant 0 : index
    %26 = vector.load %arg5[%c0_13, %c0_14] : memref<960x196xf32, #tpu.memory_space<vmem>>, vector<960x196xf32>
    tpu.vector_store %arg5[%c0_13, %c0_14], %25 {strides = array<i32>} : memref<960x196xf32, #tpu.memory_space<vmem>>, vector<960x196xf32>,
    return
  }
  func.func @transform_0(%arg0: i32) -> (i32, i32) {
    %c0_i32 = arith.constant 0 : i32
    %c0_i32_0 = arith.constant 0 : i32
    %c0_i32_1 = arith.constant 0 : i32
    return %c0_i32, %c0_i32_0 : i32, i32
  }
  func.func @transform_1(%arg0: i32) -> (i32, i32) {
    %c0_i32 = arith.constant 0 : i32
    %c0_i32_0 = arith.constant 0 : i32
    %c0_i32_1 = arith.constant 0 : i32
    return %c0_i32, %c0_i32_0 : i32, i32
  }
  func.func @transform_2(%arg0: i32) -> (i32, i32) {
    %c0_i32 = arith.constant 0 : i32
    %c0_i32_0 = arith.constant 0 : i32
    return %arg0, %c0_i32 : i32, i32
  }
  func.func @transform_3(%arg0: i32) -> (i32, i32) {
    %c0_i32 = arith.constant 0 : i32
    %c0_i32_0 = arith.constant 0 : i32
    return %arg0, %c0_i32 : i32, i32
  }
  func.func @transform_4(%arg0: i32) -> (i32, i32) {
    %c0_i32 = arith.constant 0 : i32
    %c0_i32_0 = arith.constant 0 : i32
    return %arg0, %c0_i32 : i32, i32
  }
}

</mosaic_0001>

<llo_original>
// kernel: tpu_custom_call.1
$region0: #{tpu_custom_call.1}
  #allocation0 [shape = 'u32[]', space=smem, size = 0x4, offset = 0x4, fixed_abs, tag = 'smem constant byte address 0x4 - core index']
  #allocation1 [shape = 'u32[144,128]{1,0:T(1,128)}', space=vmem, size = 0x12000, scoped, tag = 'internal scratch']
  %s0 = inlined_call_operand.vmem [shape: f32[160,196], index: 0, kind: input, shape index: {}]
  %s1 = inlined_call_operand.vmem [shape: f32[160,196], index: 1, kind: input, shape index: {}]
  %s2 = inlined_call_operand.vmem [shape: f32[960,160], index: 2, kind: input, shape index: {}]
  %s3 = inlined_call_operand.vmem [shape: f32[960,2], index: 3, kind: input, shape index: {}]
  %s4 = inlined_call_operand.vmem [shape: f32[960,196], index: 4, kind: output, shape index: {}]
  %s5 = sld [smem:[#allocation0]]
  $region26: #{tpu_custom_call.1} parent=0
    _
  %s7 = ssub.s32 1, %s5
  %s8 = scalar_select 0, %s7, %s5
  // Predicated region
  $region2: #{tpu_custom_call.1} parent=0 // pred_check
    _
  $region3: #{tpu_custom_call.1} parent=0 // pred_check_branch
    %10 = sbr.rel (0) target = $region5
  $region4: #{tpu_custom_call.1} parent=0 // pred_region
    _
  $region5: #{tpu_custom_call.1} parent=0 // pred_fallthru
    _
  // Predicated region
  $region6: #{tpu_custom_call.1} parent=0 // pred_check
    _
  $region7: #{tpu_custom_call.1} parent=0 // pred_check_branch
    %12 = sbr.rel (0) target = $region9
  $region8: #{tpu_custom_call.1} parent=0 // pred_region
    _
  $region9: #{tpu_custom_call.1} parent=0 // pred_fallthru
    _
  // Predicated region
  $region10: #{tpu_custom_call.1} parent=0 // pred_check
    _
  $region11: #{tpu_custom_call.1} parent=0 // pred_check_branch
    %14 = sbr.rel (0) target = $region13
  $region12: #{tpu_custom_call.1} parent=0 // pred_region
    _
  $region13: #{tpu_custom_call.1} parent=0 // pred_fallthru
    _
  // Predicated region
  $region14: #{tpu_custom_call.1} parent=0 // pred_check
    _
  $region15: #{tpu_custom_call.1} parent=0 // pred_check_branch
    %16 = sbr.rel (0) target = $region17
  $region16: #{tpu_custom_call.1} parent=0 // pred_region
    _
  $region17: #{tpu_custom_call.1} parent=0 // pred_fallthru
    _
  %v17 = vld [vmem:[%s0] sm:$0xff]
  %v18 = vld [vmem:[%s0 + $0x8] sm:$0xff]
  %v19 = vld [vmem:[%s0 + $0x10] sm:$0xff]
  %v20 = vld [vmem:[%s0 + $0x18] sm:$0xff]
  %v21 = vld [vmem:[%s0 + $0x20] sm:$0xff]
  %v22 = vld [vmem:[%s0 + $0x28] sm:$0xff]
  %v23 = vld [vmem:[%s0 + $0x30] sm:$0xff]
  %v24 = vld [vmem:[%s0 + $0x38] sm:$0xff]
  %v25 = vld [vmem:[%s0 + $0x40] sm:$0xff]
  %v26 = vld [vmem:[%s0 + $0x48] sm:$0xff]
  %v27 = vld [vmem:[%s0 + $0x50] sm:$0xff]
  %v28 = vld [vmem:[%s0 + $0x58] sm:$0xff]
  %v29 = vld [vmem:[%s0 + $0x60] sm:$0xff]
  %v30 = vld [vmem:[%s0 + $0x68] sm:$0xff]
  %v31 = vld [vmem:[%s0 + $0x70] sm:$0xff]
  %v32 = vld [vmem:[%s0 + $0x78] sm:$0xff]
  %v33 = vld [vmem:[%s0 + $0x80] sm:$0xff]
  %v34 = vld [vmem:[%s0 + $0x88] sm:$0xff]
  %v35 = vld [vmem:[%s0 + $0x90] sm:$0xff]
  %v36 = vld [vmem:[%s0 + $0x98] sm:$0xff]
  %v37 = vld [vmem:[%s0 + $0xa0] sm:$0xff]
  %v38 = vld [vmem:[%s0 + $0xa8] sm:$0xff]
  %v39 = vld [vmem:[%s0 + $0xb0] sm:$0xff]
  %v40 = vld [vmem:[%s0 + $0xb8] sm:$0xff]
  %v41 = vld [vmem:[%s0 + $0xc0] sm:$0xff]
  %v42 = vld [vmem:[%s0 + $0xc8] sm:$0xff]
  %v43 = vld [vmem:[%s0 + $0xd0] sm:$0xff]
  %v44 = vld [vmem:[%s0 + $0xd8] sm:$0xff]
  %v45 = vld [vmem:[%s0 + $0xe0] sm:$0xff]
  %v46 = vld [vmem:[%s0 + $0xe8] sm:$0xff]
  %v47 = vld [vmem:[%s0 + $0xf0] sm:$0xff]
  %v48 = vld [vmem:[%s0 + $0xf8] sm:$0xff]
  %v49 = vld [vmem:[%s0 + $0x100] sm:$0xff]
  %v50 = vld [vmem:[%s0 + $0x108] sm:$0xff]
  %v51 = vld [vmem:[%s0 + $0x110] sm:$0xff]
  %v52 = vld [vmem:[%s0 + $0x118] sm:$0xff]
  %v53 = vld [vmem:[%s0 + $0x120] sm:$0xff]
  %v54 = vld [vmem:[%s0 + $0x128] sm:$0xff]
  %v55 = vld [vmem:[%s0 + $0x130] sm:$0xff]
  %v56 = vld [vmem:[%s0 + $0x138] sm:$0xff]
  %v57 = vld [vmem:[%s1] sm:$0xff]
  %v58 = vld [vmem:[%s1 + $0x8] sm:$0xff]
  %v59 = vld [vmem:[%s1 + $0x10] sm:$0xff]
  %v60 = vld [vmem:[%s1 + $0x18] sm:$0xff]
  %v61 = vld [vmem:[%s1 + $0x20] sm:$0xff]
  %v62 = vld [vmem:[%s1 + $0x28] sm:$0xff]
  %v63 = vld [vmem:[%s1 + $0x30] sm:$0xff]
  %v64 = vld [vmem:[%s1 + $0x38] sm:$0xff]
  %v65 = vld [vmem:[%s1 + $0x40] sm:$0xff]
  %v66 = vld [vmem:[%s1 + $0x48] sm:$0xff]
  %v67 = vld [vmem:[%s1 + $0x50] sm:$0xff]
  %v68 = vld [vmem:[%s1 + $0x58] sm:$0xff]
  %v69 = vld [vmem:[%s1 + $0x60] sm:$0xff]
  %v70 = vld [vmem:[%s1 + $0x68] sm:$0xff]
  %v71 = vld [vmem:[%s1 + $0x70] sm:$0xff]
  %v72 = vld [vmem:[%s1 + $0x78] sm:$0xff]
  %v73 = vld [vmem:[%s1 + $0x80] sm:$0xff]
  %v74 = vld [vmem:[%s1 + $0x88] sm:$0xff]
  %v75 = vld [vmem:[%s1 + $0x90] sm:$0xff]
  %v76 = vld [vmem:[%s1 + $0x98] sm:$0xff]
  %v77 = vld [vmem:[%s1 + $0xa0] sm:$0xff]
  %v78 = vld [vmem:[%s1 + $0xa8] sm:$0xff]
  %v79 = vld [vmem:[%s1 + $0xb0] sm:$0xff]
  %v80 = vld [vmem:[%s1 + $0xb8] sm:$0xff]
  %v81 = vld [vmem:[%s1 + $0xc0] sm:$0xff]
  %v82 = vld [vmem:[%s1 + $0xc8] sm:$0xff]
  %v83 = vld [vmem:[%s1 + $0xd0] sm:$0xff]
  %v84 = vld [vmem:[%s1 + $0xd8] sm:$0xff]
  %v85 = vld [vmem:[%s1 + $0xe0] sm:$0xff]
  %v86 = vld [vmem:[%s1 + $0xe8] sm:$0xff]
  %v87 = vld [vmem:[%s1 + $0xf0] sm:$0xff]
  %v88 = vld [vmem:[%s1 + $0xf8] sm:$0xff]
  %v89 = vld [vmem:[%s1 + $0x100] sm:$0xff]
  %v90 = vld [vmem:[%s1 + $0x108] sm:$0xff]
  %v91 = vld [vmem:[%s1 + $0x110] sm:$0xff]
  %v92 = vld [vmem:[%s1 + $0x118] sm:$0xff]
  %v93 = vld [vmem:[%s1 + $0x120] sm:$0xff]
  %v94 = vld [vmem:[%s1 + $0x128] sm:$0xff]
  %v95 = vld [vmem:[%s1 + $0x130] sm:$0xff]
  %v96 = vld [vmem:[%s1 + $0x138] sm:$0xff]
  %v97 = vadd.f32 %v17, %v57
  %v98 = vadd.f32 %v18, %v58
  %v99 = vadd.f32 %v19, %v59
  %v100 = vadd.f32 %v20, %v60
  %v101 = vadd.f32 %v21, %v61
  %v102 = vadd.f32 %v22, %v62
  %v103 = vadd.f32 %v23, %v63
  %v104 = vadd.f32 %v24, %v64
  %v105 = vadd.f32 %v25, %v65
  %v106 = vadd.f32 %v26, %v66
  %v107 = vadd.f32 %v27, %v67
  %v108 = vadd.f32 %v28, %v68
  %v109 = vadd.f32 %v29, %v69
  %v110 = vadd.f32 %v30, %v70
  %v111 = vadd.f32 %v31, %v71
  %v112 = vadd.f32 %v32, %v72
  %v113 = vadd.f32 %v33, %v73
  %v114 = vadd.f32 %v34, %v74
  %v115 = vadd.f32 %v35, %v75
  %v116 = vadd.f32 %v36, %v76
  %v117 = vadd.f32 %v37, %v77
  %v118 = vadd.f32 %v38, %v78
  %v119 = vadd.f32 %v39, %v79
  %v120 = vadd.f32 %v40, %v80
  %v121 = vadd.f32 %v41, %v81
  %v122 = vadd.f32 %v42, %v82
  %v123 = vadd.f32 %v43, %v83
  %v124 = vadd.f32 %v44, %v84
  %v125 = vadd.f32 %v45, %v85
  %v126 = vadd.f32 %v46, %v86
  %v127 = vadd.f32 %v47, %v87
  %v128 = vadd.f32 %v48, %v88
  %v129 = vadd.f32 %v49, %v89
  %v130 = vadd.f32 %v50, %v90
  %v131 = vadd.f32 %v51, %v91
  %v132 = vadd.f32 %v52, %v92
  %v133 = vadd.f32 %v53, %v93
  %v134 = vadd.f32 %v54, %v94
  %v135 = vadd.f32 %v55, %v95
  %v136 = vadd.f32 %v56, %v96
  %v137 = vld [vmem:[%s2] sm:$0xff]
  %v138 = vld [vmem:[%s2 + $0x8] sm:$0xff]
  %v139 = vld [vmem:[%s2 + $0x10] sm:$0xff]
  %v140 = vld [vmem:[%s2 + $0x18] sm:$0xff]
  %v141 = vld [vmem:[%s2 + $0x20] sm:$0xff]
  %v142 = vld [vmem:[%s2 + $0x28] sm:$0xff]
  %v143 = vld [vmem:[%s2 + $0x30] sm:$0xff]
  %v144 = vld [vmem:[%s2 + $0x38] sm:$0xff]
  %v145 = vld [vmem:[%s2 + $0x40] sm:$0xff]
  %v146 = vld [vmem:[%s2 + $0x48] sm:$0xff]
  %v147 = vld [vmem:[%s2 + $0x50] sm:$0xff]
  %v148 = vld [vmem:[%s2 + $0x58] sm:$0xff]
  %v149 = vld [vmem:[%s2 + $0x60] sm:$0xff]
  %v150 = vld [vmem:[%s2 + $0x68] sm:$0xff]
  %v151 = vld [vmem:[%s2 + $0x70] sm:$0xff]
  %v152 = vld [vmem:[%s2 + $0x78] sm:$0xff]
  %v153 = vld [vmem:[%s2 + $0x80] sm:$0xff]
  %v154 = vld [vmem:[%s2 + $0x88] sm:$0xff]
  %v155 = vld [vmem:[%s2 + $0x90] sm:$0xff]
  %v156 = vld [vmem:[%s2 + $0x98] sm:$0xff]
  %v157 = vld [vmem:[%s2 + $0xa0] sm:$0xff]
  %v158 = vld [vmem:[%s2 + $0xa8] sm:$0xff]
  %v159 = vld [vmem:[%s2 + $0xb0] sm:$0xff]
  %v160 = vld [vmem:[%s2 + $0xb8] sm:$0xff]
  %v161 = vld [vmem:[%s2 + $0xc0] sm:$0xff]
  %v162 = vld [vmem:[%s2 + $0xc8] sm:$0xff]
  %v163 = vld [vmem:[%s2 + $0xd0] sm:$0xff]
  %v164 = vld [vmem:[%s2 + $0xd8] sm:$0xff]
  %v165 = vld [vmem:[%s2 + $0xe0] sm:$0xff]
  %v166 = vld [vmem:[%s2 + $0xe8] sm:$0xff]
  %v167 = vld [vmem:[%s2 + $0xf0] sm:$0xff]
  %v168 = vld [vmem:[%s2 + $0xf8] sm:$0xff]
  %v169 = vld [vmem:[%s2 + $0x100] sm:$0xff]
  %v170 = vld [vmem:[%s2 + $0x108] sm:$0xff]
  %v171 = vld [vmem:[%s2 + $0x110] sm:$0xff]
  %v172 = vld [vmem:[%s2 + $0x118] sm:$0xff]
  %v173 = vld [vmem:[%s2 + $0x120] sm:$0xff]
  %v174 = vld [vmem:[%s2 + $0x128] sm:$0xff]
  %v175 = vld [vmem:[%s2 + $0x130] sm:$0xff]
  %v176 = vld [vmem:[%s2 + $0x138] sm:$0xff]
  %v177 = vld [vmem:[%s2 + $0x140] sm:$0xff]
  %v178 = vld [vmem:[%s2 + $0x148] sm:$0xff]
  %v179 = vld [vmem:[%s2 + $0x150] sm:$0xff]
  %v180 = vld [vmem:[%s2 + $0x158] sm:$0xff]
  %v181 = vld [vmem:[%s2 + $0x160] sm:$0xff]
  %v182 = vld [vmem:[%s2 + $0x168] sm:$0xff]
  %v183 = vld [vmem:[%s2 + $0x170] sm:$0xff]
  %v184 = vld [vmem:[%s2 + $0x178] sm:$0xff]
  %v185 = vld [vmem:[%s2 + $0x180] sm:$0xff]
  %v186 = vld [vmem:[%s2 + $0x188] sm:$0xff]
  %v187 = vld [vmem:[%s2 + $0x190] sm:$0xff]
  %v188 = vld [vmem:[%s2 + $0x198] sm:$0xff]
  %v189 = vld [vmem:[%s2 + $0x1a0] sm:$0xff]
  %v190 = vld [vmem:[%s2 + $0x1a8] sm:$0xff]
  %v191 = vld [vmem:[%s2 + $0x1b0] sm:$0xff]
  %v192 = vld [vmem:[%s2 + $0x1b8] sm:$0xff]
  %v193 = vld [vmem:[%s2 + $0x1c0] sm:$0xff]
  %v194 = vld [vmem:[%s2 + $0x1c8] sm:$0xff]
  %v195 = vld [vmem:[%s2 + $0x1d0] sm:$0xff]
  %v196 = vld [vmem:[%s2 + $0x1d8] sm:$0xff]
  %v197 = vld [vmem:[%s2 + $0x1e0] sm:$0xff]
  %v198 = vld [vmem:[%s2 + $0x1e8] sm:$0xff]
  %v199 = vld [vmem:[%s2 + $0x1f0] sm:$0xff]
  %v200 = vld [vmem:[%s2 + $0x1f8] sm:$0xff]
  %v201 = vld [vmem:[%s2 + $0x200] sm:$0xff]
  %v202 = vld [vmem:[%s2 + $0x208] sm:$0xff]
  %v203 = vld [vmem:[%s2 + $0x210] sm:$0xff]
  %v204 = vld [vmem:[%s2 + $0x218] sm:$0xff]
  %v205 = vld [vmem:[%s2 + $0x220] sm:$0xff]
  %v206 = vld [vmem:[%s2 + $0x228] sm:$0xff]
  %v207 = vld [vmem:[%s2 + $0x230] sm:$0xff]
  %v208 = vld [vmem:[%s2 + $0x238] sm:$0xff]
  %v209 = vld [vmem:[%s2 + $0x240] sm:$0xff]
  %v210 = vld [vmem:[%s2 + $0x248] sm:$0xff]
  %v211 = vld [vmem:[%s2 + $0x250] sm:$0xff]
  %v212 = vld [vmem:[%s2 + $0x258] sm:$0xff]
  %v213 = vld [vmem:[%s2 + $0x260] sm:$0xff]
  %v214 = vld [vmem:[%s2 + $0x268] sm:$0xff]
  %v215 = vld [vmem:[%s2 + $0x270] sm:$0xff]
  %v216 = vld [vmem:[%s2 + $0x278] sm:$0xff]
  %v217 = vld [vmem:[%s2 + $0x280] sm:$0xff]
  %v218 = vld [vmem:[%s2 + $0x288] sm:$0xff]
  %v219 = vld [vmem:[%s2 + $0x290] sm:$0xff]
  %v220 = vld [vmem:[%s2 + $0x298] sm:$0xff]
  %v221 = vld [vmem:[%s2 + $0x2a0] sm:$0xff]
  %v222 = vld [vmem:[%s2 + $0x2a8] sm:$0xff]
  %v223 = vld [vmem:[%s2 + $0x2b0] sm:$0xff]
  %v224 = vld [vmem:[%s2 + $0x2b8] sm:$0xff]
  %v225 = vld [vmem:[%s2 + $0x2c0] sm:$0xff]
  %v226 = vld [vmem:[%s2 + $0x2c8] sm:$0xff]
  %v227 = vld [vmem:[%s2 + $0x2d0] sm:$0xff]
  %v228 = vld [vmem:[%s2 + $0x2d8] sm:$0xff]
  %v229 = vld [vmem:[%s2 + $0x2e0] sm:$0xff]
  %v230 = vld [vmem:[%s2 + $0x2e8] sm:$0xff]
  %v231 = vld [vmem:[%s2 + $0x2f0] sm:$0xff]
  %v232 = vld [vmem:[%s2 + $0x2f8] sm:$0xff]
  %v233 = vld [vmem:[%s2 + $0x300] sm:$0xff]
  %v234 = vld [vmem:[%s2 + $0x308] sm:$0xff]
  %v235 = vld [vmem:[%s2 + $0x310] sm:$0xff]
  %v236 = vld [vmem:[%s2 + $0x318] sm:$0xff]
  %v237 = vld [vmem:[%s2 + $0x320] sm:$0xff]
  %v238 = vld [vmem:[%s2 + $0x328] sm:$0xff]
  %v239 = vld [vmem:[%s2 + $0x330] sm:$0xff]
  %v240 = vld [vmem:[%s2 + $0x338] sm:$0xff]
  %v241 = vld [vmem:[%s2 + $0x340] sm:$0xff]
  %v242 = vld [vmem:[%s2 + $0x348] sm:$0xff]
  %v243 = vld [vmem:[%s2 + $0x350] sm:$0xff]
  %v244 = vld [vmem:[%s2 + $0x358] sm:$0xff]
  %v245 = vld [vmem:[%s2 + $0x360] sm:$0xff]
  %v246 = vld [vmem:[%s2 + $0x368] sm:$0xff]
  %v247 = vld [vmem:[%s2 + $0x370] sm:$0xff]
  %v248 = vld [vmem:[%s2 + $0x378] sm:$0xff]
  %v249 = vld [vmem:[%s2 + $0x380] sm:$0xff]
  %v250 = vld [vmem:[%s2 + $0x388] sm:$0xff]
  %v251 = vld [vmem:[%s2 + $0x390] sm:$0xff]
  %v252 = vld [vmem:[%s2 + $0x398] sm:$0xff]
  %v253 = vld [vmem:[%s2 + $0x3a0] sm:$0xff]
  %v254 = vld [vmem:[%s2 + $0x3a8] sm:$0xff]
  %v255 = vld [vmem:[%s2 + $0x3b0] sm:$0xff]
  %v256 = vld [vmem:[%s2 + $0x3b8] sm:$0xff]
  %v257 = vld [vmem:[%s2 + $0x3c0] sm:$0xff]
  %v258 = vld [vmem:[%s2 + $0x3c8] sm:$0xff]
  %v259 = vld [vmem:[%s2 + $0x3d0] sm:$0xff]
  %v260 = vld [vmem:[%s2 + $0x3d8] sm:$0xff]
  %v261 = vld [vmem:[%s2 + $0x3e0] sm:$0xff]
  %v262 = vld [vmem:[%s2 + $0x3e8] sm:$0xff]
  %v263 = vld [vmem:[%s2 + $0x3f0] sm:$0xff]
  %v264 = vld [vmem:[%s2 + $0x3f8] sm:$0xff]
  %v265 = vld [vmem:[%s2 + $0x400] sm:$0xff]
  %v266 = vld [vmem:[%s2 + $0x408] sm:$0xff]
  %v267 = vld [vmem:[%s2 + $0x410] sm:$0xff]
  %v268 = vld [vmem:[%s2 + $0x418] sm:$0xff]
  %v269 = vld [vmem:[%s2 + $0x420] sm:$0xff]
  %v270 = vld [vmem:[%s2 + $0x428] sm:$0xff]
  %v271 = vld [vmem:[%s2 + $0x430] sm:$0xff]
  %v272 = vld [vmem:[%s2 + $0x438] sm:$0xff]
  %v273 = vld [vmem:[%s2 + $0x440] sm:$0xff]
  %v274 = vld [vmem:[%s2 + $0x448] sm:$0xff]
  %v275 = vld [vmem:[%s2 + $0x450] sm:$0xff]
  %v276 = vld [vmem:[%s2 + $0x458] sm:$0xff]
  %v277 = vld [vmem:[%s2 + $0x460] sm:$0xff]
  %v278 = vld [vmem:[%s2 + $0x468] sm:$0xff]
  %v279 = vld [vmem:[%s2 + $0x470] sm:$0xff]
  %v280 = vld [vmem:[%s2 + $0x478] sm:$0xff]
  %v281 = vld [vmem:[%s2 + $0x480] sm:$0xff]
  %v282 = vld [vmem:[%s2 + $0x488] sm:$0xff]
  %v283 = vld [vmem:[%s2 + $0x490] sm:$0xff]
  %v284 = vld [vmem:[%s2 + $0x498] sm:$0xff]
  %v285 = vld [vmem:[%s2 + $0x4a0] sm:$0xff]
  %v286 = vld [vmem:[%s2 + $0x4a8] sm:$0xff]
  %v287 = vld [vmem:[%s2 + $0x4b0] sm:$0xff]
  %v288 = vld [vmem:[%s2 + $0x4b8] sm:$0xff]
  %v289 = vld [vmem:[%s2 + $0x4c0] sm:$0xff]
  %v290 = vld [vmem:[%s2 + $0x4c8] sm:$0xff]
  %v291 = vld [vmem:[%s2 + $0x4d0] sm:$0xff]
  %v292 = vld [vmem:[%s2 + $0x4d8] sm:$0xff]
  %v293 = vld [vmem:[%s2 + $0x4e0] sm:$0xff]
  %v294 = vld [vmem:[%s2 + $0x4e8] sm:$0xff]
  %v295 = vld [vmem:[%s2 + $0x4f0] sm:$0xff]
  %v296 = vld [vmem:[%s2 + $0x4f8] sm:$0xff]
  %v297 = vld [vmem:[%s2 + $0x500] sm:$0xff]
  %v298 = vld [vmem:[%s2 + $0x508] sm:$0xff]
  %v299 = vld [vmem:[%s2 + $0x510] sm:$0xff]
  %v300 = vld [vmem:[%s2 + $0x518] sm:$0xff]
  %v301 = vld [vmem:[%s2 + $0x520] sm:$0xff]
  %v302 = vld [vmem:[%s2 + $0x528] sm:$0xff]
  %v303 = vld [vmem:[%s2 + $0x530] sm:$0xff]
  %v304 = vld [vmem:[%s2 + $0x538] sm:$0xff]
  %v305 = vld [vmem:[%s2 + $0x540] sm:$0xff]
  %v306 = vld [vmem:[%s2 + $0x548] sm:$0xff]
  %v307 = vld [vmem:[%s2 + $0x550] sm:$0xff]
  %v308 = vld [vmem:[%s2 + $0x558] sm:$0xff]
  %v309 = vld [vmem:[%s2 + $0x560] sm:$0xff]
  %v310 = vld [vmem:[%s2 + $0x568] sm:$0xff]
  %v311 = vld [vmem:[%s2 + $0x570] sm:$0xff]
  %v312 = vld [vmem:[%s2 + $0x578] sm:$0xff]
  %v313 = vld [vmem:[%s2 + $0x580] sm:$0xff]
  %v314 = vld [vmem:[%s2 + $0x588] sm:$0xff]
  %v315 = vld [vmem:[%s2 + $0x590] sm:$0xff]
  %v316 = vld [vmem:[%s2 + $0x598] sm:$0xff]
  %v317 = vld [vmem:[%s2 + $0x5a0] sm:$0xff]
  %v318 = vld [vmem:[%s2 + $0x5a8] sm:$0xff]
  %v319 = vld [vmem:[%s2 + $0x5b0] sm:$0xff]
  %v320 = vld [vmem:[%s2 + $0x5b8] sm:$0xff]
  %v321 = vld [vmem:[%s2 + $0x5c0] sm:$0xff]
  %v322 = vld [vmem:[%s2 + $0x5c8] sm:$0xff]
  %v323 = vld [vmem:[%s2 + $0x5d0] sm:$0xff]
  %v324 = vld [vmem:[%s2 + $0x5d8] sm:$0xff]
  %v325 = vld [vmem:[%s2 + $0x5e0] sm:$0xff]
  %v326 = vld [vmem:[%s2 + $0x5e8] sm:$0xff]
  %v327 = vld [vmem:[%s2 + $0x5f0] sm:$0xff]
  %v328 = vld [vmem:[%s2 + $0x5f8] sm:$0xff]
  %v329 = vld [vmem:[%s2 + $0x600] sm:$0xff]
  %v330 = vld [vmem:[%s2 + $0x608] sm:$0xff]
  %v331 = vld [vmem:[%s2 + $0x610] sm:$0xff]
  %v332 = vld [vmem:[%s2 + $0x618] sm:$0xff]
  %v333 = vld [vmem:[%s2 + $0x620] sm:$0xff]
  %v334 = vld [vmem:[%s2 + $0x628] sm:$0xff]
  %v335 = vld [vmem:[%s2 + $0x630] sm:$0xff]
  %v336 = vld [vmem:[%s2 + $0x638] sm:$0xff]
  %v337 = vld [vmem:[%s2 + $0x640] sm:$0xff]
  %v338 = vld [vmem:[%s2 + $0x648] sm:$0xff]
  %v339 = vld [vmem:[%s2 + $0x650] sm:$0xff]
  %v340 = vld [vmem:[%s2 + $0x658] sm:$0xff]
  %v341 = vld [vmem:[%s2 + $0x660] sm:$0xff]
  %v342 = vld [vmem:[%s2 + $0x668] sm:$0xff]
  %v343 = vld [vmem:[%s2 + $0x670] sm:$0xff]
  %v344 = vld [vmem:[%s2 + $0x678] sm:$0xff]
  %v345 = vld [vmem:[%s2 + $0x680] sm:$0xff]
  %v346 = vld [vmem:[%s2 + $0x688] sm:$0xff]
  %v347 = vld [vmem:[%s2 + $0x690] sm:$0xff]
  %v348 = vld [vmem:[%s2 + $0x698] sm:$0xff]
  %v349 = vld [vmem:[%s2 + $0x6a0] sm:$0xff]
  %v350 = vld [vmem:[%s2 + $0x6a8] sm:$0xff]
  %v351 = vld [vmem:[%s2 + $0x6b0] sm:$0xff]
  %v352 = vld [vmem:[%s2 + $0x6b8] sm:$0xff]
  %v353 = vld [vmem:[%s2 + $0x6c0] sm:$0xff]
  %v354 = vld [vmem:[%s2 + $0x6c8] sm:$0xff]
  %v355 = vld [vmem:[%s2 + $0x6d0] sm:$0xff]
  %v356 = vld [vmem:[%s2 + $0x6d8] sm:$0xff]
  %v357 = vld [vmem:[%s2 + $0x6e0] sm:$0xff]
  %v358 = vld [vmem:[%s2 + $0x6e8] sm:$0xff]
  %v359 = vld [vmem:[%s2 + $0x6f0] sm:$0xff]
  %v360 = vld [vmem:[%s2 + $0x6f8] sm:$0xff]
  %v361 = vld [vmem:[%s2 + $0x700] sm:$0xff]
  %v362 = vld [vmem:[%s2 + $0x708] sm:$0xff]
  %v363 = vld [vmem:[%s2 + $0x710] sm:$0xff]
  %v364 = vld [vmem:[%s2 + $0x718] sm:$0xff]
  %v365 = vld [vmem:[%s2 + $0x720] sm:$0xff]
  %v366 = vld [vmem:[%s2 + $0x728] sm:$0xff]
  %v367 = vld [vmem:[%s2 + $0x730] sm:$0xff]
  %v368 = vld [vmem:[%s2 + $0x738] sm:$0xff]
  %v369 = vld [vmem:[%s2 + $0x740] sm:$0xff]
  %v370 = vld [vmem:[%s2 + $0x748] sm:$0xff]
  %v371 = vld [vmem:[%s2 + $0x750] sm:$0xff]
  %v372 = vld [vmem:[%s2 + $0x758] sm:$0xff]
  %v373 = vld [vmem:[%s2 + $0x760] sm:$0xff]
  %v374 = vld [vmem:[%s2 + $0x768] sm:$0xff]
  %v375 = vld [vmem:[%s2 + $0x770] sm:$0xff]
  %v376 = vld [vmem:[%s2 + $0x778] sm:$0xff]
  %vm377 = vcmask 261120
  %v379 = vsel %vm377, %v138, 0
  %v382 = vsel %vm377, %v140, 0
  %v385 = vsel %vm377, %v142, 0
  %v388 = vsel %vm377, %v144, 0
  %v391 = vsel %vm377, %v146, 0
  %v394 = vsel %vm377, %v148, 0
  %v397 = vsel %vm377, %v150, 0
  %v400 = vsel %vm377, %v152, 0
  %v403 = vsel %vm377, %v154, 0
  %v406 = vsel %vm377, %v156, 0
  %v409 = vsel %vm377, %v158, 0
  %v412 = vsel %vm377, %v160, 0
  %v415 = vsel %vm377, %v162, 0
  %v418 = vsel %vm377, %v164, 0
  %v421 = vsel %vm377, %v166, 0
  %v424 = vsel %vm377, %v168, 0
  %v427 = vsel %vm377, %v170, 0
  %v430 = vsel %vm377, %v172, 0
  %v433 = vsel %vm377, %v174, 0
  %v436 = vsel %vm377, %v176, 0
  %v439 = vsel %vm377, %v178, 0
  %v442 = vsel %vm377, %v180, 0
  %v445 = vsel %vm377, %v182, 0
  %v448 = vsel %vm377, %v184, 0
  %v451 = vsel %vm377, %v186, 0
  %v454 = vsel %vm377, %v188, 0
  %v457 = vsel %vm377, %v190, 0
  %v460 = vsel %vm377, %v192, 0
  %v463 = vsel %vm377, %v194, 0
  %v466 = vsel %vm377, %v196, 0
  %v469 = vsel %vm377, %v198, 0
  %v472 = vsel %vm377, %v200, 0
  %v475 = vsel %vm377, %v202, 0
  %v478 = vsel %vm377, %v204, 0
  %v481 = vsel %vm377, %v206, 0
  %v484 = vsel %vm377, %v208, 0
  %v487 = vsel %vm377, %v210, 0
  %v490 = vsel %vm377, %v212, 0
  %v493 = vsel %vm377, %v214, 0
  %v496 = vsel %vm377, %v216, 0
  %v499 = vsel %vm377, %v218, 0
  %v502 = vsel %vm377, %v220, 0
  %v505 = vsel %vm377, %v222, 0
  %v508 = vsel %vm377, %v224, 0
  %v511 = vsel %vm377, %v226, 0
  %v514 = vsel %vm377, %v228, 0
  %v517 = vsel %vm377, %v230, 0
  %v520 = vsel %vm377, %v232, 0
  %v523 = vsel %vm377, %v234, 0
  %v526 = vsel %vm377, %v236, 0
  %v529 = vsel %vm377, %v238, 0
  %v532 = vsel %vm377, %v240, 0
  %v535 = vsel %vm377, %v242, 0
  %v538 = vsel %vm377, %v244, 0
  %v541 = vsel %vm377, %v246, 0
  %v544 = vsel %vm377, %v248, 0
  %v547 = vsel %vm377, %v250, 0
  %v550 = vsel %vm377, %v252, 0
  %v553 = vsel %vm377, %v254, 0
  %v556 = vsel %vm377, %v256, 0
  %v559 = vsel %vm377, %v258, 0
  %v562 = vsel %vm377, %v260, 0
  %v565 = vsel %vm377, %v262, 0
  %v568 = vsel %vm377, %v264, 0
  %v571 = vsel %vm377, %v266, 0
  %v574 = vsel %vm377, %v268, 0
  %v577 = vsel %vm377, %v270, 0
  %v580 = vsel %vm377, %v272, 0
  %v583 = vsel %vm377, %v274, 0
  %v586 = vsel %vm377, %v276, 0
  %v589 = vsel %vm377, %v278, 0
  %v592 = vsel %vm377, %v280, 0
  %v595 = vsel %vm377, %v282, 0
  %v598 = vsel %vm377, %v284, 0
  %v601 = vsel %vm377, %v286, 0
  %v604 = vsel %vm377, %v288, 0
  %v607 = vsel %vm377, %v290, 0
  %v610 = vsel %vm377, %v292, 0
  %v613 = vsel %vm377, %v294, 0
  %v616 = vsel %vm377, %v296, 0
  %v619 = vsel %vm377, %v298, 0
  %v622 = vsel %vm377, %v300, 0
  %v625 = vsel %vm377, %v302, 0
  %v628 = vsel %vm377, %v304, 0
  %v631 = vsel %vm377, %v306, 0
  %v634 = vsel %vm377, %v308, 0
  %v637 = vsel %vm377, %v310, 0
  %v640 = vsel %vm377, %v312, 0
  %v643 = vsel %vm377, %v314, 0
  %v646 = vsel %vm377, %v316, 0
  %v649 = vsel %vm377, %v318, 0
  %v652 = vsel %vm377, %v320, 0
  %v655 = vsel %vm377, %v322, 0
  %v658 = vsel %vm377, %v324, 0
  %v661 = vsel %vm377, %v326, 0
  %v664 = vsel %vm377, %v328, 0
  %v667 = vsel %vm377, %v330, 0
  %v670 = vsel %vm377, %v332, 0
  %v673 = vsel %vm377, %v334, 0
  %v676 = vsel %vm377, %v336, 0
  %v679 = vsel %vm377, %v338, 0
  %v682 = vsel %vm377, %v340, 0
  %v685 = vsel %vm377, %v342, 0
  %v688 = vsel %vm377, %v344, 0
  %v691 = vsel %vm377, %v346, 0
  %v694 = vsel %vm377, %v348, 0
  %v697 = vsel %vm377, %v350, 0
  %v700 = vsel %vm377, %v352, 0
  %v703 = vsel %vm377, %v354, 0
  %v706 = vsel %vm377, %v356, 0
  %v709 = vsel %vm377, %v358, 0
  %v712 = vsel %vm377, %v360, 0
  %v715 = vsel %vm377, %v362, 0
  %v718 = vsel %vm377, %v364, 0
  %v721 = vsel %vm377, %v366, 0
  %v724 = vsel %vm377, %v368, 0
  %v727 = vsel %vm377, %v370, 0
  %v730 = vsel %vm377, %v372, 0
  %v733 = vsel %vm377, %v374, 0
  %v736 = vsel %vm377, %v376, 0
  %738 = vmatprep.subr.mxu0 %v98
  %739 = vmatpush1.msra.mxu0 %v97
  %740 = vmatprep.subr.mxu0 %v100
  %741 = vmatpush1.msra.mxu0 %v99
  %742 = vmatprep.subr.mxu0 %v102
  %743 = vmatpush1.msra.mxu0 %v101
  %744 = vmatprep.subr.mxu0 %v104
  %745 = vmatpush1.msra.mxu0 %v103
  %746 = vmatprep.subr.mxu0 %v106
  %747 = vmatpush1.msra.mxu0 %v105
  %748 = vmatprep.subr.mxu0 %v108
  %749 = vmatpush1.msra.mxu0 %v107
  %750 = vmatprep.subr.mxu0 %v110
  %751 = vmatpush1.msra.mxu0 %v109
  %752 = vmatprep.subr.mxu0 %v112
  %753 = vmatpush1.msra.mxu0 %v111
  %754 = vmatprep.subr.mxu0 %v114
  %755 = vmatpush1.msra.mxu0 %v113
  %756 = vmatprep.subr.mxu0 %v116
  %757 = vmatpush1.msra.mxu0 %v115
  %758 = vmatprep.subr.mxu0 %v118
  %759 = vmatpush1.msra.mxu0 %v117
  %760 = vmatprep.subr.mxu0 %v120
  %761 = vmatpush1.msra.mxu0 %v119
  %762 = vmatprep.subr.mxu0 %v122
  %763 = vmatpush1.msra.mxu0 %v121
  %764 = vmatprep.subr.mxu0 %v124
  %765 = vmatpush1.msra.mxu0 %v123
  %766 = vmatprep.subr.mxu0 %v126
  %767 = vmatpush1.msra.mxu0 %v125
  %768 = vmatprep.subr.mxu0 %v128
  %769 = vmatpush1.msra.mxu0 %v127
  %770 = vmatprep.subr.mxu0 %v130
  %771 = vmatpush1.msra.mxu0 %v129
  %772 = vmatprep.subr.mxu0 %v132
  %773 = vmatpush1.msra.mxu0 %v131
  %774 = vmatprep.subr.mxu0 %v134
  %775 = vmatpush1.msra.mxu0 %v133
  %776 = vmatprep.subr.mxu0 %v136
  %777 = vmatpush1.msra.mxu0 %v135
  %778 = vmatprep.subr.mxu0 0.0
  %779 = vmatpush1.msra.mxu0 0.0
  %780 = vmatprep.subr.mxu0 0.0
  %781 = vmatpush1.msra.mxu0 0.0
  %782 = vmatprep.subr.mxu0 0.0
  %783 = vmatpush1.msra.mxu0 0.0
  %784 = vmatprep.subr.mxu0 0.0
  %785 = vmatpush1.msra.mxu0 0.0
  %786 = vmatprep.subr.mxu0 0.0
  %787 = vmatpush1.msra.mxu0 0.0
  %788 = vmatprep.subr.mxu0 0.0
  %789 = vmatpush1.msra.mxu0 0.0
  %790 = vmatprep.subr.mxu0 0.0
  %791 = vmatpush1.msra.mxu0 0.0
  %792 = vmatprep.subr.mxu0 0.0
  %793 = vmatpush1.msra.mxu0 0.0
  %794 = vmatprep.subr.mxu0 0.0
  %795 = vmatpush1.msra.mxu0 0.0
  %796 = vmatprep.subr.mxu0 0.0
  %797 = vmatpush1.msra.mxu0 0.0
  %798 = vmatprep.subr.mxu0 0.0
  %799 = vmatpush1.msra.mxu0 0.0
  %800 = vmatprep.subr.mxu0 0.0
  %801 = vmatpush1.msra.mxu0 0.0
  %802 = vmatprep.mubr.f32.mxu0 %v379
  %803 = vmatmul.mubr.f32.gmra.mrb[0].mxu0 %v137
  %v804 = vpop.f32.mrb[0].mxu0
  %v805 = vadd.f32 0.0, %v804
  %v806 = vpop.f32.mrb[0].mxu0
  %v807 = vadd.f32 0.0, %v806
  %808 = vmatprep.mubr.f32.mxu0 %v382
  %809 = vmatmul.mubr.f32.gmra.mrb[0].mxu0 %v139
  %v810 = vpop.f32.mrb[0].mxu0
  %v811 = vadd.f32 0.0, %v810
  %v812 = vpop.f32.mrb[0].mxu0
  %v813 = vadd.f32 0.0, %v812
  %814 = vmatprep.mubr.f32.mxu0 %v385
  %815 = vmatmul.mubr.f32.gmra.mrb[0].mxu0 %v141
  %v816 = vpop.f32.mrb[0].mxu0
  %v817 = vadd.f32 0.0, %v816
  %v818 = vpop.f32.mrb[0].mxu0
  %v819 = vadd.f32 0.0, %v818
  %820 = vmatprep.mubr.f32.mxu0 %v388
  %821 = vmatmul.mubr.f32.gmra.mrb[0].mxu0 %v143
  %v822 = vpop.f32.mrb[0].mxu0
  %v823 = vadd.f32 0.0, %v822
  %v824 = vpop.f32.mrb[0].mxu0
  %v825 = vadd.f32 0.0, %v824
  %826 = vmatprep.mubr.f32.mxu0 %v391
  %827 = vmatmul.mubr.f32.gmra.mrb[0].mxu0 %v145
  %v828 = vpop.f32.mrb[0].mxu0
  %v829 = vadd.f32 0.0, %v828
  %v830 = vpop.f32.mrb[0].mxu0
  %v831 = vadd.f32 0.0, %v830
  %832 = vmatprep.mubr.f32.mxu0 %v394
  %833 = vmatmul.mubr.f32.gmra.mrb[0].mxu0 %v147
  %v834 = vpop.f32.mrb[0].mxu0
  %v835 = vadd.f32 0.0, %v834
  %v836 = vpop.f32.mrb[0].mxu0
  %v837 = vadd.f32 0.0, %v836
  %838 = vmatprep.mubr.f32.mxu0 %v397
  %839 = vmatmul.mubr.f32.gmra.mrb[0].mxu0 %v149
  %v840 = vpop.f32.mrb[0].mxu0
  %v841 = vadd.f32 0.0, %v840
  %v842 = vpop.f32.mrb[0].mxu0
  %v843 = vadd.f32 0.0, %v842
  %844 = vmatprep.mubr.f32.mxu0 %v400
  %845 = vmatmul.mubr.f32.gmra.mrb[0].mxu0 %v151
  %v846 = vpop.f32.mrb[0].mxu0
  %v847 = vadd.f32 0.0, %v846
  %v848 = vpop.f32.mrb[0].mxu0
  %v849 = vadd.f32 0.0, %v848
  %850 = vmatprep.mubr.f32.mxu0 %v403
  %851 = vmatmul.mubr.f32.gmra.mrb[0].mxu0 %v153
  %v852 = vpop.f32.mrb[0].mxu0
  %v853 = vadd.f32 0.0, %v852
  %v854 = vpop.f32.mrb[0].mxu0
  %v855 = vadd.f32 0.0, %v854
  %856 = vmatprep.mubr.f32.mxu0 %v406
  %857 = vmatmul.mubr.f32.gmra.mrb[0].mxu0 %v155
  %v858 = vpop.f32.mrb[0].mxu0
  %v859 = vadd.f32 0.0, %v858
  %v860 = vpop.f32.mrb[0].mxu0
  %v861 = vadd.f32 0.0, %v860
  %862 = vmatprep.mubr.f32.mxu0 %v409
  %863 = vmatmul.mubr.f32.gmra.mrb[0].mxu0 %v157
  %v864 = vpop.f32.mrb[0].mxu0
  %v865 = vadd.f32 0.0, %v864
  %v866 = vpop.f32.mrb[0].mxu0
  %v867 = vadd.f32 0.0, %v866
  %868 = vmatprep.mubr.f32.mxu0 %v412
  %869 = vmatmul.mubr.f32.gmra.mrb[0].mxu0 %v159
  %v870 = vpop.f32.mrb[0].mxu0
  %v871 = vadd.f32 0.0, %v870
  %v872 = vpop.f32.mrb[0].mxu0
  %v873 = vadd.f32 0.0, %v872
  %874 = vmatprep.mubr.f32.mxu0 %v415
  %875 = vmatmul.mubr.f32.gmra.mrb[0].mxu0 %v161
  %v876 = vpop.f32.mrb[0].mxu0
  %v877 = vadd.f32 0.0, %v876
  %v878 = vpop.f32.mrb[0].mxu0
  %v879 = vadd.f32 0.0, %v878
  %880 = vmatprep.mubr.f32.mxu0 %v418
  %881 = vmatmul.mubr.f32.gmra.mrb[0].mxu0 %v163
  %v882 = vpop.f32.mrb[0].mxu0
  %v883 = vadd.f32 0.0, %v882
  %v884 = vpop.f32.mrb[0].mxu0
  %v885 = vadd.f32 0.0, %v884
  %886 = vmatprep.mubr.f32.mxu0 %v421
  %887 = vmatmul.mubr.f32.gmra.mrb[0].mxu0 %v165
  %v888 = vpop.f32.mrb[0].mxu0
  %v889 = vadd.f32 0.0, %v888
  %v890 = vpop.f32.mrb[0].mxu0
  %v891 = vadd.f32 0.0, %v890
  %892 = vmatprep.mubr.f32.mxu0 %v424
  %893 = vmatmul.mubr.f32.gmra.mrb[0].mxu0 %v167
  %v894 = vpop.f32.mrb[0].mxu0
  %v895 = vadd.f32 0.0, %v894
  %v896 = vpop.f32.mrb[0].mxu0
  %v897 = vadd.f32 0.0, %v896
  %898 = vmatprep.mubr.f32.mxu0 %v427
  %899 = vmatmul.mubr.f32.gmra.mrb[0].mxu0 %v169
  %v900 = vpop.f32.mrb[0].mxu0
  %v901 = vadd.f32 0.0, %v900
  %v902 = vpop.f32.mrb[0].mxu0
  %v903 = vadd.f32 0.0, %v902
  %904 = vmatprep.mubr.f32.mxu0 %v430
  %905 = vmatmul.mubr.f32.gmra.mrb[0].mxu0 %v171
  %v906 = vpop.f32.mrb[0].mxu0
  %v907 = vadd.f32 0.0, %v906
  %v908 = vpop.f32.mrb[0].mxu0
  %v909 = vadd.f32 0.0, %v908
  %910 = vmatprep.mubr.f32.mxu0 %v433
  %911 = vmatmul.mubr.f32.gmra.mrb[0].mxu0 %v173
  %v912 = vpop.f32.mrb[0].mxu0
  %v913 = vadd.f32 0.0, %v912
  %v914 = vpop.f32.mrb[0].mxu0
  %v915 = vadd.f32 0.0, %v914
  %916 = vmatprep.mubr.f32.mxu0 %v436
  %917 = vmatmul.mubr.f32.gmra.mrb[0].mxu0 %v175
  %v918 = vpop.f32.mrb[0].mxu0
  %v919 = vadd.f32 0.0, %v918
  %v920 = vpop.f32.mrb[0].mxu0
  %v921 = vadd.f32 0.0, %v920
  %922 = vmatprep.mubr.f32.mxu0 %v439
  %923 = vmatmul.mubr.f32.gmra.mrb[0].mxu0 %v177
  %v924 = vpop.f32.mrb[0].mxu0
  %v925 = vadd.f32 0.0, %v924
  %v926 = vpop.f32.mrb[0].mxu0
  %v927 = vadd.f32 0.0, %v926
  %928 = vmatprep.mubr.f32.mxu0 %v442
  %929 = vmatmul.mubr.f32.gmra.mrb[0].mxu0 %v179
  %v930 = vpop.f32.mrb[0].mxu0
  %v931 = vadd.f32 0.0, %v930
  %v932 = vpop.f32.mrb[0].mxu0
  %v933 = vadd.f32 0.0, %v932
  %934 = vmatprep.mubr.f32.mxu0 %v445
  %935 = vmatmul.mubr.f32.gmra.mrb[0].mxu0 %v181
  %v936 = vpop.f32.mrb[0].mxu0
  %v937 = vadd.f32 0.0, %v936
  %v938 = vpop.f32.mrb[0].mxu0
  %v939 = vadd.f32 0.0, %v938
  %940 = vmatprep.mubr.f32.mxu0 %v448
  %941 = vmatmul.mubr.f32.gmra.mrb[0].mxu0 %v183
  %v942 = vpop.f32.mrb[0].mxu0
  %v943 = vadd.f32 0.0, %v942
  %v944 = vpop.f32.mrb[0].mxu0
  %v945 = vadd.f32 0.0, %v944
  %946 = vmatprep.mubr.f32.mxu0 %v451
  %947 = vmatmul.mubr.f32.gmra.mrb[0].mxu0 %v185
  %v948 = vpop.f32.mrb[0].mxu0
  %v949 = vadd.f32 0.0, %v948
  %v950 = vpop.f32.mrb[0].mxu0
  %v951 = vadd.f32 0.0, %v950
  %952 = vmatprep.mubr.f32.mxu0 %v454
  %953 = vmatmul.mubr.f32.gmra.mrb[0].mxu0 %v187
  %v954 = vpop.f32.mrb[0].mxu0
  %v955 = vadd.f32 0.0, %v954
  %v956 = vpop.f32.mrb[0].mxu0
  %v957 = vadd.f32 0.0, %v956
  %958 = vmatprep.mubr.f32.mxu0 %v457
  %959 = vmatmul.mubr.f32.gmra.mrb[0].mxu0 %v189
  %v960 = vpop.f32.mrb[0].mxu0
  %v961 = vadd.f32 0.0, %v960
  %v962 = vpop.f32.mrb[0].mxu0
  %v963 = vadd.f32 0.0, %v962
  %964 = vmatprep.mubr.f32.mxu0 %v460
  %965 = vmatmul.mubr.f32.gmra.mrb[0].mxu0 %v191
  %v966 = vpop.f32.mrb[0].mxu0
  %v967 = vadd.f32 0.0, %v966
  %v968 = vpop.f32.mrb[0].mxu0
  %v969 = vadd.f32 0.0, %v968
  %970 = vmatprep.mubr.f32.mxu0 %v463
  %971 = vmatmul.mubr.f32.gmra.mrb[0].mxu0 %v193
  %v972 = vpop.f32.mrb[0].mxu0
  %v973 = vadd.f32 0.0, %v972
  %v974 = vpop.f32.mrb[0].mxu0
  %v975 = vadd.f32 0.0, %v974
  %976 = vmatprep.mubr.f32.mxu0 %v466
  %977 = vmatmul.mubr.f32.gmra.mrb[0].mxu0 %v195
  %v978 = vpop.f32.mrb[0].mxu0
  %v979 = vadd.f32 0.0, %v978
  %v980 = vpop.f32.mrb[0].mxu0
  %v981 = vadd.f32 0.0, %v980
  %982 = vmatprep.mubr.f32.mxu0 %v469
  %983 = vmatmul.mubr.f32.gmra.mrb[0].mxu0 %v197
  %v984 = vpop.f32.mrb[0].mxu0
  %v985 = vadd.f32 0.0, %v984
  %v986 = vpop.f32.mrb[0].mxu0
  %v987 = vadd.f32 0.0, %v986
  %988 = vmatprep.mubr.f32.mxu0 %v472
  %989 = vmatmul.mubr.f32.gmra.mrb[0].mxu0 %v199
  %v990 = vpop.f32.mrb[0].mxu0
  %v991 = vadd.f32 0.0, %v990
  %v992 = vpop.f32.mrb[0].mxu0
  %v993 = vadd.f32 0.0, %v992
  %994 = vmatprep.mubr.f32.mxu0 %v475
  %995 = vmatmul.mubr.f32.gmra.mrb[0].mxu0 %v201
  %v996 = vpop.f32.mrb[0].mxu0
  %v997 = vadd.f32 0.0, %v996
  %v998 = vpop.f32.mrb[0].mxu0
  %v999 = vadd.f32 0.0, %v998
  %1000 = vmatprep.mubr.f32.mxu0 %v478
  %1001 = vmatmul.mubr.f32.gmra.mrb[0].mxu0 %v203
  %v1002 = vpop.f32.mrb[0].mxu0
  %v1003 = vadd.f32 0.0, %v1002
  %v1004 = vpop.f32.mrb[0].mxu0
  %v1005 = vadd.f32 0.0, %v1004
  %1006 = vmatprep.mubr.f32.mxu0 %v481
  %1007 = vmatmul.mubr.f32.gmra.mrb[0].mxu0 %v205
  %v1008 = vpop.f32.mrb[0].mxu0
  %v1009 = vadd.f32 0.0, %v1008
  %v1010 = vpop.f32.mrb[0].mxu0
  %v1011 = vadd.f32 0.0, %v1010
  %1012 = vmatprep.mubr.f32.mxu0 %v484
  %1013 = vmatmul.mubr.f32.gmra.mrb[0].mxu0 %v207
  %v1014 = vpop.f32.mrb[0].mxu0
  %v1015 = vadd.f32 0.0, %v1014
  %v1016 = vpop.f32.mrb[0].mxu0
  %v1017 = vadd.f32 0.0, %v1016
  %1018 = vmatprep.mubr.f32.mxu0 %v487
  %1019 = vmatmul.mubr.f32.gmra.mrb[0].mxu0 %v209
  %v1020 = vpop.f32.mrb[0].mxu0
  %v1021 = vadd.f32 0.0, %v1020
  %v1022 = vpop.f32.mrb[0].mxu0
  %v1023 = vadd.f32 0.0, %v1022
  %1024 = vmatprep.mubr.f32.mxu0 %v490
  %1025 = vmatmul.mubr.f32.gmra.mrb[0].mxu0 %v211
  %v1026 = vpop.f32.mrb[0].mxu0
  %v1027 = vadd.f32 0.0, %v1026
  %v1028 = vpop.f32.mrb[0].mxu0
  %v1029 = vadd.f32 0.0, %v1028
  %1030 = vmatprep.mubr.f32.mxu0 %v493
  %1031 = vmatmul.mubr.f32.gmra.mrb[0].mxu0 %v213
  %v1032 = vpop.f32.mrb[0].mxu0
  %v1033 = vadd.f32 0.0, %v1032
  %v1034 = vpop.f32.mrb[0].mxu0
  %v1035 = vadd.f32 0.0, %v1034
  %1036 = vmatprep.mubr.f32.mxu0 %v496
  %1037 = vmatmul.mubr.f32.gmra.mrb[0].mxu0 %v215
  %v1038 = vpop.f32.mrb[0].mxu0
  %v1039 = vadd.f32 0.0, %v1038
  %v1040 = vpop.f32.mrb[0].mxu0
  %v1041 = vadd.f32 0.0, %v1040
  %1042 = vmatprep.mubr.f32.mxu0 %v499
  %1043 = vmatmul.mubr.f32.gmra.mrb[0].mxu0 %v217
  %v1044 = vpop.f32.mrb[0].mxu0
  %v1045 = vadd.f32 0.0, %v1044
  %v1046 = vpop.f32.mrb[0].mxu0
  %v1047 = vadd.f32 0.0, %v1046
  %1048 = vmatprep.mubr.f32.mxu0 %v502
  %1049 = vmatmul.mubr.f32.gmra.mrb[0].mxu0 %v219
  %v1050 = vpop.f32.mrb[0].mxu0
  %v1051 = vadd.f32 0.0, %v1050
  %v1052 = vpop.f32.mrb[0].mxu0
  %v1053 = vadd.f32 0.0, %v1052
  %1054 = vmatprep.mubr.f32.mxu0 %v505
  %1055 = vmatmul.mubr.f32.gmra.mrb[0].mxu0 %v221
  %v1056 = vpop.f32.mrb[0].mxu0
  %v1057 = vadd.f32 0.0, %v1056
  %v1058 = vpop.f32.mrb[0].mxu0
  %v1059 = vadd.f32 0.0, %v1058
  %1060 = vmatprep.mubr.f32.mxu0 %v508
  %1061 = vmatmul.mubr.f32.gmra.mrb[0].mxu0 %v223
  %v1062 = vpop.f32.mrb[0].mxu0
  %v1063 = vadd.f32 0.0, %v1062
  %v1064 = vpop.f32.mrb[0].mxu0
  %v1065 = vadd.f32 0.0, %v1064
  %1066 = vmatprep.mubr.f32.mxu0 %v511
  %1067 = vmatmul.mubr.f32.gmra.mrb[0].mxu0 %v225
  %v1068 = vpop.f32.mrb[0].mxu0
  %v1069 = vadd.f32 0.0, %v1068
  %v1070 = vpop.f32.mrb[0].mxu0
  %v1071 = vadd.f32 0.0, %v1070
  %1072 = vmatprep.mubr.f32.mxu0 %v514
  %1073 = vmatmul.mubr.f32.gmra.mrb[0].mxu0 %v227
  %v1074 = vpop.f32.mrb[0].mxu0
  %v1075 = vadd.f32 0.0, %v1074
  %v1076 = vpop.f32.mrb[0].mxu0
  %v1077 = vadd.f32 0.0, %v1076
  %1078 = vmatprep.mubr.f32.mxu0 %v517
  %1079 = vmatmul.mubr.f32.gmra.mrb[0].mxu0 %v229
  %v1080 = vpop.f32.mrb[0].mxu0
  %v1081 = vadd.f32 0.0, %v1080
  %v1082 = vpop.f32.mrb[0].mxu0
  %v1083 = vadd.f32 0.0, %v1082
  %1084 = vmatprep.mubr.f32.mxu0 %v520
  %1085 = vmatmul.mubr.f32.gmra.mrb[0].mxu0 %v231
  %v1086 = vpop.f32.mrb[0].mxu0
  %v1087 = vadd.f32 0.0, %v1086
  %v1088 = vpop.f32.mrb[0].mxu0
  %v1089 = vadd.f32 0.0, %v1088
  %1090 = vmatprep.mubr.f32.mxu0 %v523
  %1091 = vmatmul.mubr.f32.gmra.mrb[0].mxu0 %v233
  %v1092 = vpop.f32.mrb[0].mxu0
  %v1093 = vadd.f32 0.0, %v1092
  %v1094 = vpop.f32.mrb[0].mxu0
  %v1095 = vadd.f32 0.0, %v1094
  %1096 = vmatprep.mubr.f32.mxu0 %v526
  %1097 = vmatmul.mubr.f32.gmra.mrb[0].mxu0 %v235
  %v1098 = vpop.f32.mrb[0].mxu0
  %v1099 = vadd.f32 0.0, %v1098
  %v1100 = vpop.f32.mrb[0].mxu0
  %v1101 = vadd.f32 0.0, %v1100
  %1102 = vmatprep.mubr.f32.mxu0 %v529
  %1103 = vmatmul.mubr.f32.gmra.mrb[0].mxu0 %v237
  %v1104 = vpop.f32.mrb[0].mxu0
  %v1105 = vadd.f32 0.0, %v1104
  %v1106 = vpop.f32.mrb[0].mxu0
  %v1107 = vadd.f32 0.0, %v1106
  %1108 = vmatprep.mubr.f32.mxu0 %v532
  %1109 = vmatmul.mubr.f32.gmra.mrb[0].mxu0 %v239
  %v1110 = vpop.f32.mrb[0].mxu0
  %v1111 = vadd.f32 0.0, %v1110
  %v1112 = vpop.f32.mrb[0].mxu0
  %v1113 = vadd.f32 0.0, %v1112
  %1114 = vmatprep.mubr.f32.mxu0 %v535
  %1115 = vmatmul.mubr.f32.gmra.mrb[0].mxu0 %v241
  %v1116 = vpop.f32.mrb[0].mxu0
  %v1117 = vadd.f32 0.0, %v1116
  %v1118 = vpop.f32.mrb[0].mxu0
  %v1119 = vadd.f32 0.0, %v1118
  %1120 = vmatprep.mubr.f32.mxu0 %v538
  %1121 = vmatmul.mubr.f32.gmra.mrb[0].mxu0 %v243
  %v1122 = vpop.f32.mrb[0].mxu0
  %v1123 = vadd.f32 0.0, %v1122
  %v1124 = vpop.f32.mrb[0].mxu0
  %v1125 = vadd.f32 0.0, %v1124
  %1126 = vmatprep.mubr.f32.mxu0 %v541
  %1127 = vmatmul.mubr.f32.gmra.mrb[0].mxu0 %v245
  %v1128 = vpop.f32.mrb[0].mxu0
  %v1129 = vadd.f32 0.0, %v1128
  %v1130 = vpop.f32.mrb[0].mxu0
  %v1131 = vadd.f32 0.0, %v1130
  %1132 = vmatprep.mubr.f32.mxu0 %v544
  %1133 = vmatmul.mubr.f32.gmra.mrb[0].mxu0 %v247
  %v1134 = vpop.f32.mrb[0].mxu0
  %v1135 = vadd.f32 0.0, %v1134
  %v1136 = vpop.f32.mrb[0].mxu0
  %v1137 = vadd.f32 0.0, %v1136
  %1138 = vmatprep.mubr.f32.mxu0 %v547
  %1139 = vmatmul.mubr.f32.gmra.mrb[0].mxu0 %v249
  %v1140 = vpop.f32.mrb[0].mxu0
  %v1141 = vadd.f32 0.0, %v1140
  %v1142 = vpop.f32.mrb[0].mxu0
  %v1143 = vadd.f32 0.0, %v1142
  %1144 = vmatprep.mubr.f32.mxu0 %v550
  %1145 = vmatmul.mubr.f32.gmra.mrb[0].mxu0 %v251
  %v1146 = vpop.f32.mrb[0].mxu0
  %v1147 = vadd.f32 0.0, %v1146
  %v1148 = vpop.f32.mrb[0].mxu0
  %v1149 = vadd.f32 0.0, %v1148
  %1150 = vmatprep.mubr.f32.mxu0 %v553
  %1151 = vmatmul.mubr.f32.gmra.mrb[0].mxu0 %v253
  %v1152 = vpop.f32.mrb[0].mxu0
  %v1153 = vadd.f32 0.0, %v1152
  %v1154 = vpop.f32.mrb[0].mxu0
  %v1155 = vadd.f32 0.0, %v1154
  %1156 = vmatprep.mubr.f32.mxu0 %v556
  %1157 = vmatmul.mubr.f32.gmra.mrb[0].mxu0 %v255
  %v1158 = vpop.f32.mrb[0].mxu0
  %v1159 = vadd.f32 0.0, %v1158
  %v1160 = vpop.f32.mrb[0].mxu0
  %v1161 = vadd.f32 0.0, %v1160
  %1162 = vmatprep.mubr.f32.mxu0 %v559
  %1163 = vmatmul.mubr.f32.gmra.mrb[0].mxu0 %v257
  %v1164 = vpop.f32.mrb[0].mxu0
  %v1165 = vadd.f32 0.0, %v1164
  %v1166 = vpop.f32.mrb[0].mxu0
  %v1167 = vadd.f32 0.0, %v1166
  %1168 = vmatprep.mubr.f32.mxu0 %v562
  %1169 = vmatmul.mubr.f32.gmra.mrb[0].mxu0 %v259
  %v1170 = vpop.f32.mrb[0].mxu0
  %v1171 = vadd.f32 0.0, %v1170
  %v1172 = vpop.f32.mrb[0].mxu0
  %v1173 = vadd.f32 0.0, %v1172
  %1174 = vmatprep.mubr.f32.mxu0 %v565
  %1175 = vmatmul.mubr.f32.gmra.mrb[0].mxu0 %v261
  %v1176 = vpop.f32.mrb[0].mxu0
  %v1177 = vadd.f32 0.0, %v1176
  %v1178 = vpop.f32.mrb[0].mxu0
  %v1179 = vadd.f32 0.0, %v1178
  %1180 = vmatprep.mubr.f32.mxu0 %v568
  %1181 = vmatmul.mubr.f32.gmra.mrb[0].mxu0 %v263
  %v1182 = vpop.f32.mrb[0].mxu0
  %v1183 = vadd.f32 0.0, %v1182
  %v1184 = vpop.f32.mrb[0].mxu0
  %v1185 = vadd.f32 0.0, %v1184
  %1186 = vmatprep.mubr.f32.mxu0 %v571
  %1187 = vmatmul.mubr.f32.gmra.mrb[0].mxu0 %v265
  %v1188 = vpop.f32.mrb[0].mxu0
  %v1189 = vadd.f32 0.0, %v1188
  %v1190 = vpop.f32.mrb[0].mxu0
  %v1191 = vadd.f32 0.0, %v1190
  %1192 = vmatprep.mubr.f32.mxu0 %v574
  %1193 = vmatmul.mubr.f32.gmra.mrb[0].mxu0 %v267
  %v1194 = vpop.f32.mrb[0].mxu0
  %v1195 = vadd.f32 0.0, %v1194
  %v1196 = vpop.f32.mrb[0].mxu0
  %v1197 = vadd.f32 0.0, %v1196
  %1198 = vmatprep.mubr.f32.mxu0 %v577
  %1199 = vmatmul.mubr.f32.gmra.mrb[0].mxu0 %v269
  %v1200 = vpop.f32.mrb[0].mxu0
  %v1201 = vadd.f32 0.0, %v1200
  %v1202 = vpop.f32.mrb[0].mxu0
  %v1203 = vadd.f32 0.0, %v1202
  %1204 = vmatprep.mubr.f32.mxu0 %v580
  %1205 = vmatmul.mubr.f32.gmra.mrb[0].mxu0 %v271
  %v1206 = vpop.f32.mrb[0].mxu0
  %v1207 = vadd.f32 0.0, %v1206
  %v1208 = vpop.f32.mrb[0].mxu0
  %v1209 = vadd.f32 0.0, %v1208
  %1210 = vmatprep.mubr.f32.mxu0 %v583
  %1211 = vmatmul.mubr.f32.gmra.mrb[0].mxu0 %v273
  %v1212 = vpop.f32.mrb[0].mxu0
  %v1213 = vadd.f32 0.0, %v1212
  %v1214 = vpop.f32.mrb[0].mxu0
  %v1215 = vadd.f32 0.0, %v1214
  %1216 = vmatprep.mubr.f32.mxu0 %v586
  %1217 = vmatmul.mubr.f32.gmra.mrb[0].mxu0 %v275
  %v1218 = vpop.f32.mrb[0].mxu0
  %v1219 = vadd.f32 0.0, %v1218
  %v1220 = vpop.f32.mrb[0].mxu0
  %v1221 = vadd.f32 0.0, %v1220
  %1222 = vmatprep.mubr.f32.mxu0 %v589
  %1223 = vmatmul.mubr.f32.gmra.mrb[0].mxu0 %v277
  %v1224 = vpop.f32.mrb[0].mxu0
  %v1225 = vadd.f32 0.0, %v1224
  %v1226 = vpop.f32.mrb[0].mxu0
  %v1227 = vadd.f32 0.0, %v1226
  %1228 = vmatprep.mubr.f32.mxu0 %v592
  %1229 = vmatmul.mubr.f32.gmra.mrb[0].mxu0 %v279
  %v1230 = vpop.f32.mrb[0].mxu0
  %v1231 = vadd.f32 0.0, %v1230
  %v1232 = vpop.f32.mrb[0].mxu0
  %v1233 = vadd.f32 0.0, %v1232
  %1234 = vmatprep.mubr.f32.mxu0 %v595
  %1235 = vmatmul.mubr.f32.gmra.mrb[0].mxu0 %v281
  %v1236 = vpop.f32.mrb[0].mxu0
  %v1237 = vadd.f32 0.0, %v1236
  %v1238 = vpop.f32.mrb[0].mxu0
  %v1239 = vadd.f32 0.0, %v1238
  %1240 = vmatprep.mubr.f32.mxu0 %v598
  %1241 = vmatmul.mubr.f32.gmra.mrb[0].mxu0 %v283
  %v1242 = vpop.f32.mrb[0].mxu0
  %v1243 = vadd.f32 0.0, %v1242
  %v1244 = vpop.f32.mrb[0].mxu0
  %v1245 = vadd.f32 0.0, %v1244
  %1246 = vmatprep.mubr.f32.mxu0 %v601
  %1247 = vmatmul.mubr.f32.gmra.mrb[0].mxu0 %v285
  %v1248 = vpop.f32.mrb[0].mxu0
  %v1249 = vadd.f32 0.0, %v1248
  %v1250 = vpop.f32.mrb[0].mxu0
  %v1251 = vadd.f32 0.0, %v1250
  %1252 = vmatprep.mubr.f32.mxu0 %v604
  %1253 = vmatmul.mubr.f32.gmra.mrb[0].mxu0 %v287
  %v1254 = vpop.f32.mrb[0].mxu0
  %v1255 = vadd.f32 0.0, %v1254
  %v1256 = vpop.f32.mrb[0].mxu0
  %v1257 = vadd.f32 0.0, %v1256
  %1258 = vmatprep.mubr.f32.mxu0 %v607
  %1259 = vmatmul.mubr.f32.gmra.mrb[0].mxu0 %v289
  %v1260 = vpop.f32.mrb[0].mxu0
  %v1261 = vadd.f32 0.0, %v1260
  %v1262 = vpop.f32.mrb[0].mxu0
  %v1263 = vadd.f32 0.0, %v1262
  %1264 = vmatprep.mubr.f32.mxu0 %v610
  %1265 = vmatmul.mubr.f32.gmra.mrb[0].mxu0 %v291
  %v1266 = vpop.f32.mrb[0].mxu0
  %v1267 = vadd.f32 0.0, %v1266
  %v1268 = vpop.f32.mrb[0].mxu0
  %v1269 = vadd.f32 0.0, %v1268
  %1270 = vmatprep.mubr.f32.mxu0 %v613
  %1271 = vmatmul.mubr.f32.gmra.mrb[0].mxu0 %v293
  %v1272 = vpop.f32.mrb[0].mxu0
  %v1273 = vadd.f32 0.0, %v1272
  %v1274 = vpop.f32.mrb[0].mxu0
  %v1275 = vadd.f32 0.0, %v1274
  %1276 = vmatprep.mubr.f32.mxu0 %v616
  %1277 = vmatmul.mubr.f32.gmra.mrb[0].mxu0 %v295
  %v1278 = vpop.f32.mrb[0].mxu0
  %v1279 = vadd.f32 0.0, %v1278
  %v1280 = vpop.f32.mrb[0].mxu0
  %v1281 = vadd.f32 0.0, %v1280
  %1282 = vmatprep.mubr.f32.mxu0 %v619
  %1283 = vmatmul.mubr.f32.gmra.mrb[0].mxu0 %v297
  %v1284 = vpop.f32.mrb[0].mxu0
  %v1285 = vadd.f32 0.0, %v1284
  %v1286 = vpop.f32.mrb[0].mxu0
  %v1287 = vadd.f32 0.0, %v1286
  %1288 = vmatprep.mubr.f32.mxu0 %v622
  %1289 = vmatmul.mubr.f32.gmra.mrb[0].mxu0 %v299
  %v1290 = vpop.f32.mrb[0].mxu0
  %v1291 = vadd.f32 0.0, %v1290
  %v1292 = vpop.f32.mrb[0].mxu0
  %v1293 = vadd.f32 0.0, %v1292
  %1294 = vmatprep.mubr.f32.mxu0 %v625
  %1295 = vmatmul.mubr.f32.gmra.mrb[0].mxu0 %v301
  %v1296 = vpop.f32.mrb[0].mxu0
  %v1297 = vadd.f32 0.0, %v1296
  %v1298 = vpop.f32.mrb[0].mxu0
  %v1299 = vadd.f32 0.0, %v1298
  %1300 = vmatprep.mubr.f32.mxu0 %v628
  %1301 = vmatmul.mubr.f32.gmra.mrb[0].mxu0 %v303
  %v1302 = vpop.f32.mrb[0].mxu0
  %v1303 = vadd.f32 0.0, %v1302
  %v1304 = vpop.f32.mrb[0].mxu0
  %v1305 = vadd.f32 0.0, %v1304
  %1306 = vmatprep.mubr.f32.mxu0 %v631
  %1307 = vmatmul.mubr.f32.gmra.mrb[0].mxu0 %v305
  %v1308 = vpop.f32.mrb[0].mxu0
  %v1309 = vadd.f32 0.0, %v1308
  %v1310 = vpop.f32.mrb[0].mxu0
  %v1311 = vadd.f32 0.0, %v1310
  %1312 = vmatprep.mubr.f32.mxu0 %v634
  %1313 = vmatmul.mubr.f32.gmra.mrb[0].mxu0 %v307
  %v1314 = vpop.f32.mrb[0].mxu0
  %v1315 = vadd.f32 0.0, %v1314
  %v1316 = vpop.f32.mrb[0].mxu0
  %v1317 = vadd.f32 0.0, %v1316
  %1318 = vmatprep.mubr.f32.mxu0 %v637
  %1319 = vmatmul.mubr.f32.gmra.mrb[0].mxu0 %v309
  %v1320 = vpop.f32.mrb[0].mxu0
  %v1321 = vadd.f32 0.0, %v1320
  %v1322 = vpop.f32.mrb[0].mxu0
  %v1323 = vadd.f32 0.0, %v1322
  %1324 = vmatprep.mubr.f32.mxu0 %v640
  %1325 = vmatmul.mubr.f32.gmra.mrb[0].mxu0 %v311
  %v1326 = vpop.f32.mrb[0].mxu0
  %v1327 = vadd.f32 0.0, %v1326
  %v1328 = vpop.f32.mrb[0].mxu0
  %v1329 = vadd.f32 0.0, %v1328
  %1330 = vmatprep.mubr.f32.mxu0 %v643
  %1331 = vmatmul.mubr.f32.gmra.mrb[0].mxu0 %v313
  %v1332 = vpop.f32.mrb[0].mxu0
  %v1333 = vadd.f32 0.0, %v1332
  %v1334 = vpop.f32.mrb[0].mxu0
  %v1335 = vadd.f32 0.0, %v1334
  %1336 = vmatprep.mubr.f32.mxu0 %v646
  %1337 = vmatmul.mubr.f32.gmra.mrb[0].mxu0 %v315
  %v1338 = vpop.f32.mrb[0].mxu0
  %v1339 = vadd.f32 0.0, %v1338
  %v1340 = vpop.f32.mrb[0].mxu0
  %v1341 = vadd.f32 0.0, %v1340
  %1342 = vmatprep.mubr.f32.mxu0 %v649
  %1343 = vmatmul.mubr.f32.gmra.mrb[0].mxu0 %v317
  %v1344 = vpop.f32.mrb[0].mxu0
  %v1345 = vadd.f32 0.0, %v1344
  %v1346 = vpop.f32.mrb[0].mxu0
  %v1347 = vadd.f32 0.0, %v1346
  %1348 = vmatprep.mubr.f32.mxu0 %v652
  %1349 = vmatmul.mubr.f32.gmra.mrb[0].mxu0 %v319
  %v1350 = vpop.f32.mrb[0].mxu0
  %v1351 = vadd.f32 0.0, %v1350
  %v1352 = vpop.f32.mrb[0].mxu0
  %v1353 = vadd.f32 0.0, %v1352
  %1354 = vmatprep.mubr.f32.mxu0 %v655
  %1355 = vmatmul.mubr.f32.gmra.mrb[0].mxu0 %v321
  %v1356 = vpop.f32.mrb[0].mxu0
  %v1357 = vadd.f32 0.0, %v1356
  %v1358 = vpop.f32.mrb[0].mxu0
  %v1359 = vadd.f32 0.0, %v1358
  %1360 = vmatprep.mubr.f32.mxu0 %v658
  %1361 = vmatmul.mubr.f32.gmra.mrb[0].mxu0 %v323
  %v1362 = vpop.f32.mrb[0].mxu0
  %v1363 = vadd.f32 0.0, %v1362
  %v1364 = vpop.f32.mrb[0].mxu0
  %v1365 = vadd.f32 0.0, %v1364
  %1366 = vmatprep.mubr.f32.mxu0 %v661
  %1367 = vmatmul.mubr.f32.gmra.mrb[0].mxu0 %v325
  %v1368 = vpop.f32.mrb[0].mxu0
  %v1369 = vadd.f32 0.0, %v1368
  %v1370 = vpop.f32.mrb[0].mxu0
  %v1371 = vadd.f32 0.0, %v1370
  %1372 = vmatprep.mubr.f32.mxu0 %v664
  %1373 = vmatmul.mubr.f32.gmra.mrb[0].mxu0 %v327
  %v1374 = vpop.f32.mrb[0].mxu0
  %v1375 = vadd.f32 0.0, %v1374
  %v1376 = vpop.f32.mrb[0].mxu0
  %v1377 = vadd.f32 0.0, %v1376
  %1378 = vmatprep.mubr.f32.mxu0 %v667
  %1379 = vmatmul.mubr.f32.gmra.mrb[0].mxu0 %v329
  %v1380 = vpop.f32.mrb[0].mxu0
  %v1381 = vadd.f32 0.0, %v1380
  %v1382 = vpop.f32.mrb[0].mxu0
  %v1383 = vadd.f32 0.0, %v1382
  %1384 = vmatprep.mubr.f32.mxu0 %v670
  %1385 = vmatmul.mubr.f32.gmra.mrb[0].mxu0 %v331
  %v1386 = vpop.f32.mrb[0].mxu0
  %v1387 = vadd.f32 0.0, %v1386
  %v1388 = vpop.f32.mrb[0].mxu0
  %v1389 = vadd.f32 0.0, %v1388
  %1390 = vmatprep.mubr.f32.mxu0 %v673
  %1391 = vmatmul.mubr.f32.gmra.mrb[0].mxu0 %v333
  %v1392 = vpop.f32.mrb[0].mxu0
  %v1393 = vadd.f32 0.0, %v1392
  %v1394 = vpop.f32.mrb[0].mxu0
  %v1395 = vadd.f32 0.0, %v1394
  %1396 = vmatprep.mubr.f32.mxu0 %v676
  %1397 = vmatmul.mubr.f32.gmra.mrb[0].mxu0 %v335
  %v1398 = vpop.f32.mrb[0].mxu0
  %v1399 = vadd.f32 0.0, %v1398
  %v1400 = vpop.f32.mrb[0].mxu0
  %v1401 = vadd.f32 0.0, %v1400
  %1402 = vmatprep.mubr.f32.mxu0 %v679
  %1403 = vmatmul.mubr.f32.gmra.mrb[0].mxu0 %v337
  %v1404 = vpop.f32.mrb[0].mxu0
  %v1405 = vadd.f32 0.0, %v1404
  %v1406 = vpop.f32.mrb[0].mxu0
  %v1407 = vadd.f32 0.0, %v1406
  %1408 = vmatprep.mubr.f32.mxu0 %v682
  %1409 = vmatmul.mubr.f32.gmra.mrb[0].mxu0 %v339
  %v1410 = vpop.f32.mrb[0].mxu0
  %v1411 = vadd.f32 0.0, %v1410
  %v1412 = vpop.f32.mrb[0].mxu0
  %v1413 = vadd.f32 0.0, %v1412
  %1414 = vmatprep.mubr.f32.mxu0 %v685
  %1415 = vmatmul.mubr.f32.gmra.mrb[0].mxu0 %v341
  %v1416 = vpop.f32.mrb[0].mxu0
  %v1417 = vadd.f32 0.0, %v1416
  %v1418 = vpop.f32.mrb[0].mxu0
  %v1419 = vadd.f32 0.0, %v1418
  %1420 = vmatprep.mubr.f32.mxu0 %v688
  %1421 = vmatmul.mubr.f32.gmra.mrb[0].mxu0 %v343
  %v1422 = vpop.f32.mrb[0].mxu0
  %v1423 = vadd.f32 0.0, %v1422
  %v1424 = vpop.f32.mrb[0].mxu0
  %v1425 = vadd.f32 0.0, %v1424
  %1426 = vmatprep.mubr.f32.mxu0 %v691
  %1427 = vmatmul.mubr.f32.gmra.mrb[0].mxu0 %v345
  %v1428 = vpop.f32.mrb[0].mxu0
  %v1429 = vadd.f32 0.0, %v1428
  %v1430 = vpop.f32.mrb[0].mxu0
  %v1431 = vadd.f32 0.0, %v1430
  %1432 = vmatprep.mubr.f32.mxu0 %v694
  %1433 = vmatmul.mubr.f32.gmra.mrb[0].mxu0 %v347
  %v1434 = vpop.f32.mrb[0].mxu0
  %v1435 = vadd.f32 0.0, %v1434
  %v1436 = vpop.f32.mrb[0].mxu0
  %v1437 = vadd.f32 0.0, %v1436
  %1438 = vmatprep.mubr.f32.mxu0 %v697
  %1439 = vmatmul.mubr.f32.gmra.mrb[0].mxu0 %v349
  %v1440 = vpop.f32.mrb[0].mxu0
  %v1441 = vadd.f32 0.0, %v1440
  %v1442 = vpop.f32.mrb[0].mxu0
  %v1443 = vadd.f32 0.0, %v1442
  %1444 = vmatprep.mubr.f32.mxu0 %v700
  %1445 = vmatmul.mubr.f32.gmra.mrb[0].mxu0 %v351
  %v1446 = vpop.f32.mrb[0].mxu0
  %v1447 = vadd.f32 0.0, %v1446
  %v1448 = vpop.f32.mrb[0].mxu0
  %v1449 = vadd.f32 0.0, %v1448
  %1450 = vmatprep.mubr.f32.mxu0 %v703
  %1451 = vmatmul.mubr.f32.gmra.mrb[0].mxu0 %v353
  %v1452 = vpop.f32.mrb[0].mxu0
  %v1453 = vadd.f32 0.0, %v1452
  %v1454 = vpop.f32.mrb[0].mxu0
  %v1455 = vadd.f32 0.0, %v1454
  %1456 = vmatprep.mubr.f32.mxu0 %v706
  %1457 = vmatmul.mubr.f32.gmra.mrb[0].mxu0 %v355
  %v1458 = vpop.f32.mrb[0].mxu0
  %v1459 = vadd.f32 0.0, %v1458
  %v1460 = vpop.f32.mrb[0].mxu0
  %v1461 = vadd.f32 0.0, %v1460
  %1462 = vmatprep.mubr.f32.mxu0 %v709
  %1463 = vmatmul.mubr.f32.gmra.mrb[0].mxu0 %v357
  %v1464 = vpop.f32.mrb[0].mxu0
  %v1465 = vadd.f32 0.0, %v1464
  %v1466 = vpop.f32.mrb[0].mxu0
  %v1467 = vadd.f32 0.0, %v1466
  %1468 = vmatprep.mubr.f32.mxu0 %v712
  %1469 = vmatmul.mubr.f32.gmra.mrb[0].mxu0 %v359
  %v1470 = vpop.f32.mrb[0].mxu0
  %v1471 = vadd.f32 0.0, %v1470
  %v1472 = vpop.f32.mrb[0].mxu0
  %v1473 = vadd.f32 0.0, %v1472
  %1474 = vmatprep.mubr.f32.mxu0 %v715
  %1475 = vmatmul.mubr.f32.gmra.mrb[0].mxu0 %v361
  %v1476 = vpop.f32.mrb[0].mxu0
  %v1477 = vadd.f32 0.0, %v1476
  %v1478 = vpop.f32.mrb[0].mxu0
  %v1479 = vadd.f32 0.0, %v1478
  %1480 = vmatprep.mubr.f32.mxu0 %v718
  %1481 = vmatmul.mubr.f32.gmra.mrb[0].mxu0 %v363
  %v1482 = vpop.f32.mrb[0].mxu0
  %v1483 = vadd.f32 0.0, %v1482
  %v1484 = vpop.f32.mrb[0].mxu0
  %v1485 = vadd.f32 0.0, %v1484
  %1486 = vmatprep.mubr.f32.mxu0 %v721
  %1487 = vmatmul.mubr.f32.gmra.mrb[0].mxu0 %v365
  %v1488 = vpop.f32.mrb[0].mxu0
  %v1489 = vadd.f32 0.0, %v1488
  %v1490 = vpop.f32.mrb[0].mxu0
  %v1491 = vadd.f32 0.0, %v1490
  %1492 = vmatprep.mubr.f32.mxu0 %v724
  %1493 = vmatmul.mubr.f32.gmra.mrb[0].mxu0 %v367
  %v1494 = vpop.f32.mrb[0].mxu0
  %v1495 = vadd.f32 0.0, %v1494
  %v1496 = vpop.f32.mrb[0].mxu0
  %v1497 = vadd.f32 0.0, %v1496
  %1498 = vmatprep.mubr.f32.mxu0 %v727
  %1499 = vmatmul.mubr.f32.gmra.mrb[0].mxu0 %v369
  %v1500 = vpop.f32.mrb[0].mxu0
  %v1501 = vadd.f32 0.0, %v1500
  %v1502 = vpop.f32.mrb[0].mxu0
  %v1503 = vadd.f32 0.0, %v1502
  %1504 = vmatprep.mubr.f32.mxu0 %v730
  %1505 = vmatmul.mubr.f32.gmra.mrb[0].mxu0 %v371
  %v1506 = vpop.f32.mrb[0].mxu0
  %v1507 = vadd.f32 0.0, %v1506
  %v1508 = vpop.f32.mrb[0].mxu0
  %v1509 = vadd.f32 0.0, %v1508
  %1510 = vmatprep.mubr.f32.mxu0 %v733
  %1511 = vmatmul.mubr.f32.gmra.mrb[0].mxu0 %v373
  %v1512 = vpop.f32.mrb[0].mxu0
  %v1513 = vadd.f32 0.0, %v1512
  %v1514 = vpop.f32.mrb[0].mxu0
  %v1515 = vadd.f32 0.0, %v1514
  %1516 = vmatprep.mubr.f32.mxu0 %v736
  %1517 = vmatmul.mubr.f32.gmra.mrb[0].mxu0 %v375
  %v1518 = vpop.f32.mrb[0].mxu0
  %v1519 = vadd.f32 0.0, %v1518
  %v1520 = vpop.f32.mrb[0].mxu0
  %v1521 = vadd.f32 0.0, %v1520
  %1522 = vdwg.mxu0
  %vm1523 = vcmask 556032
  %v1524 = vsel %vm1523, %v807, 0.0
  %v1525 = vadd.f32 %v805, %v1524
  %1526 = vadd.xlane.f32.xlu0 %v1525
  %v1527 = vpop.xlane.xlu0 %1526
  %v1528 = vsel %vm1523, %v813, 0.0
  %v1529 = vadd.f32 %v811, %v1528
  %1530 = vadd.xlane.f32.xlu0 %v1529
  %v1531 = vpop.xlane.xlu0 %1530
  %v1532 = vsel %vm1523, %v819, 0.0
  %v1533 = vadd.f32 %v817, %v1532
  %1534 = vadd.xlane.f32.xlu0 %v1533
  %v1535 = vpop.xlane.xlu0 %1534
  %v1536 = vsel %vm1523, %v825, 0.0
  %v1537 = vadd.f32 %v823, %v1536
  %1538 = vadd.xlane.f32.xlu0 %v1537
  %v1539 = vpop.xlane.xlu0 %1538
  %v1540 = vsel %vm1523, %v831, 0.0
  %v1541 = vadd.f32 %v829, %v1540
  %1542 = vadd.xlane.f32.xlu0 %v1541
  %v1543 = vpop.xlane.xlu0 %1542
  %v1544 = vsel %vm1523, %v837, 0.0
  %v1545 = vadd.f32 %v835, %v1544
  %1546 = vadd.xlane.f32.xlu0 %v1545
  %v1547 = vpop.xlane.xlu0 %1546
  %v1548 = vsel %vm1523, %v843, 0.0
  %v1549 = vadd.f32 %v841, %v1548
  %1550 = vadd.xlane.f32.xlu0 %v1549
  %v1551 = vpop.xlane.xlu0 %1550
  %v1552 = vsel %vm1523, %v849, 0.0
  %v1553 = vadd.f32 %v847, %v1552
  %1554 = vadd.xlane.f32.xlu0 %v1553
  %v1555 = vpop.xlane.xlu0 %1554
  %v1556 = vsel %vm1523, %v855, 0.0
  %v1557 = vadd.f32 %v853, %v1556
  %1558 = vadd.xlane.f32.xlu0 %v1557
  %v1559 = vpop.xlane.xlu0 %1558
  %v1560 = vsel %vm1523, %v861, 0.0
  %v1561 = vadd.f32 %v859, %v1560
  %1562 = vadd.xlane.f32.xlu0 %v1561
  %v1563 = vpop.xlane.xlu0 %1562
  %v1564 = vsel %vm1523, %v867, 0.0
  %v1565 = vadd.f32 %v865, %v1564
  %1566 = vadd.xlane.f32.xlu0 %v1565
  %v1567 = vpop.xlane.xlu0 %1566
  %v1568 = vsel %vm1523, %v873, 0.0
  %v1569 = vadd.f32 %v871, %v1568
  %1570 = vadd.xlane.f32.xlu0 %v1569
  %v1571 = vpop.xlane.xlu0 %1570
  %v1572 = vsel %vm1523, %v879, 0.0
  %v1573 = vadd.f32 %v877, %v1572
  %1574 = vadd.xlane.f32.xlu0 %v1573
  %v1575 = vpop.xlane.xlu0 %1574
  %v1576 = vsel %vm1523, %v885, 0.0
  %v1577 = vadd.f32 %v883, %v1576
  %1578 = vadd.xlane.f32.xlu0 %v1577
  %v1579 = vpop.xlane.xlu0 %1578
  %v1580 = vsel %vm1523, %v891, 0.0
  %v1581 = vadd.f32 %v889, %v1580
  %1582 = vadd.xlane.f32.xlu0 %v1581
  %v1583 = vpop.xlane.xlu0 %1582
  %v1584 = vsel %vm1523, %v897, 0.0
  %v1585 = vadd.f32 %v895, %v1584
  %1586 = vadd.xlane.f32.xlu0 %v1585
  %v1587 = vpop.xlane.xlu0 %1586
  %v1588 = vsel %vm1523, %v903, 0.0
  %v1589 = vadd.f32 %v901, %v1588
  %1590 = vadd.xlane.f32.xlu0 %v1589
  %v1591 = vpop.xlane.xlu0 %1590
  %v1592 = vsel %vm1523, %v909, 0.0
  %v1593 = vadd.f32 %v907, %v1592
  %1594 = vadd.xlane.f32.xlu0 %v1593
  %v1595 = vpop.xlane.xlu0 %1594
  %v1596 = vsel %vm1523, %v915, 0.0
  %v1597 = vadd.f32 %v913, %v1596
  %1598 = vadd.xlane.f32.xlu0 %v1597
  %v1599 = vpop.xlane.xlu0 %1598
  %v1600 = vsel %vm1523, %v921, 0.0
  %v1601 = vadd.f32 %v919, %v1600
  %1602 = vadd.xlane.f32.xlu0 %v1601
  %v1603 = vpop.xlane.xlu0 %1602
  %v1604 = vsel %vm1523, %v927, 0.0
  %v1605 = vadd.f32 %v925, %v1604
  %1606 = vadd.xlane.f32.xlu0 %v1605
  %v1607 = vpop.xlane.xlu0 %1606
  %v1608 = vsel %vm1523, %v933, 0.0
  %v1609 = vadd.f32 %v931, %v1608
  %1610 = vadd.xlane.f32.xlu0 %v1609
  %v1611 = vpop.xlane.xlu0 %1610
  %v1612 = vsel %vm1523, %v939, 0.0
  %v1613 = vadd.f32 %v937, %v1612
  %1614 = vadd.xlane.f32.xlu0 %v1613
  %v1615 = vpop.xlane.xlu0 %1614
  %v1616 = vsel %vm1523, %v945, 0.0
  %v1617 = vadd.f32 %v943, %v1616
  %1618 = vadd.xlane.f32.xlu0 %v1617
  %v1619 = vpop.xlane.xlu0 %1618
  %v1620 = vsel %vm1523, %v951, 0.0
  %v1621 = vadd.f32 %v949, %v1620
  %1622 = vadd.xlane.f32.xlu0 %v1621
  %v1623 = vpop.xlane.xlu0 %1622
  %v1624 = vsel %vm1523, %v957, 0.0
  %v1625 = vadd.f32 %v955, %v1624
  %1626 = vadd.xlane.f32.xlu0 %v1625
  %v1627 = vpop.xlane.xlu0 %1626
  %v1628 = vsel %vm1523, %v963, 0.0
  %v1629 = vadd.f32 %v961, %v1628
  %1630 = vadd.xlane.f32.xlu0 %v1629
  %v1631 = vpop.xlane.xlu0 %1630
  %v1632 = vsel %vm1523, %v969, 0.0
  %v1633 = vadd.f32 %v967, %v1632
  %1634 = vadd.xlane.f32.xlu0 %v1633
  %v1635 = vpop.xlane.xlu0 %1634
  %v1636 = vsel %vm1523, %v975, 0.0
  %v1637 = vadd.f32 %v973, %v1636
  %1638 = vadd.xlane.f32.xlu0 %v1637
  %v1639 = vpop.xlane.xlu0 %1638
  %v1640 = vsel %vm1523, %v981, 0.0
  %v1641 = vadd.f32 %v979, %v1640
  %1642 = vadd.xlane.f32.xlu0 %v1641
  %v1643 = vpop.xlane.xlu0 %1642
  %v1644 = vsel %vm1523, %v987, 0.0
  %v1645 = vadd.f32 %v985, %v1644
  %1646 = vadd.xlane.f32.xlu0 %v1645
  %v1647 = vpop.xlane.xlu0 %1646
  %v1648 = vsel %vm1523, %v993, 0.0
  %v1649 = vadd.f32 %v991, %v1648
  %1650 = vadd.xlane.f32.xlu0 %v1649
  %v1651 = vpop.xlane.xlu0 %1650
  %v1652 = vsel %vm1523, %v999, 0.0
  %v1653 = vadd.f32 %v997, %v1652
  %1654 = vadd.xlane.f32.xlu0 %v1653
  %v1655 = vpop.xlane.xlu0 %1654
  %v1656 = vsel %vm1523, %v1005, 0.0
  %v1657 = vadd.f32 %v1003, %v1656
  %1658 = vadd.xlane.f32.xlu0 %v1657
  %v1659 = vpop.xlane.xlu0 %1658
  %v1660 = vsel %vm1523, %v1011, 0.0
  %v1661 = vadd.f32 %v1009, %v1660
  %1662 = vadd.xlane.f32.xlu0 %v1661
  %v1663 = vpop.xlane.xlu0 %1662
  %v1664 = vsel %vm1523, %v1017, 0.0
  %v1665 = vadd.f32 %v1015, %v1664
  %1666 = vadd.xlane.f32.xlu0 %v1665
  %v1667 = vpop.xlane.xlu0 %1666
  %v1668 = vsel %vm1523, %v1023, 0.0
  %v1669 = vadd.f32 %v1021, %v1668
  %1670 = vadd.xlane.f32.xlu0 %v1669
  %v1671 = vpop.xlane.xlu0 %1670
  %v1672 = vsel %vm1523, %v1029, 0.0
  %v1673 = vadd.f32 %v1027, %v1672
  %1674 = vadd.xlane.f32.xlu0 %v1673
  %v1675 = vpop.xlane.xlu0 %1674
  %v1676 = vsel %vm1523, %v1035, 0.0
  %v1677 = vadd.f32 %v1033, %v1676
  %1678 = vadd.xlane.f32.xlu0 %v1677
  %v1679 = vpop.xlane.xlu0 %1678
  %v1680 = vsel %vm1523, %v1041, 0.0
  %v1681 = vadd.f32 %v1039, %v1680
  %1682 = vadd.xlane.f32.xlu0 %v1681
  %v1683 = vpop.xlane.xlu0 %1682
  %v1684 = vsel %vm1523, %v1047, 0.0
  %v1685 = vadd.f32 %v1045, %v1684
  %1686 = vadd.xlane.f32.xlu0 %v1685
  %v1687 = vpop.xlane.xlu0 %1686
  %v1688 = vsel %vm1523, %v1053, 0.0
  %v1689 = vadd.f32 %v1051, %v1688
  %1690 = vadd.xlane.f32.xlu0 %v1689
  %v1691 = vpop.xlane.xlu0 %1690
  %v1692 = vsel %vm1523, %v1059, 0.0
  %v1693 = vadd.f32 %v1057, %v1692
  %1694 = vadd.xlane.f32.xlu0 %v1693
  %v1695 = vpop.xlane.xlu0 %1694
  %v1696 = vsel %vm1523, %v1065, 0.0
  %v1697 = vadd.f32 %v1063, %v1696
  %1698 = vadd.xlane.f32.xlu0 %v1697
  %v1699 = vpop.xlane.xlu0 %1698
  %v1700 = vsel %vm1523, %v1071, 0.0
  %v1701 = vadd.f32 %v1069, %v1700
  %1702 = vadd.xlane.f32.xlu0 %v1701
  %v1703 = vpop.xlane.xlu0 %1702
  %v1704 = vsel %vm1523, %v1077, 0.0
  %v1705 = vadd.f32 %v1075, %v1704
  %1706 = vadd.xlane.f32.xlu0 %v1705
  %v1707 = vpop.xlane.xlu0 %1706
  %v1708 = vsel %vm1523, %v1083, 0.0
  %v1709 = vadd.f32 %v1081, %v1708
  %1710 = vadd.xlane.f32.xlu0 %v1709
  %v1711 = vpop.xlane.xlu0 %1710
  %v1712 = vsel %vm1523, %v1089, 0.0
  %v1713 = vadd.f32 %v1087, %v1712
  %1714 = vadd.xlane.f32.xlu0 %v1713
  %v1715 = vpop.xlane.xlu0 %1714
  %v1716 = vsel %vm1523, %v1095, 0.0
  %v1717 = vadd.f32 %v1093, %v1716
  %1718 = vadd.xlane.f32.xlu0 %v1717
  %v1719 = vpop.xlane.xlu0 %1718
  %v1720 = vsel %vm1523, %v1101, 0.0
  %v1721 = vadd.f32 %v1099, %v1720
  %1722 = vadd.xlane.f32.xlu0 %v1721
  %v1723 = vpop.xlane.xlu0 %1722
  %v1724 = vsel %vm1523, %v1107, 0.0
  %v1725 = vadd.f32 %v1105, %v1724
  %1726 = vadd.xlane.f32.xlu0 %v1725
  %v1727 = vpop.xlane.xlu0 %1726
  %v1728 = vsel %vm1523, %v1113, 0.0
  %v1729 = vadd.f32 %v1111, %v1728
  %1730 = vadd.xlane.f32.xlu0 %v1729
  %v1731 = vpop.xlane.xlu0 %1730
  %v1732 = vsel %vm1523, %v1119, 0.0
  %v1733 = vadd.f32 %v1117, %v1732
  %1734 = vadd.xlane.f32.xlu0 %v1733
  %v1735 = vpop.xlane.xlu0 %1734
  %v1736 = vsel %vm1523, %v1125, 0.0
  %v1737 = vadd.f32 %v1123, %v1736
  %1738 = vadd.xlane.f32.xlu0 %v1737
  %v1739 = vpop.xlane.xlu0 %1738
  %v1740 = vsel %vm1523, %v1131, 0.0
  %v1741 = vadd.f32 %v1129, %v1740
  %1742 = vadd.xlane.f32.xlu0 %v1741
  %v1743 = vpop.xlane.xlu0 %1742
  %v1744 = vsel %vm1523, %v1137, 0.0
  %v1745 = vadd.f32 %v1135, %v1744
  %1746 = vadd.xlane.f32.xlu0 %v1745
  %v1747 = vpop.xlane.xlu0 %1746
  %v1748 = vsel %vm1523, %v1143, 0.0
  %v1749 = vadd.f32 %v1141, %v1748
  %1750 = vadd.xlane.f32.xlu0 %v1749
  %v1751 = vpop.xlane.xlu0 %1750
  %v1752 = vsel %vm1523, %v1149, 0.0
  %v1753 = vadd.f32 %v1147, %v1752
  %1754 = vadd.xlane.f32.xlu0 %v1753
  %v1755 = vpop.xlane.xlu0 %1754
  %v1756 = vsel %vm1523, %v1155, 0.0
  %v1757 = vadd.f32 %v1153, %v1756
  %1758 = vadd.xlane.f32.xlu0 %v1757
  %v1759 = vpop.xlane.xlu0 %1758
  %v1760 = vsel %vm1523, %v1161, 0.0
  %v1761 = vadd.f32 %v1159, %v1760
  %1762 = vadd.xlane.f32.xlu0 %v1761
  %v1763 = vpop.xlane.xlu0 %1762
  %v1764 = vsel %vm1523, %v1167, 0.0
  %v1765 = vadd.f32 %v1165, %v1764
  %1766 = vadd.xlane.f32.xlu0 %v1765
  %v1767 = vpop.xlane.xlu0 %1766
  %v1768 = vsel %vm1523, %v1173, 0.0
  %v1769 = vadd.f32 %v1171, %v1768
  %1770 = vadd.xlane.f32.xlu0 %v1769
  %v1771 = vpop.xlane.xlu0 %1770
  %v1772 = vsel %vm1523, %v1179, 0.0
  %v1773 = vadd.f32 %v1177, %v1772
  %1774 = vadd.xlane.f32.xlu0 %v1773
  %v1775 = vpop.xlane.xlu0 %1774
  %v1776 = vsel %vm1523, %v1185, 0.0
  %v1777 = vadd.f32 %v1183, %v1776
  %1778 = vadd.xlane.f32.xlu0 %v1777
  %v1779 = vpop.xlane.xlu0 %1778
  %v1780 = vsel %vm1523, %v1191, 0.0
  %v1781 = vadd.f32 %v1189, %v1780
  %1782 = vadd.xlane.f32.xlu0 %v1781
  %v1783 = vpop.xlane.xlu0 %1782
  %v1784 = vsel %vm1523, %v1197, 0.0
  %v1785 = vadd.f32 %v1195, %v1784
  %1786 = vadd.xlane.f32.xlu0 %v1785
  %v1787 = vpop.xlane.xlu0 %1786
  %v1788 = vsel %vm1523, %v1203, 0.0
  %v1789 = vadd.f32 %v1201, %v1788
  %1790 = vadd.xlane.f32.xlu0 %v1789
  %v1791 = vpop.xlane.xlu0 %1790
  %v1792 = vsel %vm1523, %v1209, 0.0
  %v1793 = vadd.f32 %v1207, %v1792
  %1794 = vadd.xlane.f32.xlu0 %v1793
  %v1795 = vpop.xlane.xlu0 %1794
  %v1796 = vsel %vm1523, %v1215, 0.0
  %v1797 = vadd.f32 %v1213, %v1796
  %1798 = vadd.xlane.f32.xlu0 %v1797
  %v1799 = vpop.xlane.xlu0 %1798
  %v1800 = vsel %vm1523, %v1221, 0.0
  %v1801 = vadd.f32 %v1219, %v1800
  %1802 = vadd.xlane.f32.xlu0 %v1801
  %v1803 = vpop.xlane.xlu0 %1802
  %v1804 = vsel %vm1523, %v1227, 0.0
  %v1805 = vadd.f32 %v1225, %v1804
  %1806 = vadd.xlane.f32.xlu0 %v1805
  %v1807 = vpop.xlane.xlu0 %1806
  %v1808 = vsel %vm1523, %v1233, 0.0
  %v1809 = vadd.f32 %v1231, %v1808
  %1810 = vadd.xlane.f32.xlu0 %v1809
  %v1811 = vpop.xlane.xlu0 %1810
  %v1812 = vsel %vm1523, %v1239, 0.0
  %v1813 = vadd.f32 %v1237, %v1812
  %1814 = vadd.xlane.f32.xlu0 %v1813
  %v1815 = vpop.xlane.xlu0 %1814
  %v1816 = vsel %vm1523, %v1245, 0.0
  %v1817 = vadd.f32 %v1243, %v1816
  %1818 = vadd.xlane.f32.xlu0 %v1817
  %v1819 = vpop.xlane.xlu0 %1818
  %v1820 = vsel %vm1523, %v1251, 0.0
  %v1821 = vadd.f32 %v1249, %v1820
  %1822 = vadd.xlane.f32.xlu0 %v1821
  %v1823 = vpop.xlane.xlu0 %1822
  %v1824 = vsel %vm1523, %v1257, 0.0
  %v1825 = vadd.f32 %v1255, %v1824
  %1826 = vadd.xlane.f32.xlu0 %v1825
  %v1827 = vpop.xlane.xlu0 %1826
  %v1828 = vsel %vm1523, %v1263, 0.0
  %v1829 = vadd.f32 %v1261, %v1828
  %1830 = vadd.xlane.f32.xlu0 %v1829
  %v1831 = vpop.xlane.xlu0 %1830
  %v1832 = vsel %vm1523, %v1269, 0.0
  %v1833 = vadd.f32 %v1267, %v1832
  %1834 = vadd.xlane.f32.xlu0 %v1833
  %v1835 = vpop.xlane.xlu0 %1834
  %v1836 = vsel %vm1523, %v1275, 0.0
  %v1837 = vadd.f32 %v1273, %v1836
  %1838 = vadd.xlane.f32.xlu0 %v1837
  %v1839 = vpop.xlane.xlu0 %1838
  %v1840 = vsel %vm1523, %v1281, 0.0
  %v1841 = vadd.f32 %v1279, %v1840
  %1842 = vadd.xlane.f32.xlu0 %v1841
  %v1843 = vpop.xlane.xlu0 %1842
  %v1844 = vsel %vm1523, %v1287, 0.0
  %v1845 = vadd.f32 %v1285, %v1844
  %1846 = vadd.xlane.f32.xlu0 %v1845
  %v1847 = vpop.xlane.xlu0 %1846
  %v1848 = vsel %vm1523, %v1293, 0.0
  %v1849 = vadd.f32 %v1291, %v1848
  %1850 = vadd.xlane.f32.xlu0 %v1849
  %v1851 = vpop.xlane.xlu0 %1850
  %v1852 = vsel %vm1523, %v1299, 0.0
  %v1853 = vadd.f32 %v1297, %v1852
  %1854 = vadd.xlane.f32.xlu0 %v1853
  %v1855 = vpop.xlane.xlu0 %1854
  %v1856 = vsel %vm1523, %v1305, 0.0
  %v1857 = vadd.f32 %v1303, %v1856
  %1858 = vadd.xlane.f32.xlu0 %v1857
  %v1859 = vpop.xlane.xlu0 %1858
  %v1860 = vsel %vm1523, %v1311, 0.0
  %v1861 = vadd.f32 %v1309, %v1860
  %1862 = vadd.xlane.f32.xlu0 %v1861
  %v1863 = vpop.xlane.xlu0 %1862
  %v1864 = vsel %vm1523, %v1317, 0.0
  %v1865 = vadd.f32 %v1315, %v1864
  %1866 = vadd.xlane.f32.xlu0 %v1865
  %v1867 = vpop.xlane.xlu0 %1866
  %v1868 = vsel %vm1523, %v1323, 0.0
  %v1869 = vadd.f32 %v1321, %v1868
  %1870 = vadd.xlane.f32.xlu0 %v1869
  %v1871 = vpop.xlane.xlu0 %1870
  %v1872 = vsel %vm1523, %v1329, 0.0
  %v1873 = vadd.f32 %v1327, %v1872
  %1874 = vadd.xlane.f32.xlu0 %v1873
  %v1875 = vpop.xlane.xlu0 %1874
  %v1876 = vsel %vm1523, %v1335, 0.0
  %v1877 = vadd.f32 %v1333, %v1876
  %1878 = vadd.xlane.f32.xlu0 %v1877
  %v1879 = vpop.xlane.xlu0 %1878
  %v1880 = vsel %vm1523, %v1341, 0.0
  %v1881 = vadd.f32 %v1339, %v1880
  %1882 = vadd.xlane.f32.xlu0 %v1881
  %v1883 = vpop.xlane.xlu0 %1882
  %v1884 = vsel %vm1523, %v1347, 0.0
  %v1885 = vadd.f32 %v1345, %v1884
  %1886 = vadd.xlane.f32.xlu0 %v1885
  %v1887 = vpop.xlane.xlu0 %1886
  %v1888 = vsel %vm1523, %v1353, 0.0
  %v1889 = vadd.f32 %v1351, %v1888
  %1890 = vadd.xlane.f32.xlu0 %v1889
  %v1891 = vpop.xlane.xlu0 %1890
  %v1892 = vsel %vm1523, %v1359, 0.0
  %v1893 = vadd.f32 %v1357, %v1892
  %1894 = vadd.xlane.f32.xlu0 %v1893
  %v1895 = vpop.xlane.xlu0 %1894
  %v1896 = vsel %vm1523, %v1365, 0.0
  %v1897 = vadd.f32 %v1363, %v1896
  %1898 = vadd.xlane.f32.xlu0 %v1897
  %v1899 = vpop.xlane.xlu0 %1898
  %v1900 = vsel %vm1523, %v1371, 0.0
  %v1901 = vadd.f32 %v1369, %v1900
  %1902 = vadd.xlane.f32.xlu0 %v1901
  %v1903 = vpop.xlane.xlu0 %1902
  %v1904 = vsel %vm1523, %v1377, 0.0
  %v1905 = vadd.f32 %v1375, %v1904
  %1906 = vadd.xlane.f32.xlu0 %v1905
  %v1907 = vpop.xlane.xlu0 %1906
  %v1908 = vsel %vm1523, %v1383, 0.0
  %v1909 = vadd.f32 %v1381, %v1908
  %1910 = vadd.xlane.f32.xlu0 %v1909
  %v1911 = vpop.xlane.xlu0 %1910
  %v1912 = vsel %vm1523, %v1389, 0.0
  %v1913 = vadd.f32 %v1387, %v1912
  %1914 = vadd.xlane.f32.xlu0 %v1913
  %v1915 = vpop.xlane.xlu0 %1914
  %v1916 = vsel %vm1523, %v1395, 0.0
  %v1917 = vadd.f32 %v1393, %v1916
  %1918 = vadd.xlane.f32.xlu0 %v1917
  %v1919 = vpop.xlane.xlu0 %1918
  %v1920 = vsel %vm1523, %v1401, 0.0
  %v1921 = vadd.f32 %v1399, %v1920
  %1922 = vadd.xlane.f32.xlu0 %v1921
  %v1923 = vpop.xlane.xlu0 %1922
  %v1924 = vsel %vm1523, %v1407, 0.0
  %v1925 = vadd.f32 %v1405, %v1924
  %1926 = vadd.xlane.f32.xlu0 %v1925
  %v1927 = vpop.xlane.xlu0 %1926
  %v1928 = vsel %vm1523, %v1413, 0.0
  %v1929 = vadd.f32 %v1411, %v1928
  %1930 = vadd.xlane.f32.xlu0 %v1929
  %v1931 = vpop.xlane.xlu0 %1930
  %v1932 = vsel %vm1523, %v1419, 0.0
  %v1933 = vadd.f32 %v1417, %v1932
  %1934 = vadd.xlane.f32.xlu0 %v1933
  %v1935 = vpop.xlane.xlu0 %1934
  %v1936 = vsel %vm1523, %v1425, 0.0
  %v1937 = vadd.f32 %v1423, %v1936
  %1938 = vadd.xlane.f32.xlu0 %v1937
  %v1939 = vpop.xlane.xlu0 %1938
  %v1940 = vsel %vm1523, %v1431, 0.0
  %v1941 = vadd.f32 %v1429, %v1940
  %1942 = vadd.xlane.f32.xlu0 %v1941
  %v1943 = vpop.xlane.xlu0 %1942
  %v1944 = vsel %vm1523, %v1437, 0.0
  %v1945 = vadd.f32 %v1435, %v1944
  %1946 = vadd.xlane.f32.xlu0 %v1945
  %v1947 = vpop.xlane.xlu0 %1946
  %v1948 = vsel %vm1523, %v1443, 0.0
  %v1949 = vadd.f32 %v1441, %v1948
  %1950 = vadd.xlane.f32.xlu0 %v1949
  %v1951 = vpop.xlane.xlu0 %1950
  %v1952 = vsel %vm1523, %v1449, 0.0
  %v1953 = vadd.f32 %v1447, %v1952
  %1954 = vadd.xlane.f32.xlu0 %v1953
  %v1955 = vpop.xlane.xlu0 %1954
  %v1956 = vsel %vm1523, %v1455, 0.0
  %v1957 = vadd.f32 %v1453, %v1956
  %1958 = vadd.xlane.f32.xlu0 %v1957
  %v1959 = vpop.xlane.xlu0 %1958
  %v1960 = vsel %vm1523, %v1461, 0.0
  %v1961 = vadd.f32 %v1459, %v1960
  %1962 = vadd.xlane.f32.xlu0 %v1961
  %v1963 = vpop.xlane.xlu0 %1962
  %v1964 = vsel %vm1523, %v1467, 0.0
  %v1965 = vadd.f32 %v1465, %v1964
  %1966 = vadd.xlane.f32.xlu0 %v1965
  %v1967 = vpop.xlane.xlu0 %1966
  %v1968 = vsel %vm1523, %v1473, 0.0
  %v1969 = vadd.f32 %v1471, %v1968
  %1970 = vadd.xlane.f32.xlu0 %v1969
  %v1971 = vpop.xlane.xlu0 %1970
  %v1972 = vsel %vm1523, %v1479, 0.0
  %v1973 = vadd.f32 %v1477, %v1972
  %1974 = vadd.xlane.f32.xlu0 %v1973
  %v1975 = vpop.xlane.xlu0 %1974
  %v1976 = vsel %vm1523, %v1485, 0.0
  %v1977 = vadd.f32 %v1483, %v1976
  %1978 = vadd.xlane.f32.xlu0 %v1977
  %v1979 = vpop.xlane.xlu0 %1978
  %v1980 = vsel %vm1523, %v1491, 0.0
  %v1981 = vadd.f32 %v1489, %v1980
  %1982 = vadd.xlane.f32.xlu0 %v1981
  %v1983 = vpop.xlane.xlu0 %1982
  %v1984 = vsel %vm1523, %v1497, 0.0
  %v1985 = vadd.f32 %v1495, %v1984
  %1986 = vadd.xlane.f32.xlu0 %v1985
  %v1987 = vpop.xlane.xlu0 %1986
  %v1988 = vsel %vm1523, %v1503, 0.0
  %v1989 = vadd.f32 %v1501, %v1988
  %1990 = vadd.xlane.f32.xlu0 %v1989
  %v1991 = vpop.xlane.xlu0 %1990
  %v1992 = vsel %vm1523, %v1509, 0.0
  %v1993 = vadd.f32 %v1507, %v1992
  %1994 = vadd.xlane.f32.xlu0 %v1993
  %v1995 = vpop.xlane.xlu0 %1994
  %v1996 = vsel %vm1523, %v1515, 0.0
  %v1997 = vadd.f32 %v1513, %v1996
  %1998 = vadd.xlane.f32.xlu0 %v1997
  %v1999 = vpop.xlane.xlu0 %1998
  %v2000 = vsel %vm1523, %v1521, 0.0
  %v2001 = vadd.f32 %v1519, %v2000
  %2002 = vadd.xlane.f32.xlu0 %v2001
  %v2003 = vpop.xlane.xlu0 %2002
  %v2004 = vmul.f32 %v1527, 0.0051020407
  %v2005 = vmul.f32 %v1531, 0.0051020407
  %v2006 = vmul.f32 %v1535, 0.0051020407
  %v2007 = vmul.f32 %v1539, 0.0051020407
  %v2008 = vmul.f32 %v1543, 0.0051020407
  %v2009 = vmul.f32 %v1547, 0.0051020407
  %v2010 = vmul.f32 %v1551, 0.0051020407
  %v2011 = vmul.f32 %v1555, 0.0051020407
  %v2012 = vmul.f32 %v1559, 0.0051020407
  %v2013 = vmul.f32 %v1563, 0.0051020407
  %v2014 = vmul.f32 %v1567, 0.0051020407
  %v2015 = vmul.f32 %v1571, 0.0051020407
  %v2016 = vmul.f32 %v1575, 0.0051020407
  %v2017 = vmul.f32 %v1579, 0.0051020407
  %v2018 = vmul.f32 %v1583, 0.0051020407
  %v2019 = vmul.f32 %v1587, 0.0051020407
  %v2020 = vmul.f32 %v1591, 0.0051020407
  %v2021 = vmul.f32 %v1595, 0.0051020407
  %v2022 = vmul.f32 %v1599, 0.0051020407
  %v2023 = vmul.f32 %v1603, 0.0051020407
  %v2024 = vmul.f32 %v1607, 0.0051020407
  %v2025 = vmul.f32 %v1611, 0.0051020407
  %v2026 = vmul.f32 %v1615, 0.0051020407
  %v2027 = vmul.f32 %v1619, 0.0051020407
  %v2028 = vmul.f32 %v1623, 0.0051020407
  %v2029 = vmul.f32 %v1627, 0.0051020407
  %v2030 = vmul.f32 %v1631, 0.0051020407
  %v2031 = vmul.f32 %v1635, 0.0051020407
  %v2032 = vmul.f32 %v1639, 0.0051020407
  %v2033 = vmul.f32 %v1643, 0.0051020407
  %v2034 = vmul.f32 %v1647, 0.0051020407
  %v2035 = vmul.f32 %v1651, 0.0051020407
  %v2036 = vmul.f32 %v1655, 0.0051020407
  %v2037 = vmul.f32 %v1659, 0.0051020407
  %v2038 = vmul.f32 %v1663, 0.0051020407
  %v2039 = vmul.f32 %v1667, 0.0051020407
  %v2040 = vmul.f32 %v1671, 0.0051020407
  %v2041 = vmul.f32 %v1675, 0.0051020407
  %v2042 = vmul.f32 %v1679, 0.0051020407
  %v2043 = vmul.f32 %v1683, 0.0051020407
  %v2044 = vmul.f32 %v1687, 0.0051020407
  %v2045 = vmul.f32 %v1691, 0.0051020407
  %v2046 = vmul.f32 %v1695, 0.0051020407
  %v2047 = vmul.f32 %v1699, 0.0051020407
  %v2048 = vmul.f32 %v1703, 0.0051020407
  %v2049 = vmul.f32 %v1707, 0.0051020407
  %v2050 = vmul.f32 %v1711, 0.0051020407
  %v2051 = vmul.f32 %v1715, 0.0051020407
  %v2052 = vmul.f32 %v1719, 0.0051020407
  %v2053 = vmul.f32 %v1723, 0.0051020407
  %v2054 = vmul.f32 %v1727, 0.0051020407
  %v2055 = vmul.f32 %v1731, 0.0051020407
  %v2056 = vmul.f32 %v1735, 0.0051020407
  %v2057 = vmul.f32 %v1739, 0.0051020407
  %v2058 = vmul.f32 %v1743, 0.0051020407
  %v2059 = vmul.f32 %v1747, 0.0051020407
  %v2060 = vmul.f32 %v1751, 0.0051020407
  %v2061 = vmul.f32 %v1755, 0.0051020407
  %v2062 = vmul.f32 %v1759, 0.0051020407
  %v2063 = vmul.f32 %v1763, 0.0051020407
  %v2064 = vmul.f32 %v1767, 0.0051020407
  %v2065 = vmul.f32 %v1771, 0.0051020407
  %v2066 = vmul.f32 %v1775, 0.0051020407
  %v2067 = vmul.f32 %v1779, 0.0051020407
  %v2068 = vmul.f32 %v1783, 0.0051020407
  %v2069 = vmul.f32 %v1787, 0.0051020407
  %v2070 = vmul.f32 %v1791, 0.0051020407
  %v2071 = vmul.f32 %v1795, 0.0051020407
  %v2072 = vmul.f32 %v1799, 0.0051020407
  %v2073 = vmul.f32 %v1803, 0.0051020407
  %v2074 = vmul.f32 %v1807, 0.0051020407
  %v2075 = vmul.f32 %v1811, 0.0051020407
  %v2076 = vmul.f32 %v1815, 0.0051020407
  %v2077 = vmul.f32 %v1819, 0.0051020407
  %v2078 = vmul.f32 %v1823, 0.0051020407
  %v2079 = vmul.f32 %v1827, 0.0051020407
  %v2080 = vmul.f32 %v1831, 0.0051020407
  %v2081 = vmul.f32 %v1835, 0.0051020407
  %v2082 = vmul.f32 %v1839, 0.0051020407
  %v2083 = vmul.f32 %v1843, 0.0051020407
  %v2084 = vmul.f32 %v1847, 0.0051020407
  %v2085 = vmul.f32 %v1851, 0.0051020407
  %v2086 = vmul.f32 %v1855, 0.0051020407
  %v2087 = vmul.f32 %v1859, 0.0051020407
  %v2088 = vmul.f32 %v1863, 0.0051020407
  %v2089 = vmul.f32 %v1867, 0.0051020407
  %v2090 = vmul.f32 %v1871, 0.0051020407
  %v2091 = vmul.f32 %v1875, 0.0051020407
  %v2092 = vmul.f32 %v1879, 0.0051020407
  %v2093 = vmul.f32 %v1883, 0.0051020407
  %v2094 = vmul.f32 %v1887, 0.0051020407
  %v2095 = vmul.f32 %v1891, 0.0051020407
  %v2096 = vmul.f32 %v1895, 0.0051020407
  %v2097 = vmul.f32 %v1899, 0.0051020407
  %v2098 = vmul.f32 %v1903, 0.0051020407
  %v2099 = vmul.f32 %v1907, 0.0051020407
  %v2100 = vmul.f32 %v1911, 0.0051020407
  %v2101 = vmul.f32 %v1915, 0.0051020407
  %v2102 = vmul.f32 %v1919, 0.0051020407
  %v2103 = vmul.f32 %v1923, 0.0051020407
  %v2104 = vmul.f32 %v1927, 0.0051020407
  %v2105 = vmul.f32 %v1931, 0.0051020407
  %v2106 = vmul.f32 %v1935, 0.0051020407
  %v2107 = vmul.f32 %v1939, 0.0051020407
  %v2108 = vmul.f32 %v1943, 0.0051020407
  %v2109 = vmul.f32 %v1947, 0.0051020407
  %v2110 = vmul.f32 %v1951, 0.0051020407
  %v2111 = vmul.f32 %v1955, 0.0051020407
  %v2112 = vmul.f32 %v1959, 0.0051020407
  %v2113 = vmul.f32 %v1963, 0.0051020407
  %v2114 = vmul.f32 %v1967, 0.0051020407
  %v2115 = vmul.f32 %v1971, 0.0051020407
  %v2116 = vmul.f32 %v1975, 0.0051020407
  %v2117 = vmul.f32 %v1979, 0.0051020407
  %v2118 = vmul.f32 %v1983, 0.0051020407
  %v2119 = vmul.f32 %v1987, 0.0051020407
  %v2120 = vmul.f32 %v1991, 0.0051020407
  %v2121 = vmul.f32 %v1995, 0.0051020407
  %v2122 = vmul.f32 %v1999, 0.0051020407
  %v2123 = vmul.f32 %v2003, 0.0051020407
  %v2124 = vsub.f32 %v805, %v2004
  %v2125 = vsub.f32 %v807, %v2004
  %v2126 = vsub.f32 %v811, %v2005
  %v2127 = vsub.f32 %v813, %v2005
  %v2128 = vsub.f32 %v817, %v2006
  %v2129 = vsub.f32 %v819, %v2006
  %v2130 = vsub.f32 %v823, %v2007
  %v2131 = vsub.f32 %v825, %v2007
  %v2132 = vsub.f32 %v829, %v2008
  %v2133 = vsub.f32 %v831, %v2008
  %v2134 = vsub.f32 %v835, %v2009
  %v2135 = vsub.f32 %v837, %v2009
  %v2136 = vsub.f32 %v841, %v2010
  %v2137 = vsub.f32 %v843, %v2010
  %v2138 = vsub.f32 %v847, %v2011
  %v2139 = vsub.f32 %v849, %v2011
  %v2140 = vsub.f32 %v853, %v2012
  %v2141 = vsub.f32 %v855, %v2012
  %v2142 = vsub.f32 %v859, %v2013
  %v2143 = vsub.f32 %v861, %v2013
  %v2144 = vsub.f32 %v865, %v2014
  %v2145 = vsub.f32 %v867, %v2014
  %v2146 = vsub.f32 %v871, %v2015
  %v2147 = vsub.f32 %v873, %v2015
  %v2148 = vsub.f32 %v877, %v2016
  %v2149 = vsub.f32 %v879, %v2016
  %v2150 = vsub.f32 %v883, %v2017
  %v2151 = vsub.f32 %v885, %v2017
  %v2152 = vsub.f32 %v889, %v2018
  %v2153 = vsub.f32 %v891, %v2018
  %v2154 = vsub.f32 %v895, %v2019
  %v2155 = vsub.f32 %v897, %v2019
  %v2156 = vsub.f32 %v901, %v2020
  %v2157 = vsub.f32 %v903, %v2020
  %v2158 = vsub.f32 %v907, %v2021
  %v2159 = vsub.f32 %v909, %v2021
  %v2160 = vsub.f32 %v913, %v2022
  %v2161 = vsub.f32 %v915, %v2022
  %v2162 = vsub.f32 %v919, %v2023
  %v2163 = vsub.f32 %v921, %v2023
  %v2164 = vsub.f32 %v925, %v2024
  %v2165 = vsub.f32 %v927, %v2024
  %v2166 = vsub.f32 %v931, %v2025
  %v2167 = vsub.f32 %v933, %v2025
  %v2168 = vsub.f32 %v937, %v2026
  %v2169 = vsub.f32 %v939, %v2026
  %v2170 = vsub.f32 %v943, %v2027
  %v2171 = vsub.f32 %v945, %v2027
  %v2172 = vsub.f32 %v949, %v2028
  %v2173 = vsub.f32 %v951, %v2028
  %v2174 = vsub.f32 %v955, %v2029
  %v2175 = vsub.f32 %v957, %v2029
  %v2176 = vsub.f32 %v961, %v2030
  %v2177 = vsub.f32 %v963, %v2030
  %v2178 = vsub.f32 %v967, %v2031
  %v2179 = vsub.f32 %v969, %v2031
  %v2180 = vsub.f32 %v973, %v2032
  %v2181 = vsub.f32 %v975, %v2032
  %v2182 = vsub.f32 %v979, %v2033
  %v2183 = vsub.f32 %v981, %v2033
  %v2184 = vsub.f32 %v985, %v2034
  %v2185 = vsub.f32 %v987, %v2034
  %v2186 = vsub.f32 %v991, %v2035
  %v2187 = vsub.f32 %v993, %v2035
  %v2188 = vsub.f32 %v997, %v2036
  %v2189 = vsub.f32 %v999, %v2036
  %v2190 = vsub.f32 %v1003, %v2037
  %v2191 = vsub.f32 %v1005, %v2037
  %v2192 = vsub.f32 %v1009, %v2038
  %v2193 = vsub.f32 %v1011, %v2038
  %v2194 = vsub.f32 %v1015, %v2039
  %v2195 = vsub.f32 %v1017, %v2039
  %v2196 = vsub.f32 %v1021, %v2040
  %v2197 = vsub.f32 %v1023, %v2040
  %v2198 = vsub.f32 %v1027, %v2041
  %v2199 = vsub.f32 %v1029, %v2041
  %v2200 = vsub.f32 %v1033, %v2042
  %v2201 = vsub.f32 %v1035, %v2042
  %v2202 = vsub.f32 %v1039, %v2043
  %v2203 = vsub.f32 %v1041, %v2043
  %v2204 = vsub.f32 %v1045, %v2044
  %v2205 = vsub.f32 %v1047, %v2044
  %v2206 = vsub.f32 %v1051, %v2045
  %v2207 = vsub.f32 %v1053, %v2045
  %v2208 = vsub.f32 %v1057, %v2046
  %v2209 = vsub.f32 %v1059, %v2046
  %v2210 = vsub.f32 %v1063, %v2047
  %v2211 = vsub.f32 %v1065, %v2047
  %v2212 = vsub.f32 %v1069, %v2048
  %v2213 = vsub.f32 %v1071, %v2048
  %v2214 = vsub.f32 %v1075, %v2049
  %v2215 = vsub.f32 %v1077, %v2049
  %v2216 = vsub.f32 %v1081, %v2050
  %v2217 = vsub.f32 %v1083, %v2050
  %v2218 = vsub.f32 %v1087, %v2051
  %v2219 = vsub.f32 %v1089, %v2051
  %v2220 = vsub.f32 %v1093, %v2052
  %v2221 = vsub.f32 %v1095, %v2052
  %v2222 = vsub.f32 %v1099, %v2053
  %v2223 = vsub.f32 %v1101, %v2053
  %v2224 = vsub.f32 %v1105, %v2054
  %v2225 = vsub.f32 %v1107, %v2054
  %v2226 = vsub.f32 %v1111, %v2055
  %v2227 = vsub.f32 %v1113, %v2055
  %v2228 = vsub.f32 %v1117, %v2056
  %v2229 = vsub.f32 %v1119, %v2056
  %v2230 = vsub.f32 %v1123, %v2057
  %v2231 = vsub.f32 %v1125, %v2057
  %v2232 = vsub.f32 %v1129, %v2058
  %v2233 = vsub.f32 %v1131, %v2058
  %v2234 = vsub.f32 %v1135, %v2059
  %v2235 = vsub.f32 %v1137, %v2059
  %v2236 = vsub.f32 %v1141, %v2060
  %v2237 = vsub.f32 %v1143, %v2060
  %v2238 = vsub.f32 %v1147, %v2061
  %v2239 = vsub.f32 %v1149, %v2061
  %v2240 = vsub.f32 %v1153, %v2062
  %v2241 = vsub.f32 %v1155, %v2062
  %v2242 = vsub.f32 %v1159, %v2063
  %v2243 = vsub.f32 %v1161, %v2063
  %v2244 = vsub.f32 %v1165, %v2064
  %v2245 = vsub.f32 %v1167, %v2064
  %v2246 = vsub.f32 %v1171, %v2065
  %v2247 = vsub.f32 %v1173, %v2065
  %v2248 = vsub.f32 %v1177, %v2066
  %v2249 = vsub.f32 %v1179, %v2066
  %v2250 = vsub.f32 %v1183, %v2067
  %v2251 = vsub.f32 %v1185, %v2067
  %v2252 = vsub.f32 %v1189, %v2068
  %v2253 = vsub.f32 %v1191, %v2068
  %v2254 = vsub.f32 %v1195, %v2069
  %v2255 = vsub.f32 %v1197, %v2069
  %v2256 = vsub.f32 %v1201, %v2070
  %v2257 = vsub.f32 %v1203, %v2070
  %v2258 = vsub.f32 %v1207, %v2071
  %v2259 = vsub.f32 %v1209, %v2071
  %v2260 = vsub.f32 %v1213, %v2072
  %v2261 = vsub.f32 %v1215, %v2072
  %v2262 = vsub.f32 %v1219, %v2073
  %v2263 = vsub.f32 %v1221, %v2073
  %v2264 = vsub.f32 %v1225, %v2074
  %v2265 = vsub.f32 %v1227, %v2074
  %v2266 = vsub.f32 %v1231, %v2075
  %v2267 = vsub.f32 %v1233, %v2075
  %v2268 = vsub.f32 %v1237, %v2076
  %v2269 = vsub.f32 %v1239, %v2076
  %v2270 = vsub.f32 %v1243, %v2077
  %v2271 = vsub.f32 %v1245, %v2077
  %v2272 = vsub.f32 %v1249, %v2078
  %v2273 = vsub.f32 %v1251, %v2078
  %v2274 = vsub.f32 %v1255, %v2079
  %v2275 = vsub.f32 %v1257, %v2079
  %v2276 = vsub.f32 %v1261, %v2080
  %v2277 = vsub.f32 %v1263, %v2080
  %v2278 = vsub.f32 %v1267, %v2081
  %v2279 = vsub.f32 %v1269, %v2081
  %v2280 = vsub.f32 %v1273, %v2082
  %v2281 = vsub.f32 %v1275, %v2082
  %v2282 = vsub.f32 %v1279, %v2083
  %v2283 = vsub.f32 %v1281, %v2083
  %v2284 = vsub.f32 %v1285, %v2084
  %v2285 = vsub.f32 %v1287, %v2084
  %v2286 = vsub.f32 %v1291, %v2085
  %v2287 = vsub.f32 %v1293, %v2085
  %v2288 = vsub.f32 %v1297, %v2086
  %v2289 = vsub.f32 %v1299, %v2086
  %v2290 = vsub.f32 %v1303, %v2087
  %v2291 = vsub.f32 %v1305, %v2087
  %v2292 = vsub.f32 %v1309, %v2088
  %v2293 = vsub.f32 %v1311, %v2088
  %v2294 = vsub.f32 %v1315, %v2089
  %v2295 = vsub.f32 %v1317, %v2089
  %v2296 = vsub.f32 %v1321, %v2090
  %v2297 = vsub.f32 %v1323, %v2090
  %v2298 = vsub.f32 %v1327, %v2091
  %v2299 = vsub.f32 %v1329, %v2091
  %v2300 = vsub.f32 %v1333, %v2092
  %v2301 = vsub.f32 %v1335, %v2092
  %v2302 = vsub.f32 %v1339, %v2093
  %v2303 = vsub.f32 %v1341, %v2093
  %v2304 = vsub.f32 %v1345, %v2094
  %v2305 = vsub.f32 %v1347, %v2094
  %v2306 = vsub.f32 %v1351, %v2095
  %v2307 = vsub.f32 %v1353, %v2095
  %v2308 = vsub.f32 %v1357, %v2096
  %v2309 = vsub.f32 %v1359, %v2096
  %v2310 = vsub.f32 %v1363, %v2097
  %v2311 = vsub.f32 %v1365, %v2097
  %v2312 = vsub.f32 %v1369, %v2098
  %v2313 = vsub.f32 %v1371, %v2098
  %v2314 = vsub.f32 %v1375, %v2099
  %v2315 = vsub.f32 %v1377, %v2099
  %v2316 = vsub.f32 %v1381, %v2100
  %v2317 = vsub.f32 %v1383, %v2100
  %v2318 = vsub.f32 %v1387, %v2101
  %v2319 = vsub.f32 %v1389, %v2101
  %v2320 = vsub.f32 %v1393, %v2102
  %v2321 = vsub.f32 %v1395, %v2102
  %v2322 = vsub.f32 %v1399, %v2103
  %v2323 = vsub.f32 %v1401, %v2103
  %v2324 = vsub.f32 %v1405, %v2104
  %v2325 = vsub.f32 %v1407, %v2104
  %v2326 = vsub.f32 %v1411, %v2105
  %v2327 = vsub.f32 %v1413, %v2105
  %v2328 = vsub.f32 %v1417, %v2106
  %v2329 = vsub.f32 %v1419, %v2106
  %v2330 = vsub.f32 %v1423, %v2107
  %v2331 = vsub.f32 %v1425, %v2107
  %v2332 = vsub.f32 %v1429, %v2108
  %v2333 = vsub.f32 %v1431, %v2108
  %v2334 = vsub.f32 %v1435, %v2109
  %v2335 = vsub.f32 %v1437, %v2109
  %v2336 = vsub.f32 %v1441, %v2110
  %v2337 = vsub.f32 %v1443, %v2110
  %v2338 = vsub.f32 %v1447, %v2111
  %v2339 = vsub.f32 %v1449, %v2111
  %v2340 = vsub.f32 %v1453, %v2112
  %v2341 = vsub.f32 %v1455, %v2112
  %v2342 = vsub.f32 %v1459, %v2113
  %v2343 = vsub.f32 %v1461, %v2113
  %v2344 = vsub.f32 %v1465, %v2114
  %v2345 = vsub.f32 %v1467, %v2114
  %v2346 = vsub.f32 %v1471, %v2115
  %v2347 = vsub.f32 %v1473, %v2115
  %v2348 = vsub.f32 %v1477, %v2116
  %v2349 = vsub.f32 %v1479, %v2116
  %v2350 = vsub.f32 %v1483, %v2117
  %v2351 = vsub.f32 %v1485, %v2117
  %v2352 = vsub.f32 %v1489, %v2118
  %v2353 = vsub.f32 %v1491, %v2118
  %v2354 = vsub.f32 %v1495, %v2119
  %v2355 = vsub.f32 %v1497, %v2119
  %v2356 = vsub.f32 %v1501, %v2120
  %v2357 = vsub.f32 %v1503, %v2120
  %v2358 = vsub.f32 %v1507, %v2121
  %v2359 = vsub.f32 %v1509, %v2121
  %v2360 = vsub.f32 %v1513, %v2122
  %v2361 = vsub.f32 %v1515, %v2122
  %v2362 = vsub.f32 %v1519, %v2123
  %v2363 = vsub.f32 %v1521, %v2123
  %v2364 = vmul.f32 %v2124, %v2124
  %v2365 = vmul.f32 %v2125, %v2125
  %v2366 = vmul.f32 %v2126, %v2126
  %v2367 = vmul.f32 %v2127, %v2127
  %v2368 = vmul.f32 %v2128, %v2128
  %v2369 = vmul.f32 %v2129, %v2129
  %v2370 = vmul.f32 %v2130, %v2130
  %v2371 = vmul.f32 %v2131, %v2131
  %v2372 = vmul.f32 %v2132, %v2132
  %v2373 = vmul.f32 %v2133, %v2133
  %v2374 = vmul.f32 %v2134, %v2134
  %v2375 = vmul.f32 %v2135, %v2135
  %v2376 = vmul.f32 %v2136, %v2136
  %v2377 = vmul.f32 %v2137, %v2137
  %v2378 = vmul.f32 %v2138, %v2138
  %v2379 = vmul.f32 %v2139, %v2139
  %v2380 = vmul.f32 %v2140, %v2140
  %v2381 = vmul.f32 %v2141, %v2141
  %v2382 = vmul.f32 %v2142, %v2142
  %v2383 = vmul.f32 %v2143, %v2143
  %v2384 = vmul.f32 %v2144, %v2144
  %v2385 = vmul.f32 %v2145, %v2145
  %v2386 = vmul.f32 %v2146, %v2146
  %v2387 = vmul.f32 %v2147, %v2147
  %v2388 = vmul.f32 %v2148, %v2148
  %v2389 = vmul.f32 %v2149, %v2149
  %v2390 = vmul.f32 %v2150, %v2150
  %v2391 = vmul.f32 %v2151, %v2151
  %v2392 = vmul.f32 %v2152, %v2152
  %v2393 = vmul.f32 %v2153, %v2153
  %v2394 = vmul.f32 %v2154, %v2154
  %v2395 = vmul.f32 %v2155, %v2155
  %v2396 = vmul.f32 %v2156, %v2156
  %v2397 = vmul.f32 %v2157, %v2157
  %v2398 = vmul.f32 %v2158, %v2158
  %v2399 = vmul.f32 %v2159, %v2159
  %v2400 = vmul.f32 %v2160, %v2160
  %v2401 = vmul.f32 %v2161, %v2161
  %v2402 = vmul.f32 %v2162, %v2162
  %v2403 = vmul.f32 %v2163, %v2163
  %v2404 = vmul.f32 %v2164, %v2164
  %v2405 = vmul.f32 %v2165, %v2165
  %v2406 = vmul.f32 %v2166, %v2166
  %v2407 = vmul.f32 %v2167, %v2167
  %v2408 = vmul.f32 %v2168, %v2168
  %v2409 = vmul.f32 %v2169, %v2169
  %v2410 = vmul.f32 %v2170, %v2170
  %v2411 = vmul.f32 %v2171, %v2171
  %v2412 = vmul.f32 %v2172, %v2172
  %v2413 = vmul.f32 %v2173, %v2173
  %v2414 = vmul.f32 %v2174, %v2174
  %v2415 = vmul.f32 %v2175, %v2175
  %v2416 = vmul.f32 %v2176, %v2176
  %v2417 = vmul.f32 %v2177, %v2177
  %v2418 = vmul.f32 %v2178, %v2178
  %v2419 = vmul.f32 %v2179, %v2179
  %v2420 = vmul.f32 %v2180, %v2180
  %v2421 = vmul.f32 %v2181, %v2181
  %v2422 = vmul.f32 %v2182, %v2182
  %v2423 = vmul.f32 %v2183, %v2183
  %v2424 = vmul.f32 %v2184, %v2184
  %v2425 = vmul.f32 %v2185, %v2185
  %v2426 = vmul.f32 %v2186, %v2186
  %v2427 = vmul.f32 %v2187, %v2187
  %v2428 = vmul.f32 %v2188, %v2188
  %v2429 = vmul.f32 %v2189, %v2189
  %v2430 = vmul.f32 %v2190, %v2190
  %v2431 = vmul.f32 %v2191, %v2191
  %v2432 = vmul.f32 %v2192, %v2192
  %v2433 = vmul.f32 %v2193, %v2193
  %v2434 = vmul.f32 %v2194, %v2194
  %v2435 = vmul.f32 %v2195, %v2195
  %v2436 = vmul.f32 %v2196, %v2196
  %v2437 = vmul.f32 %v2197, %v2197
  %v2438 = vmul.f32 %v2198, %v2198
  %v2439 = vmul.f32 %v2199, %v2199
  %v2440 = vmul.f32 %v2200, %v2200
  %v2441 = vmul.f32 %v2201, %v2201
  %v2442 = vmul.f32 %v2202, %v2202
  %v2443 = vmul.f32 %v2203, %v2203
  %v2444 = vmul.f32 %v2204, %v2204
  %v2445 = vmul.f32 %v2205, %v2205
  %v2446 = vmul.f32 %v2206, %v2206
  %v2447 = vmul.f32 %v2207, %v2207
  %v2448 = vmul.f32 %v2208, %v2208
  %v2449 = vmul.f32 %v2209, %v2209
  %v2450 = vmul.f32 %v2210, %v2210
  %v2451 = vmul.f32 %v2211, %v2211
  %v2452 = vmul.f32 %v2212, %v2212
  %v2453 = vmul.f32 %v2213, %v2213
  %v2454 = vmul.f32 %v2214, %v2214
  %v2455 = vmul.f32 %v2215, %v2215
  %v2456 = vmul.f32 %v2216, %v2216
  %v2457 = vmul.f32 %v2217, %v2217
  %v2458 = vmul.f32 %v2218, %v2218
  %v2459 = vmul.f32 %v2219, %v2219
  %v2460 = vmul.f32 %v2220, %v2220
  %v2461 = vmul.f32 %v2221, %v2221
  %v2462 = vmul.f32 %v2222, %v2222
  %v2463 = vmul.f32 %v2223, %v2223
  %v2464 = vmul.f32 %v2224, %v2224
  %v2465 = vmul.f32 %v2225, %v2225
  %v2466 = vmul.f32 %v2226, %v2226
  %v2467 = vmul.f32 %v2227, %v2227
  %v2468 = vmul.f32 %v2228, %v2228
  %v2469 = vmul.f32 %v2229, %v2229
  %v2470 = vmul.f32 %v2230, %v2230
  %v2471 = vmul.f32 %v2231, %v2231
  %v2472 = vmul.f32 %v2232, %v2232
  %v2473 = vmul.f32 %v2233, %v2233
  %v2474 = vmul.f32 %v2234, %v2234
  %v2475 = vmul.f32 %v2235, %v2235
  %v2476 = vmul.f32 %v2236, %v2236
  %v2477 = vmul.f32 %v2237, %v2237
  %v2478 = vmul.f32 %v2238, %v2238
  %v2479 = vmul.f32 %v2239, %v2239
  %v2480 = vmul.f32 %v2240, %v2240
  %v2481 = vmul.f32 %v2241, %v2241
  %v2482 = vmul.f32 %v2242, %v2242
  %v2483 = vmul.f32 %v2243, %v2243
  %v2484 = vmul.f32 %v2244, %v2244
  %v2485 = vmul.f32 %v2245, %v2245
  %v2486 = vmul.f32 %v2246, %v2246
  %v2487 = vmul.f32 %v2247, %v2247
  %v2488 = vmul.f32 %v2248, %v2248
  %v2489 = vmul.f32 %v2249, %v2249
  %v2490 = vmul.f32 %v2250, %v2250
  %v2491 = vmul.f32 %v2251, %v2251
  %v2492 = vmul.f32 %v2252, %v2252
  %v2493 = vmul.f32 %v2253, %v2253
  %v2494 = vmul.f32 %v2254, %v2254
  %v2495 = vmul.f32 %v2255, %v2255
  %v2496 = vmul.f32 %v2256, %v2256
  %v2497 = vmul.f32 %v2257, %v2257
  %v2498 = vmul.f32 %v2258, %v2258
  %v2499 = vmul.f32 %v2259, %v2259
  %v2500 = vmul.f32 %v2260, %v2260
  %v2501 = vmul.f32 %v2261, %v2261
  %v2502 = vmul.f32 %v2262, %v2262
  %v2503 = vmul.f32 %v2263, %v2263
  %v2504 = vmul.f32 %v2264, %v2264
  %v2505 = vmul.f32 %v2265, %v2265
  %v2506 = vmul.f32 %v2266, %v2266
  %v2507 = vmul.f32 %v2267, %v2267
  %v2508 = vmul.f32 %v2268, %v2268
  %v2509 = vmul.f32 %v2269, %v2269
  %v2510 = vmul.f32 %v2270, %v2270
  %v2511 = vmul.f32 %v2271, %v2271
  %v2512 = vmul.f32 %v2272, %v2272
  %v2513 = vmul.f32 %v2273, %v2273
  %v2514 = vmul.f32 %v2274, %v2274
  %v2515 = vmul.f32 %v2275, %v2275
  %v2516 = vmul.f32 %v2276, %v2276
  %v2517 = vmul.f32 %v2277, %v2277
  %v2518 = vmul.f32 %v2278, %v2278
  %v2519 = vmul.f32 %v2279, %v2279
  %v2520 = vmul.f32 %v2280, %v2280
  %v2521 = vmul.f32 %v2281, %v2281
  %v2522 = vmul.f32 %v2282, %v2282
  %v2523 = vmul.f32 %v2283, %v2283
  %v2524 = vmul.f32 %v2284, %v2284
  %v2525 = vmul.f32 %v2285, %v2285
  %v2526 = vmul.f32 %v2286, %v2286
  %v2527 = vmul.f32 %v2287, %v2287
  %v2528 = vmul.f32 %v2288, %v2288
  %v2529 = vmul.f32 %v2289, %v2289
  %v2530 = vmul.f32 %v2290, %v2290
  %v2531 = vmul.f32 %v2291, %v2291
  %v2532 = vmul.f32 %v2292, %v2292
  %v2533 = vmul.f32 %v2293, %v2293
  %v2534 = vmul.f32 %v2294, %v2294
  %v2535 = vmul.f32 %v2295, %v2295
  %v2536 = vmul.f32 %v2296, %v2296
  %v2537 = vmul.f32 %v2297, %v2297
  %v2538 = vmul.f32 %v2298, %v2298
  %v2539 = vmul.f32 %v2299, %v2299
  %v2540 = vmul.f32 %v2300, %v2300
  %v2541 = vmul.f32 %v2301, %v2301
  %v2542 = vmul.f32 %v2302, %v2302
  %v2543 = vmul.f32 %v2303, %v2303
  %v2544 = vmul.f32 %v2304, %v2304
  %v2545 = vmul.f32 %v2305, %v2305
  %v2546 = vmul.f32 %v2306, %v2306
  %v2547 = vmul.f32 %v2307, %v2307
  %v2548 = vmul.f32 %v2308, %v2308
  %v2549 = vmul.f32 %v2309, %v2309
  %v2550 = vmul.f32 %v2310, %v2310
  %v2551 = vmul.f32 %v2311, %v2311
  %v2552 = vmul.f32 %v2312, %v2312
  %v2553 = vmul.f32 %v2313, %v2313
  %v2554 = vmul.f32 %v2314, %v2314
  %v2555 = vmul.f32 %v2315, %v2315
  %v2556 = vmul.f32 %v2316, %v2316
  %v2557 = vmul.f32 %v2317, %v2317
  %v2558 = vmul.f32 %v2318, %v2318
  %v2559 = vmul.f32 %v2319, %v2319
  %v2560 = vmul.f32 %v2320, %v2320
  %v2561 = vmul.f32 %v2321, %v2321
  %v2562 = vmul.f32 %v2322, %v2322
  %v2563 = vmul.f32 %v2323, %v2323
  %v2564 = vmul.f32 %v2324, %v2324
  %v2565 = vmul.f32 %v2325, %v2325
  %v2566 = vmul.f32 %v2326, %v2326
  %v2567 = vmul.f32 %v2327, %v2327
  %v2568 = vmul.f32 %v2328, %v2328
  %v2569 = vmul.f32 %v2329, %v2329
  %v2570 = vmul.f32 %v2330, %v2330
  %v2571 = vmul.f32 %v2331, %v2331
  %v2572 = vmul.f32 %v2332, %v2332
  %v2573 = vmul.f32 %v2333, %v2333
  %v2574 = vmul.f32 %v2334, %v2334
  %v2575 = vmul.f32 %v2335, %v2335
  %v2576 = vmul.f32 %v2336, %v2336
  %v2577 = vmul.f32 %v2337, %v2337
  %v2578 = vmul.f32 %v2338, %v2338
  %v2579 = vmul.f32 %v2339, %v2339
  %v2580 = vmul.f32 %v2340, %v2340
  %v2581 = vmul.f32 %v2341, %v2341
  %v2582 = vmul.f32 %v2342, %v2342
  %v2583 = vmul.f32 %v2343, %v2343
  %v2584 = vmul.f32 %v2344, %v2344
  %v2585 = vmul.f32 %v2345, %v2345
  %v2586 = vmul.f32 %v2346, %v2346
  %v2587 = vmul.f32 %v2347, %v2347
  %v2588 = vmul.f32 %v2348, %v2348
  %v2589 = vmul.f32 %v2349, %v2349
  %v2590 = vmul.f32 %v2350, %v2350
  %v2591 = vmul.f32 %v2351, %v2351
  %v2592 = vmul.f32 %v2352, %v2352
  %v2593 = vmul.f32 %v2353, %v2353
  %v2594 = vmul.f32 %v2354, %v2354
  %v2595 = vmul.f32 %v2355, %v2355
  %v2596 = vmul.f32 %v2356, %v2356
  %v2597 = vmul.f32 %v2357, %v2357
  %v2598 = vmul.f32 %v2358, %v2358
  %v2599 = vmul.f32 %v2359, %v2359
  %v2600 = vmul.f32 %v2360, %v2360
  %v2601 = vmul.f32 %v2361, %v2361
  %v2602 = vmul.f32 %v2362, %v2362
  %v2603 = vmul.f32 %v2363, %v2363
  %v2604 = vsel %vm1523, %v2365, 0.0
  %v2605 = vadd.f32 %v2364, %v2604
  %2606 = vadd.xlane.f32.xlu0 %v2605
  %v2607 = vpop.xlane.xlu0 %2606
  %v2608 = vsel %vm1523, %v2367, 0.0
  %v2609 = vadd.f32 %v2366, %v2608
  %2610 = vadd.xlane.f32.xlu0 %v2609
  %v2611 = vpop.xlane.xlu0 %2610
  %v2612 = vsel %vm1523, %v2369, 0.0
  %v2613 = vadd.f32 %v2368, %v2612
  %2614 = vadd.xlane.f32.xlu0 %v2613
  %v2615 = vpop.xlane.xlu0 %2614
  %v2616 = vsel %vm1523, %v2371, 0.0
  %v2617 = vadd.f32 %v2370, %v2616
  %2618 = vadd.xlane.f32.xlu0 %v2617
  %v2619 = vpop.xlane.xlu0 %2618
  %v2620 = vsel %vm1523, %v2373, 0.0
  %v2621 = vadd.f32 %v2372, %v2620
  %2622 = vadd.xlane.f32.xlu0 %v2621
  %v2623 = vpop.xlane.xlu0 %2622
  %v2624 = vsel %vm1523, %v2375, 0.0
  %v2625 = vadd.f32 %v2374, %v2624
  %2626 = vadd.xlane.f32.xlu0 %v2625
  %v2627 = vpop.xlane.xlu0 %2626
  %v2628 = vsel %vm1523, %v2377, 0.0
  %v2629 = vadd.f32 %v2376, %v2628
  %2630 = vadd.xlane.f32.xlu0 %v2629
  %v2631 = vpop.xlane.xlu0 %2630
  %v2632 = vsel %vm1523, %v2379, 0.0
  %v2633 = vadd.f32 %v2378, %v2632
  %2634 = vadd.xlane.f32.xlu0 %v2633
  %v2635 = vpop.xlane.xlu0 %2634
  %v2636 = vsel %vm1523, %v2381, 0.0
  %v2637 = vadd.f32 %v2380, %v2636
  %2638 = vadd.xlane.f32.xlu0 %v2637
  %v2639 = vpop.xlane.xlu0 %2638
  %v2640 = vsel %vm1523, %v2383, 0.0
  %v2641 = vadd.f32 %v2382, %v2640
  %2642 = vadd.xlane.f32.xlu0 %v2641
  %v2643 = vpop.xlane.xlu0 %2642
  %v2644 = vsel %vm1523, %v2385, 0.0
  %v2645 = vadd.f32 %v2384, %v2644
  %2646 = vadd.xlane.f32.xlu0 %v2645
  %v2647 = vpop.xlane.xlu0 %2646
  %v2648 = vsel %vm1523, %v2387, 0.0
  %v2649 = vadd.f32 %v2386, %v2648
  %2650 = vadd.xlane.f32.xlu0 %v2649
  %v2651 = vpop.xlane.xlu0 %2650
  %v2652 = vsel %vm1523, %v2389, 0.0
  %v2653 = vadd.f32 %v2388, %v2652
  %2654 = vadd.xlane.f32.xlu0 %v2653
  %v2655 = vpop.xlane.xlu0 %2654
  %v2656 = vsel %vm1523, %v2391, 0.0
  %v2657 = vadd.f32 %v2390, %v2656
  %2658 = vadd.xlane.f32.xlu0 %v2657
  %v2659 = vpop.xlane.xlu0 %2658
  %v2660 = vsel %vm1523, %v2393, 0.0
  %v2661 = vadd.f32 %v2392, %v2660
  %2662 = vadd.xlane.f32.xlu0 %v2661
  %v2663 = vpop.xlane.xlu0 %2662
  %v2664 = vsel %vm1523, %v2395, 0.0
  %v2665 = vadd.f32 %v2394, %v2664
  %2666 = vadd.xlane.f32.xlu0 %v2665
  %v2667 = vpop.xlane.xlu0 %2666
  %v2668 = vsel %vm1523, %v2397, 0.0
  %v2669 = vadd.f32 %v2396, %v2668
  %2670 = vadd.xlane.f32.xlu0 %v2669
  %v2671 = vpop.xlane.xlu0 %2670
  %v2672 = vsel %vm1523, %v2399, 0.0
  %v2673 = vadd.f32 %v2398, %v2672
  %2674 = vadd.xlane.f32.xlu0 %v2673
  %v2675 = vpop.xlane.xlu0 %2674
  %v2676 = vsel %vm1523, %v2401, 0.0
  %v2677 = vadd.f32 %v2400, %v2676
  %2678 = vadd.xlane.f32.xlu0 %v2677
  %v2679 = vpop.xlane.xlu0 %2678
  %v2680 = vsel %vm1523, %v2403, 0.0
  %v2681 = vadd.f32 %v2402, %v2680
  %2682 = vadd.xlane.f32.xlu0 %v2681
  %v2683 = vpop.xlane.xlu0 %2682
  %v2684 = vsel %vm1523, %v2405, 0.0
  %v2685 = vadd.f32 %v2404, %v2684
  %2686 = vadd.xlane.f32.xlu0 %v2685
  %v2687 = vpop.xlane.xlu0 %2686
  %v2688 = vsel %vm1523, %v2407, 0.0
  %v2689 = vadd.f32 %v2406, %v2688
  %2690 = vadd.xlane.f32.xlu0 %v2689
  %v2691 = vpop.xlane.xlu0 %2690
  %v2692 = vsel %vm1523, %v2409, 0.0
  %v2693 = vadd.f32 %v2408, %v2692
  %2694 = vadd.xlane.f32.xlu0 %v2693
  %v2695 = vpop.xlane.xlu0 %2694
  %v2696 = vsel %vm1523, %v2411, 0.0
  %v2697 = vadd.f32 %v2410, %v2696
  %2698 = vadd.xlane.f32.xlu0 %v2697
  %v2699 = vpop.xlane.xlu0 %2698
  %v2700 = vsel %vm1523, %v2413, 0.0
  %v2701 = vadd.f32 %v2412, %v2700
  %2702 = vadd.xlane.f32.xlu0 %v2701
  %v2703 = vpop.xlane.xlu0 %2702
  %v2704 = vsel %vm1523, %v2415, 0.0
  %v2705 = vadd.f32 %v2414, %v2704
  %2706 = vadd.xlane.f32.xlu0 %v2705
  %v2707 = vpop.xlane.xlu0 %2706
  %v2708 = vsel %vm1523, %v2417, 0.0
  %v2709 = vadd.f32 %v2416, %v2708
  %2710 = vadd.xlane.f32.xlu0 %v2709
  %v2711 = vpop.xlane.xlu0 %2710
  %v2712 = vsel %vm1523, %v2419, 0.0
  %v2713 = vadd.f32 %v2418, %v2712
  %2714 = vadd.xlane.f32.xlu0 %v2713
  %v2715 = vpop.xlane.xlu0 %2714
  %v2716 = vsel %vm1523, %v2421, 0.0
  %v2717 = vadd.f32 %v2420, %v2716
  %2718 = vadd.xlane.f32.xlu0 %v2717
  %v2719 = vpop.xlane.xlu0 %2718
  %v2720 = vsel %vm1523, %v2423, 0.0
  %v2721 = vadd.f32 %v2422, %v2720
  %2722 = vadd.xlane.f32.xlu0 %v2721
  %v2723 = vpop.xlane.xlu0 %2722
  %v2724 = vsel %vm1523, %v2425, 0.0
  %v2725 = vadd.f32 %v2424, %v2724
  %2726 = vadd.xlane.f32.xlu0 %v2725
  %v2727 = vpop.xlane.xlu0 %2726
  %v2728 = vsel %vm1523, %v2427, 0.0
  %v2729 = vadd.f32 %v2426, %v2728
  %2730 = vadd.xlane.f32.xlu0 %v2729
  %v2731 = vpop.xlane.xlu0 %2730
  %v2732 = vsel %vm1523, %v2429, 0.0
  %v2733 = vadd.f32 %v2428, %v2732
  %2734 = vadd.xlane.f32.xlu0 %v2733
  %v2735 = vpop.xlane.xlu0 %2734
  %v2736 = vsel %vm1523, %v2431, 0.0
  %v2737 = vadd.f32 %v2430, %v2736
  %2738 = vadd.xlane.f32.xlu0 %v2737
  %v2739 = vpop.xlane.xlu0 %2738
  %v2740 = vsel %vm1523, %v2433, 0.0
  %v2741 = vadd.f32 %v2432, %v2740
  %2742 = vadd.xlane.f32.xlu0 %v2741
  %v2743 = vpop.xlane.xlu0 %2742
  %v2744 = vsel %vm1523, %v2435, 0.0
  %v2745 = vadd.f32 %v2434, %v2744
  %2746 = vadd.xlane.f32.xlu0 %v2745
  %v2747 = vpop.xlane.xlu0 %2746
  %v2748 = vsel %vm1523, %v2437, 0.0
  %v2749 = vadd.f32 %v2436, %v2748
  %2750 = vadd.xlane.f32.xlu0 %v2749
  %v2751 = vpop.xlane.xlu0 %2750
  %v2752 = vsel %vm1523, %v2439, 0.0
  %v2753 = vadd.f32 %v2438, %v2752
  %2754 = vadd.xlane.f32.xlu0 %v2753
  %v2755 = vpop.xlane.xlu0 %2754
  %v2756 = vsel %vm1523, %v2441, 0.0
  %v2757 = vadd.f32 %v2440, %v2756
  %2758 = vadd.xlane.f32.xlu0 %v2757
  %v2759 = vpop.xlane.xlu0 %2758
  %v2760 = vsel %vm1523, %v2443, 0.0
  %v2761 = vadd.f32 %v2442, %v2760
  %2762 = vadd.xlane.f32.xlu0 %v2761
  %v2763 = vpop.xlane.xlu0 %2762
  %v2764 = vsel %vm1523, %v2445, 0.0
  %v2765 = vadd.f32 %v2444, %v2764
  %2766 = vadd.xlane.f32.xlu0 %v2765
  %v2767 = vpop.xlane.xlu0 %2766
  %v2768 = vsel %vm1523, %v2447, 0.0
  %v2769 = vadd.f32 %v2446, %v2768
  %2770 = vadd.xlane.f32.xlu0 %v2769
  %v2771 = vpop.xlane.xlu0 %2770
  %v2772 = vsel %vm1523, %v2449, 0.0
  %v2773 = vadd.f32 %v2448, %v2772
  %2774 = vadd.xlane.f32.xlu0 %v2773
  %v2775 = vpop.xlane.xlu0 %2774
  %v2776 = vsel %vm1523, %v2451, 0.0
  %v2777 = vadd.f32 %v2450, %v2776
  %2778 = vadd.xlane.f32.xlu0 %v2777
  %v2779 = vpop.xlane.xlu0 %2778
  %v2780 = vsel %vm1523, %v2453, 0.0
  %v2781 = vadd.f32 %v2452, %v2780
  %2782 = vadd.xlane.f32.xlu0 %v2781
  %v2783 = vpop.xlane.xlu0 %2782
  %v2784 = vsel %vm1523, %v2455, 0.0
  %v2785 = vadd.f32 %v2454, %v2784
  %2786 = vadd.xlane.f32.xlu0 %v2785
  %v2787 = vpop.xlane.xlu0 %2786
  %v2788 = vsel %vm1523, %v2457, 0.0
  %v2789 = vadd.f32 %v2456, %v2788
  %2790 = vadd.xlane.f32.xlu0 %v2789
  %v2791 = vpop.xlane.xlu0 %2790
  %v2792 = vsel %vm1523, %v2459, 0.0
  %v2793 = vadd.f32 %v2458, %v2792
  %2794 = vadd.xlane.f32.xlu0 %v2793
  %v2795 = vpop.xlane.xlu0 %2794
  %v2796 = vsel %vm1523, %v2461, 0.0
  %v2797 = vadd.f32 %v2460, %v2796
  %2798 = vadd.xlane.f32.xlu0 %v2797
  %v2799 = vpop.xlane.xlu0 %2798
  %v2800 = vsel %vm1523, %v2463, 0.0
  %v2801 = vadd.f32 %v2462, %v2800
  %2802 = vadd.xlane.f32.xlu0 %v2801
  %v2803 = vpop.xlane.xlu0 %2802
  %v2804 = vsel %vm1523, %v2465, 0.0
  %v2805 = vadd.f32 %v2464, %v2804
  %2806 = vadd.xlane.f32.xlu0 %v2805
  %v2807 = vpop.xlane.xlu0 %2806
  %v2808 = vsel %vm1523, %v2467, 0.0
  %v2809 = vadd.f32 %v2466, %v2808
  %2810 = vadd.xlane.f32.xlu0 %v2809
  %v2811 = vpop.xlane.xlu0 %2810
  %v2812 = vsel %vm1523, %v2469, 0.0
  %v2813 = vadd.f32 %v2468, %v2812
  %2814 = vadd.xlane.f32.xlu0 %v2813
  %v2815 = vpop.xlane.xlu0 %2814
  %v2816 = vsel %vm1523, %v2471, 0.0
  %v2817 = vadd.f32 %v2470, %v2816
  %2818 = vadd.xlane.f32.xlu0 %v2817
  %v2819 = vpop.xlane.xlu0 %2818
  %v2820 = vsel %vm1523, %v2473, 0.0
  %v2821 = vadd.f32 %v2472, %v2820
  %2822 = vadd.xlane.f32.xlu0 %v2821
  %v2823 = vpop.xlane.xlu0 %2822
  %v2824 = vsel %vm1523, %v2475, 0.0
  %v2825 = vadd.f32 %v2474, %v2824
  %2826 = vadd.xlane.f32.xlu0 %v2825
  %v2827 = vpop.xlane.xlu0 %2826
  %v2828 = vsel %vm1523, %v2477, 0.0
  %v2829 = vadd.f32 %v2476, %v2828
  %2830 = vadd.xlane.f32.xlu0 %v2829
  %v2831 = vpop.xlane.xlu0 %2830
  %v2832 = vsel %vm1523, %v2479, 0.0
  %v2833 = vadd.f32 %v2478, %v2832
  %2834 = vadd.xlane.f32.xlu0 %v2833
  %v2835 = vpop.xlane.xlu0 %2834
  %v2836 = vsel %vm1523, %v2481, 0.0
  %v2837 = vadd.f32 %v2480, %v2836
  %2838 = vadd.xlane.f32.xlu0 %v2837
  %v2839 = vpop.xlane.xlu0 %2838
  %v2840 = vsel %vm1523, %v2483, 0.0
  %v2841 = vadd.f32 %v2482, %v2840
  %2842 = vadd.xlane.f32.xlu0 %v2841
  %v2843 = vpop.xlane.xlu0 %2842
  %v2844 = vsel %vm1523, %v2485, 0.0
  %v2845 = vadd.f32 %v2484, %v2844
  %2846 = vadd.xlane.f32.xlu0 %v2845
  %v2847 = vpop.xlane.xlu0 %2846
  %v2848 = vsel %vm1523, %v2487, 0.0
  %v2849 = vadd.f32 %v2486, %v2848
  %2850 = vadd.xlane.f32.xlu0 %v2849
  %v2851 = vpop.xlane.xlu0 %2850
  %v2852 = vsel %vm1523, %v2489, 0.0
  %v2853 = vadd.f32 %v2488, %v2852
  %2854 = vadd.xlane.f32.xlu0 %v2853
  %v2855 = vpop.xlane.xlu0 %2854
  %v2856 = vsel %vm1523, %v2491, 0.0
  %v2857 = vadd.f32 %v2490, %v2856
  %2858 = vadd.xlane.f32.xlu0 %v2857
  %v2859 = vpop.xlane.xlu0 %2858
  %v2860 = vsel %vm1523, %v2493, 0.0
  %v2861 = vadd.f32 %v2492, %v2860
  %2862 = vadd.xlane.f32.xlu0 %v2861
  %v2863 = vpop.xlane.xlu0 %2862
  %v2864 = vsel %vm1523, %v2495, 0.0
  %v2865 = vadd.f32 %v2494, %v2864
  %2866 = vadd.xlane.f32.xlu0 %v2865
  %v2867 = vpop.xlane.xlu0 %2866
  %v2868 = vsel %vm1523, %v2497, 0.0
  %v2869 = vadd.f32 %v2496, %v2868
  %2870 = vadd.xlane.f32.xlu0 %v2869
  %v2871 = vpop.xlane.xlu0 %2870
  %v2872 = vsel %vm1523, %v2499, 0.0
  %v2873 = vadd.f32 %v2498, %v2872
  %2874 = vadd.xlane.f32.xlu0 %v2873
  %v2875 = vpop.xlane.xlu0 %2874
  %v2876 = vsel %vm1523, %v2501, 0.0
  %v2877 = vadd.f32 %v2500, %v2876
  %2878 = vadd.xlane.f32.xlu0 %v2877
  %v2879 = vpop.xlane.xlu0 %2878
  %v2880 = vsel %vm1523, %v2503, 0.0
  %v2881 = vadd.f32 %v2502, %v2880
  %2882 = vadd.xlane.f32.xlu0 %v2881
  %v2883 = vpop.xlane.xlu0 %2882
  %v2884 = vsel %vm1523, %v2505, 0.0
  %v2885 = vadd.f32 %v2504, %v2884
  %2886 = vadd.xlane.f32.xlu0 %v2885
  %v2887 = vpop.xlane.xlu0 %2886
  %v2888 = vsel %vm1523, %v2507, 0.0
  %v2889 = vadd.f32 %v2506, %v2888
  %2890 = vadd.xlane.f32.xlu0 %v2889
  %v2891 = vpop.xlane.xlu0 %2890
  %v2892 = vsel %vm1523, %v2509, 0.0
  %v2893 = vadd.f32 %v2508, %v2892
  %2894 = vadd.xlane.f32.xlu0 %v2893
  %v2895 = vpop.xlane.xlu0 %2894
  %v2896 = vsel %vm1523, %v2511, 0.0
  %v2897 = vadd.f32 %v2510, %v2896
  %2898 = vadd.xlane.f32.xlu0 %v2897
  %v2899 = vpop.xlane.xlu0 %2898
  %v2900 = vsel %vm1523, %v2513, 0.0
  %v2901 = vadd.f32 %v2512, %v2900
  %2902 = vadd.xlane.f32.xlu0 %v2901
  %v2903 = vpop.xlane.xlu0 %2902
  %v2904 = vsel %vm1523, %v2515, 0.0
  %v2905 = vadd.f32 %v2514, %v2904
  %2906 = vadd.xlane.f32.xlu0 %v2905
  %v2907 = vpop.xlane.xlu0 %2906
  %v2908 = vsel %vm1523, %v2517, 0.0
  %v2909 = vadd.f32 %v2516, %v2908
  %2910 = vadd.xlane.f32.xlu0 %v2909
  %v2911 = vpop.xlane.xlu0 %2910
  %v2912 = vsel %vm1523, %v2519, 0.0
  %v2913 = vadd.f32 %v2518, %v2912
  %2914 = vadd.xlane.f32.xlu0 %v2913
  %v2915 = vpop.xlane.xlu0 %2914
  %v2916 = vsel %vm1523, %v2521, 0.0
  %v2917 = vadd.f32 %v2520, %v2916
  %2918 = vadd.xlane.f32.xlu0 %v2917
  %v2919 = vpop.xlane.xlu0 %2918
  %v2920 = vsel %vm1523, %v2523, 0.0
  %v2921 = vadd.f32 %v2522, %v2920
  %2922 = vadd.xlane.f32.xlu0 %v2921
  %v2923 = vpop.xlane.xlu0 %2922
  %v2924 = vsel %vm1523, %v2525, 0.0
  %v2925 = vadd.f32 %v2524, %v2924
  %2926 = vadd.xlane.f32.xlu0 %v2925
  %v2927 = vpop.xlane.xlu0 %2926
  %v2928 = vsel %vm1523, %v2527, 0.0
  %v2929 = vadd.f32 %v2526, %v2928
  %2930 = vadd.xlane.f32.xlu0 %v2929
  %v2931 = vpop.xlane.xlu0 %2930
  %v2932 = vsel %vm1523, %v2529, 0.0
  %v2933 = vadd.f32 %v2528, %v2932
  %2934 = vadd.xlane.f32.xlu0 %v2933
  %v2935 = vpop.xlane.xlu0 %2934
  %v2936 = vsel %vm1523, %v2531, 0.0
  %v2937 = vadd.f32 %v2530, %v2936
  %2938 = vadd.xlane.f32.xlu0 %v2937
  %v2939 = vpop.xlane.xlu0 %2938
  %v2940 = vsel %vm1523, %v2533, 0.0
  %v2941 = vadd.f32 %v2532, %v2940
  %2942 = vadd.xlane.f32.xlu0 %v2941
  %v2943 = vpop.xlane.xlu0 %2942
  %v2944 = vsel %vm1523, %v2535, 0.0
  %v2945 = vadd.f32 %v2534, %v2944
  %2946 = vadd.xlane.f32.xlu0 %v2945
  %v2947 = vpop.xlane.xlu0 %2946
  %v2948 = vsel %vm1523, %v2537, 0.0
  %v2949 = vadd.f32 %v2536, %v2948
  %2950 = vadd.xlane.f32.xlu0 %v2949
  %v2951 = vpop.xlane.xlu0 %2950
  %v2952 = vsel %vm1523, %v2539, 0.0
  %v2953 = vadd.f32 %v2538, %v2952
  %2954 = vadd.xlane.f32.xlu0 %v2953
  %v2955 = vpop.xlane.xlu0 %2954
  %v2956 = vsel %vm1523, %v2541, 0.0
  %v2957 = vadd.f32 %v2540, %v2956
  %2958 = vadd.xlane.f32.xlu0 %v2957
  %v2959 = vpop.xlane.xlu0 %2958
  %v2960 = vsel %vm1523, %v2543, 0.0
  %v2961 = vadd.f32 %v2542, %v2960
  %2962 = vadd.xlane.f32.xlu0 %v2961
  %v2963 = vpop.xlane.xlu0 %2962
  %v2964 = vsel %vm1523, %v2545, 0.0
  %v2965 = vadd.f32 %v2544, %v2964
  %2966 = vadd.xlane.f32.xlu0 %v2965
  %v2967 = vpop.xlane.xlu0 %2966
  %v2968 = vsel %vm1523, %v2547, 0.0
  %v2969 = vadd.f32 %v2546, %v2968
  %2970 = vadd.xlane.f32.xlu0 %v2969
  %v2971 = vpop.xlane.xlu0 %2970
  %v2972 = vsel %vm1523, %v2549, 0.0
  %v2973 = vadd.f32 %v2548, %v2972
  %2974 = vadd.xlane.f32.xlu0 %v2973
  %v2975 = vpop.xlane.xlu0 %2974
  %v2976 = vsel %vm1523, %v2551, 0.0
  %v2977 = vadd.f32 %v2550, %v2976
  %2978 = vadd.xlane.f32.xlu0 %v2977
  %v2979 = vpop.xlane.xlu0 %2978
  %v2980 = vsel %vm1523, %v2553, 0.0
  %v2981 = vadd.f32 %v2552, %v2980
  %2982 = vadd.xlane.f32.xlu0 %v2981
  %v2983 = vpop.xlane.xlu0 %2982
  %v2984 = vsel %vm1523, %v2555, 0.0
  %v2985 = vadd.f32 %v2554, %v2984
  %2986 = vadd.xlane.f32.xlu0 %v2985
  %v2987 = vpop.xlane.xlu0 %2986
  %v2988 = vsel %vm1523, %v2557, 0.0
  %v2989 = vadd.f32 %v2556, %v2988
  %2990 = vadd.xlane.f32.xlu0 %v2989
  %v2991 = vpop.xlane.xlu0 %2990
  %v2992 = vsel %vm1523, %v2559, 0.0
  %v2993 = vadd.f32 %v2558, %v2992
  %2994 = vadd.xlane.f32.xlu0 %v2993
  %v2995 = vpop.xlane.xlu0 %2994
  %v2996 = vsel %vm1523, %v2561, 0.0
  %v2997 = vadd.f32 %v2560, %v2996
  %2998 = vadd.xlane.f32.xlu0 %v2997
  %v2999 = vpop.xlane.xlu0 %2998
  %v3000 = vsel %vm1523, %v2563, 0.0
  %v3001 = vadd.f32 %v2562, %v3000
  %3002 = vadd.xlane.f32.xlu0 %v3001
  %v3003 = vpop.xlane.xlu0 %3002
  %v3004 = vsel %vm1523, %v2565, 0.0
  %v3005 = vadd.f32 %v2564, %v3004
  %3006 = vadd.xlane.f32.xlu0 %v3005
  %v3007 = vpop.xlane.xlu0 %3006
  %v3008 = vsel %vm1523, %v2567, 0.0
  %v3009 = vadd.f32 %v2566, %v3008
  %3010 = vadd.xlane.f32.xlu0 %v3009
  %v3011 = vpop.xlane.xlu0 %3010
  %v3012 = vsel %vm1523, %v2569, 0.0
  %v3013 = vadd.f32 %v2568, %v3012
  %3014 = vadd.xlane.f32.xlu0 %v3013
  %v3015 = vpop.xlane.xlu0 %3014
  %v3016 = vsel %vm1523, %v2571, 0.0
  %v3017 = vadd.f32 %v2570, %v3016
  %3018 = vadd.xlane.f32.xlu0 %v3017
  %v3019 = vpop.xlane.xlu0 %3018
  %v3020 = vsel %vm1523, %v2573, 0.0
  %v3021 = vadd.f32 %v2572, %v3020
  %3022 = vadd.xlane.f32.xlu0 %v3021
  %v3023 = vpop.xlane.xlu0 %3022
  %v3024 = vsel %vm1523, %v2575, 0.0
  %v3025 = vadd.f32 %v2574, %v3024
  %3026 = vadd.xlane.f32.xlu0 %v3025
  %v3027 = vpop.xlane.xlu0 %3026
  %v3028 = vsel %vm1523, %v2577, 0.0
  %v3029 = vadd.f32 %v2576, %v3028
  %3030 = vadd.xlane.f32.xlu0 %v3029
  %v3031 = vpop.xlane.xlu0 %3030
  %v3032 = vsel %vm1523, %v2579, 0.0
  %v3033 = vadd.f32 %v2578, %v3032
  %3034 = vadd.xlane.f32.xlu0 %v3033
  %v3035 = vpop.xlane.xlu0 %3034
  %v3036 = vsel %vm1523, %v2581, 0.0
  %v3037 = vadd.f32 %v2580, %v3036
  %3038 = vadd.xlane.f32.xlu0 %v3037
  %v3039 = vpop.xlane.xlu0 %3038
  %v3040 = vsel %vm1523, %v2583, 0.0
  %v3041 = vadd.f32 %v2582, %v3040
  %3042 = vadd.xlane.f32.xlu0 %v3041
  %v3043 = vpop.xlane.xlu0 %3042
  %v3044 = vsel %vm1523, %v2585, 0.0
  %v3045 = vadd.f32 %v2584, %v3044
  %3046 = vadd.xlane.f32.xlu0 %v3045
  %v3047 = vpop.xlane.xlu0 %3046
  %v3048 = vsel %vm1523, %v2587, 0.0
  %v3049 = vadd.f32 %v2586, %v3048
  %3050 = vadd.xlane.f32.xlu0 %v3049
  %v3051 = vpop.xlane.xlu0 %3050
  %v3052 = vsel %vm1523, %v2589, 0.0
  %v3053 = vadd.f32 %v2588, %v3052
  %3054 = vadd.xlane.f32.xlu0 %v3053
  %v3055 = vpop.xlane.xlu0 %3054
  %v3056 = vsel %vm1523, %v2591, 0.0
  %v3057 = vadd.f32 %v2590, %v3056
  %3058 = vadd.xlane.f32.xlu0 %v3057
  %v3059 = vpop.xlane.xlu0 %3058
  %v3060 = vsel %vm1523, %v2593, 0.0
  %v3061 = vadd.f32 %v2592, %v3060
  %3062 = vadd.xlane.f32.xlu0 %v3061
  %v3063 = vpop.xlane.xlu0 %3062
  %v3064 = vsel %vm1523, %v2595, 0.0
  %v3065 = vadd.f32 %v2594, %v3064
  %3066 = vadd.xlane.f32.xlu0 %v3065
  %v3067 = vpop.xlane.xlu0 %3066
  %v3068 = vsel %vm1523, %v2597, 0.0
  %v3069 = vadd.f32 %v2596, %v3068
  %3070 = vadd.xlane.f32.xlu0 %v3069
  %v3071 = vpop.xlane.xlu0 %3070
  %v3072 = vsel %vm1523, %v2599, 0.0
  %v3073 = vadd.f32 %v2598, %v3072
  %3074 = vadd.xlane.f32.xlu0 %v3073
  %v3075 = vpop.xlane.xlu0 %3074
  %v3076 = vsel %vm1523, %v2601, 0.0
  %v3077 = vadd.f32 %v2600, %v3076
  %3078 = vadd.xlane.f32.xlu0 %v3077
  %v3079 = vpop.xlane.xlu0 %3078
  %v3080 = vsel %vm1523, %v2603, 0.0
  %v3081 = vadd.f32 %v2602, %v3080
  %3082 = vadd.xlane.f32.xlu0 %v3081
  %v3083 = vpop.xlane.xlu0 %3082
  %v3084 = vmul.f32 %v2607, 0.0051020407
  %v3085 = vmul.f32 %v2611, 0.0051020407
  %v3086 = vmul.f32 %v2615, 0.0051020407
  %v3087 = vmul.f32 %v2619, 0.0051020407
  %v3088 = vmul.f32 %v2623, 0.0051020407
  %v3089 = vmul.f32 %v2627, 0.0051020407
  %v3090 = vmul.f32 %v2631, 0.0051020407
  %v3091 = vmul.f32 %v2635, 0.0051020407
  %v3092 = vmul.f32 %v2639, 0.0051020407
  %v3093 = vmul.f32 %v2643, 0.0051020407
  %v3094 = vmul.f32 %v2647, 0.0051020407
  %v3095 = vmul.f32 %v2651, 0.0051020407
  %v3096 = vmul.f32 %v2655, 0.0051020407
  %v3097 = vmul.f32 %v2659, 0.0051020407
  %v3098 = vmul.f32 %v2663, 0.0051020407
  %v3099 = vmul.f32 %v2667, 0.0051020407
  %v3100 = vmul.f32 %v2671, 0.0051020407
  %v3101 = vmul.f32 %v2675, 0.0051020407
  %v3102 = vmul.f32 %v2679, 0.0051020407
  %v3103 = vmul.f32 %v2683, 0.0051020407
  %v3104 = vmul.f32 %v2687, 0.0051020407
  %v3105 = vmul.f32 %v2691, 0.0051020407
  %v3106 = vmul.f32 %v2695, 0.0051020407
  %v3107 = vmul.f32 %v2699, 0.0051020407
  %v3108 = vmul.f32 %v2703, 0.0051020407
  %v3109 = vmul.f32 %v2707, 0.0051020407
  %v3110 = vmul.f32 %v2711, 0.0051020407
  %v3111 = vmul.f32 %v2715, 0.0051020407
  %v3112 = vmul.f32 %v2719, 0.0051020407
  %v3113 = vmul.f32 %v2723, 0.0051020407
  %v3114 = vmul.f32 %v2727, 0.0051020407
  %v3115 = vmul.f32 %v2731, 0.0051020407
  %v3116 = vmul.f32 %v2735, 0.0051020407
  %v3117 = vmul.f32 %v2739, 0.0051020407
  %v3118 = vmul.f32 %v2743, 0.0051020407
  %v3119 = vmul.f32 %v2747, 0.0051020407
  %v3120 = vmul.f32 %v2751, 0.0051020407
  %v3121 = vmul.f32 %v2755, 0.0051020407
  %v3122 = vmul.f32 %v2759, 0.0051020407
  %v3123 = vmul.f32 %v2763, 0.0051020407
  %v3124 = vmul.f32 %v2767, 0.0051020407
  %v3125 = vmul.f32 %v2771, 0.0051020407
  %v3126 = vmul.f32 %v2775, 0.0051020407
  %v3127 = vmul.f32 %v2779, 0.0051020407
  %v3128 = vmul.f32 %v2783, 0.0051020407
  %v3129 = vmul.f32 %v2787, 0.0051020407
  %v3130 = vmul.f32 %v2791, 0.0051020407
  %v3131 = vmul.f32 %v2795, 0.0051020407
  %v3132 = vmul.f32 %v2799, 0.0051020407
  %v3133 = vmul.f32 %v2803, 0.0051020407
  %v3134 = vmul.f32 %v2807, 0.0051020407
  %v3135 = vmul.f32 %v2811, 0.0051020407
  %v3136 = vmul.f32 %v2815, 0.0051020407
  %v3137 = vmul.f32 %v2819, 0.0051020407
  %v3138 = vmul.f32 %v2823, 0.0051020407
  %v3139 = vmul.f32 %v2827, 0.0051020407
  %v3140 = vmul.f32 %v2831, 0.0051020407
  %v3141 = vmul.f32 %v2835, 0.0051020407
  %v3142 = vmul.f32 %v2839, 0.0051020407
  %v3143 = vmul.f32 %v2843, 0.0051020407
  %v3144 = vmul.f32 %v2847, 0.0051020407
  %v3145 = vmul.f32 %v2851, 0.0051020407
  %v3146 = vmul.f32 %v2855, 0.0051020407
  %v3147 = vmul.f32 %v2859, 0.0051020407
  %v3148 = vmul.f32 %v2863, 0.0051020407
  %v3149 = vmul.f32 %v2867, 0.0051020407
  %v3150 = vmul.f32 %v2871, 0.0051020407
  %v3151 = vmul.f32 %v2875, 0.0051020407
  %v3152 = vmul.f32 %v2879, 0.0051020407
  %v3153 = vmul.f32 %v2883, 0.0051020407
  %v3154 = vmul.f32 %v2887, 0.0051020407
  %v3155 = vmul.f32 %v2891, 0.0051020407
  %v3156 = vmul.f32 %v2895, 0.0051020407
  %v3157 = vmul.f32 %v2899, 0.0051020407
  %v3158 = vmul.f32 %v2903, 0.0051020407
  %v3159 = vmul.f32 %v2907, 0.0051020407
  %v3160 = vmul.f32 %v2911, 0.0051020407
  %v3161 = vmul.f32 %v2915, 0.0051020407
  %v3162 = vmul.f32 %v2919, 0.0051020407
  %v3163 = vmul.f32 %v2923, 0.0051020407
  %v3164 = vmul.f32 %v2927, 0.0051020407
  %v3165 = vmul.f32 %v2931, 0.0051020407
  %v3166 = vmul.f32 %v2935, 0.0051020407
  %v3167 = vmul.f32 %v2939, 0.0051020407
  %v3168 = vmul.f32 %v2943, 0.0051020407
  %v3169 = vmul.f32 %v2947, 0.0051020407
  %v3170 = vmul.f32 %v2951, 0.0051020407
  %v3171 = vmul.f32 %v2955, 0.0051020407
  %v3172 = vmul.f32 %v2959, 0.0051020407
  %v3173 = vmul.f32 %v2963, 0.0051020407
  %v3174 = vmul.f32 %v2967, 0.0051020407
  %v3175 = vmul.f32 %v2971, 0.0051020407
  %v3176 = vmul.f32 %v2975, 0.0051020407
  %v3177 = vmul.f32 %v2979, 0.0051020407
  %v3178 = vmul.f32 %v2983, 0.0051020407
  %v3179 = vmul.f32 %v2987, 0.0051020407
  %v3180 = vmul.f32 %v2991, 0.0051020407
  %v3181 = vmul.f32 %v2995, 0.0051020407
  %v3182 = vmul.f32 %v2999, 0.0051020407
  %v3183 = vmul.f32 %v3003, 0.0051020407
  %v3184 = vmul.f32 %v3007, 0.0051020407
  %v3185 = vmul.f32 %v3011, 0.0051020407
  %v3186 = vmul.f32 %v3015, 0.0051020407
  %v3187 = vmul.f32 %v3019, 0.0051020407
  %v3188 = vmul.f32 %v3023, 0.0051020407
  %v3189 = vmul.f32 %v3027, 0.0051020407
  %v3190 = vmul.f32 %v3031, 0.0051020407
  %v3191 = vmul.f32 %v3035, 0.0051020407
  %v3192 = vmul.f32 %v3039, 0.0051020407
  %v3193 = vmul.f32 %v3043, 0.0051020407
  %v3194 = vmul.f32 %v3047, 0.0051020407
  %v3195 = vmul.f32 %v3051, 0.0051020407
  %v3196 = vmul.f32 %v3055, 0.0051020407
  %v3197 = vmul.f32 %v3059, 0.0051020407
  %v3198 = vmul.f32 %v3063, 0.0051020407
  %v3199 = vmul.f32 %v3067, 0.0051020407
  %v3200 = vmul.f32 %v3071, 0.0051020407
  %v3201 = vmul.f32 %v3075, 0.0051020407
  %v3202 = vmul.f32 %v3079, 0.0051020407
  %v3203 = vmul.f32 %v3083, 0.0051020407
  %v3204 = vadd.f32 %v3084, 0.001
  %v3205 = vadd.f32 %v3085, 0.001
  %v3206 = vadd.f32 %v3086, 0.001
  %v3207 = vadd.f32 %v3087, 0.001
  %v3208 = vadd.f32 %v3088, 0.001
  %v3209 = vadd.f32 %v3089, 0.001
  %v3210 = vadd.f32 %v3090, 0.001
  %v3211 = vadd.f32 %v3091, 0.001
  %v3212 = vadd.f32 %v3092, 0.001
  %v3213 = vadd.f32 %v3093, 0.001
  %v3214 = vadd.f32 %v3094, 0.001
  %v3215 = vadd.f32 %v3095, 0.001
  %v3216 = vadd.f32 %v3096, 0.001
  %v3217 = vadd.f32 %v3097, 0.001
  %v3218 = vadd.f32 %v3098, 0.001
  %v3219 = vadd.f32 %v3099, 0.001
  %v3220 = vadd.f32 %v3100, 0.001
  %v3221 = vadd.f32 %v3101, 0.001
  %v3222 = vadd.f32 %v3102, 0.001
  %v3223 = vadd.f32 %v3103, 0.001
  %v3224 = vadd.f32 %v3104, 0.001
  %v3225 = vadd.f32 %v3105, 0.001
  %v3226 = vadd.f32 %v3106, 0.001
  %v3227 = vadd.f32 %v3107, 0.001
  %v3228 = vadd.f32 %v3108, 0.001
  %v3229 = vadd.f32 %v3109, 0.001
  %v3230 = vadd.f32 %v3110, 0.001
  %v3231 = vadd.f32 %v3111, 0.001
  %v3232 = vadd.f32 %v3112, 0.001
  %v3233 = vadd.f32 %v3113, 0.001
  %v3234 = vadd.f32 %v3114, 0.001
  %v3235 = vadd.f32 %v3115, 0.001
  %v3236 = vadd.f32 %v3116, 0.001
  %v3237 = vadd.f32 %v3117, 0.001
  %v3238 = vadd.f32 %v3118, 0.001
  %v3239 = vadd.f32 %v3119, 0.001
  %v3240 = vadd.f32 %v3120, 0.001
  %v3241 = vadd.f32 %v3121, 0.001
  %v3242 = vadd.f32 %v3122, 0.001
  %v3243 = vadd.f32 %v3123, 0.001
  %v3244 = vadd.f32 %v3124, 0.001
  %v3245 = vadd.f32 %v3125, 0.001
  %v3246 = vadd.f32 %v3126, 0.001
  %v3247 = vadd.f32 %v3127, 0.001
  %v3248 = vadd.f32 %v3128, 0.001
  %v3249 = vadd.f32 %v3129, 0.001
  %v3250 = vadd.f32 %v3130, 0.001
  %v3251 = vadd.f32 %v3131, 0.001
  %v3252 = vadd.f32 %v3132, 0.001
  %v3253 = vadd.f32 %v3133, 0.001
  %v3254 = vadd.f32 %v3134, 0.001
  %v3255 = vadd.f32 %v3135, 0.001
  %v3256 = vadd.f32 %v3136, 0.001
  %v3257 = vadd.f32 %v3137, 0.001
  %v3258 = vadd.f32 %v3138, 0.001
  %v3259 = vadd.f32 %v3139, 0.001
  %v3260 = vadd.f32 %v3140, 0.001
  %v3261 = vadd.f32 %v3141, 0.001
  %v3262 = vadd.f32 %v3142, 0.001
  %v3263 = vadd.f32 %v3143, 0.001
  %v3264 = vadd.f32 %v3144, 0.001
  %v3265 = vadd.f32 %v3145, 0.001
  %v3266 = vadd.f32 %v3146, 0.001
  %v3267 = vadd.f32 %v3147, 0.001
  %v3268 = vadd.f32 %v3148, 0.001
  %v3269 = vadd.f32 %v3149, 0.001
  %v3270 = vadd.f32 %v3150, 0.001
  %v3271 = vadd.f32 %v3151, 0.001
  %v3272 = vadd.f32 %v3152, 0.001
  %v3273 = vadd.f32 %v3153, 0.001
  %v3274 = vadd.f32 %v3154, 0.001
  %v3275 = vadd.f32 %v3155, 0.001
  %v3276 = vadd.f32 %v3156, 0.001
  %v3277 = vadd.f32 %v3157, 0.001
  %v3278 = vadd.f32 %v3158, 0.001
  %v3279 = vadd.f32 %v3159, 0.001
  %v3280 = vadd.f32 %v3160, 0.001
  %v3281 = vadd.f32 %v3161, 0.001
  %v3282 = vadd.f32 %v3162, 0.001
  %v3283 = vadd.f32 %v3163, 0.001
  %v3284 = vadd.f32 %v3164, 0.001
  %v3285 = vadd.f32 %v3165, 0.001
  %v3286 = vadd.f32 %v3166, 0.001
  %v3287 = vadd.f32 %v3167, 0.001
  %v3288 = vadd.f32 %v3168, 0.001
  %v3289 = vadd.f32 %v3169, 0.001
  %v3290 = vadd.f32 %v3170, 0.001
  %v3291 = vadd.f32 %v3171, 0.001
  %v3292 = vadd.f32 %v3172, 0.001
  %v3293 = vadd.f32 %v3173, 0.001
  %v3294 = vadd.f32 %v3174, 0.001
  %v3295 = vadd.f32 %v3175, 0.001
  %v3296 = vadd.f32 %v3176, 0.001
  %v3297 = vadd.f32 %v3177, 0.001
  %v3298 = vadd.f32 %v3178, 0.001
  %v3299 = vadd.f32 %v3179, 0.001
  %v3300 = vadd.f32 %v3180, 0.001
  %v3301 = vadd.f32 %v3181, 0.001
  %v3302 = vadd.f32 %v3182, 0.001
  %v3303 = vadd.f32 %v3183, 0.001
  %v3304 = vadd.f32 %v3184, 0.001
  %v3305 = vadd.f32 %v3185, 0.001
  %v3306 = vadd.f32 %v3186, 0.001
  %v3307 = vadd.f32 %v3187, 0.001
  %v3308 = vadd.f32 %v3188, 0.001
  %v3309 = vadd.f32 %v3189, 0.001
  %v3310 = vadd.f32 %v3190, 0.001
  %v3311 = vadd.f32 %v3191, 0.001
  %v3312 = vadd.f32 %v3192, 0.001
  %v3313 = vadd.f32 %v3193, 0.001
  %v3314 = vadd.f32 %v3194, 0.001
  %v3315 = vadd.f32 %v3195, 0.001
  %v3316 = vadd.f32 %v3196, 0.001
  %v3317 = vadd.f32 %v3197, 0.001
  %v3318 = vadd.f32 %v3198, 0.001
  %v3319 = vadd.f32 %v3199, 0.001
  %v3320 = vadd.f32 %v3200, 0.001
  %v3321 = vadd.f32 %v3201, 0.001
  %v3322 = vadd.f32 %v3202, 0.001
  %v3323 = vadd.f32 %v3203, 0.001
  %v3324 = vrsqrt.pop %v3204
  %v3325 = vrsqrt.pop %v3205
  %v3326 = vrsqrt.pop %v3206
  %v3327 = vrsqrt.pop %v3207
  %v3328 = vrsqrt.pop %v3208
  %v3329 = vrsqrt.pop %v3209
  %v3330 = vrsqrt.pop %v3210
  %v3331 = vrsqrt.pop %v3211
  %v3332 = vrsqrt.pop %v3212
  %v3333 = vrsqrt.pop %v3213
  %v3334 = vrsqrt.pop %v3214
  %v3335 = vrsqrt.pop %v3215
  %v3336 = vrsqrt.pop %v3216
  %v3337 = vrsqrt.pop %v3217
  %v3338 = vrsqrt.pop %v3218
  %v3339 = vrsqrt.pop %v3219
  %v3340 = vrsqrt.pop %v3220
  %v3341 = vrsqrt.pop %v3221
  %v3342 = vrsqrt.pop %v3222
  %v3343 = vrsqrt.pop %v3223
  %v3344 = vrsqrt.pop %v3224
  %v3345 = vrsqrt.pop %v3225
  %v3346 = vrsqrt.pop %v3226
  %v3347 = vrsqrt.pop %v3227
  %v3348 = vrsqrt.pop %v3228
  %v3349 = vrsqrt.pop %v3229
  %v3350 = vrsqrt.pop %v3230
  %v3351 = vrsqrt.pop %v3231
  %v3352 = vrsqrt.pop %v3232
  %v3353 = vrsqrt.pop %v3233
  %v3354 = vrsqrt.pop %v3234
  %v3355 = vrsqrt.pop %v3235
  %v3356 = vrsqrt.pop %v3236
  %v3357 = vrsqrt.pop %v3237
  %v3358 = vrsqrt.pop %v3238
  %v3359 = vrsqrt.pop %v3239
  %v3360 = vrsqrt.pop %v3240
  %v3361 = vrsqrt.pop %v3241
  %v3362 = vrsqrt.pop %v3242
  %v3363 = vrsqrt.pop %v3243
  %v3364 = vrsqrt.pop %v3244
  %v3365 = vrsqrt.pop %v3245
  %v3366 = vrsqrt.pop %v3246
  %v3367 = vrsqrt.pop %v3247
  %v3368 = vrsqrt.pop %v3248
  %v3369 = vrsqrt.pop %v3249
  %v3370 = vrsqrt.pop %v3250
  %v3371 = vrsqrt.pop %v3251
  %v3372 = vrsqrt.pop %v3252
  %v3373 = vrsqrt.pop %v3253
  %v3374 = vrsqrt.pop %v3254
  %v3375 = vrsqrt.pop %v3255
  %v3376 = vrsqrt.pop %v3256
  %v3377 = vrsqrt.pop %v3257
  %v3378 = vrsqrt.pop %v3258
  %v3379 = vrsqrt.pop %v3259
  %v3380 = vrsqrt.pop %v3260
  %v3381 = vrsqrt.pop %v3261
  %v3382 = vrsqrt.pop %v3262
  %v3383 = vrsqrt.pop %v3263
  %v3384 = vrsqrt.pop %v3264
  %v3385 = vrsqrt.pop %v3265
  %v3386 = vrsqrt.pop %v3266
  %v3387 = vrsqrt.pop %v3267
  %v3388 = vrsqrt.pop %v3268
  %v3389 = vrsqrt.pop %v3269
  %v3390 = vrsqrt.pop %v3270
  %v3391 = vrsqrt.pop %v3271
  %v3392 = vrsqrt.pop %v3272
  %v3393 = vrsqrt.pop %v3273
  %v3394 = vrsqrt.pop %v3274
  %v3395 = vrsqrt.pop %v3275
  %v3396 = vrsqrt.pop %v3276
  %v3397 = vrsqrt.pop %v3277
  %v3398 = vrsqrt.pop %v3278
  %v3399 = vrsqrt.pop %v3279
  %v3400 = vrsqrt.pop %v3280
  %v3401 = vrsqrt.pop %v3281
  %v3402 = vrsqrt.pop %v3282
  %v3403 = vrsqrt.pop %v3283
  %v3404 = vrsqrt.pop %v3284
  %v3405 = vrsqrt.pop %v3285
  %v3406 = vrsqrt.pop %v3286
  %v3407 = vrsqrt.pop %v3287
  %v3408 = vrsqrt.pop %v3288
  %v3409 = vrsqrt.pop %v3289
  %v3410 = vrsqrt.pop %v3290
  %v3411 = vrsqrt.pop %v3291
  %v3412 = vrsqrt.pop %v3292
  %v3413 = vrsqrt.pop %v3293
  %v3414 = vrsqrt.pop %v3294
  %v3415 = vrsqrt.pop %v3295
  %v3416 = vrsqrt.pop %v3296
  %v3417 = vrsqrt.pop %v3297
  %v3418 = vrsqrt.pop %v3298
  %v3419 = vrsqrt.pop %v3299
  %v3420 = vrsqrt.pop %v3300
  %v3421 = vrsqrt.pop %v3301
  %v3422 = vrsqrt.pop %v3302
  %v3423 = vrsqrt.pop %v3303
  %v3424 = vrsqrt.pop %v3304
  %v3425 = vrsqrt.pop %v3305
  %v3426 = vrsqrt.pop %v3306
  %v3427 = vrsqrt.pop %v3307
  %v3428 = vrsqrt.pop %v3308
  %v3429 = vrsqrt.pop %v3309
  %v3430 = vrsqrt.pop %v3310
  %v3431 = vrsqrt.pop %v3311
  %v3432 = vrsqrt.pop %v3312
  %v3433 = vrsqrt.pop %v3313
  %v3434 = vrsqrt.pop %v3314
  %v3435 = vrsqrt.pop %v3315
  %v3436 = vrsqrt.pop %v3316
  %v3437 = vrsqrt.pop %v3317
  %v3438 = vrsqrt.pop %v3318
  %v3439 = vrsqrt.pop %v3319
  %v3440 = vrsqrt.pop %v3320
  %v3441 = vrsqrt.pop %v3321
  %v3442 = vrsqrt.pop %v3322
  %v3443 = vrsqrt.pop %v3323
  %v3444 = vld [vmem:[%s3] sm:$0xff]
  %v3445 = vld [vmem:[%s3 + $0x8] sm:$0xff]
  %v3446 = vld [vmem:[%s3 + $0x10] sm:$0xff]
  %v3447 = vld [vmem:[%s3 + $0x18] sm:$0xff]
  %v3448 = vld [vmem:[%s3 + $0x20] sm:$0xff]
  %v3449 = vld [vmem:[%s3 + $0x28] sm:$0xff]
  %v3450 = vld [vmem:[%s3 + $0x30] sm:$0xff]
  %v3451 = vld [vmem:[%s3 + $0x38] sm:$0xff]
  %v3452 = vld [vmem:[%s3 + $0x40] sm:$0xff]
  %v3453 = vld [vmem:[%s3 + $0x48] sm:$0xff]
  %v3454 = vld [vmem:[%s3 + $0x50] sm:$0xff]
  %v3455 = vld [vmem:[%s3 + $0x58] sm:$0xff]
  %v3456 = vld [vmem:[%s3 + $0x60] sm:$0xff]
  %v3457 = vld [vmem:[%s3 + $0x68] sm:$0xff]
  %v3458 = vld [vmem:[%s3 + $0x70] sm:$0xff]
  %v3459 = vld [vmem:[%s3 + $0x78] sm:$0xff]
  %v3460 = vld [vmem:[%s3 + $0x80] sm:$0xff]
  %v3461 = vld [vmem:[%s3 + $0x88] sm:$0xff]
  %v3462 = vld [vmem:[%s3 + $0x90] sm:$0xff]
  %v3463 = vld [vmem:[%s3 + $0x98] sm:$0xff]
  %v3464 = vld [vmem:[%s3 + $0xa0] sm:$0xff]
  %v3465 = vld [vmem:[%s3 + $0xa8] sm:$0xff]
  %v3466 = vld [vmem:[%s3 + $0xb0] sm:$0xff]
  %v3467 = vld [vmem:[%s3 + $0xb8] sm:$0xff]
  %v3468 = vld [vmem:[%s3 + $0xc0] sm:$0xff]
  %v3469 = vld [vmem:[%s3 + $0xc8] sm:$0xff]
  %v3470 = vld [vmem:[%s3 + $0xd0] sm:$0xff]
  %v3471 = vld [vmem:[%s3 + $0xd8] sm:$0xff]
  %v3472 = vld [vmem:[%s3 + $0xe0] sm:$0xff]
  %v3473 = vld [vmem:[%s3 + $0xe8] sm:$0xff]
  %v3474 = vld [vmem:[%s3 + $0xf0] sm:$0xff]
  %v3475 = vld [vmem:[%s3 + $0xf8] sm:$0xff]
  %v3476 = vld [vmem:[%s3 + $0x100] sm:$0xff]
  %v3477 = vld [vmem:[%s3 + $0x108] sm:$0xff]
  %v3478 = vld [vmem:[%s3 + $0x110] sm:$0xff]
  %v3479 = vld [vmem:[%s3 + $0x118] sm:$0xff]
  %v3480 = vld [vmem:[%s3 + $0x120] sm:$0xff]
  %v3481 = vld [vmem:[%s3 + $0x128] sm:$0xff]
  %v3482 = vld [vmem:[%s3 + $0x130] sm:$0xff]
  %v3483 = vld [vmem:[%s3 + $0x138] sm:$0xff]
  %v3484 = vld [vmem:[%s3 + $0x140] sm:$0xff]
  %v3485 = vld [vmem:[%s3 + $0x148] sm:$0xff]
  %v3486 = vld [vmem:[%s3 + $0x150] sm:$0xff]
  %v3487 = vld [vmem:[%s3 + $0x158] sm:$0xff]
  %v3488 = vld [vmem:[%s3 + $0x160] sm:$0xff]
  %v3489 = vld [vmem:[%s3 + $0x168] sm:$0xff]
  %v3490 = vld [vmem:[%s3 + $0x170] sm:$0xff]
  %v3491 = vld [vmem:[%s3 + $0x178] sm:$0xff]
  %v3492 = vld [vmem:[%s3 + $0x180] sm:$0xff]
  %v3493 = vld [vmem:[%s3 + $0x188] sm:$0xff]
  %v3494 = vld [vmem:[%s3 + $0x190] sm:$0xff]
  %v3495 = vld [vmem:[%s3 + $0x198] sm:$0xff]
  %v3496 = vld [vmem:[%s3 + $0x1a0] sm:$0xff]
  %v3497 = vld [vmem:[%s3 + $0x1a8] sm:$0xff]
  %v3498 = vld [vmem:[%s3 + $0x1b0] sm:$0xff]
  %v3499 = vld [vmem:[%s3 + $0x1b8] sm:$0xff]
  %v3500 = vld [vmem:[%s3 + $0x1c0] sm:$0xff]
  %v3501 = vld [vmem:[%s3 + $0x1c8] sm:$0xff]
  %v3502 = vld [vmem:[%s3 + $0x1d0] sm:$0xff]
  %v3503 = vld [vmem:[%s3 + $0x1d8] sm:$0xff]
  %v3504 = vld [vmem:[%s3 + $0x1e0] sm:$0xff]
  %v3505 = vld [vmem:[%s3 + $0x1e8] sm:$0xff]
  %v3506 = vld [vmem:[%s3 + $0x1f0] sm:$0xff]
  %v3507 = vld [vmem:[%s3 + $0x1f8] sm:$0xff]
  %v3508 = vld [vmem:[%s3 + $0x200] sm:$0xff]
  %v3509 = vld [vmem:[%s3 + $0x208] sm:$0xff]
  %v3510 = vld [vmem:[%s3 + $0x210] sm:$0xff]
  %v3511 = vld [vmem:[%s3 + $0x218] sm:$0xff]
  %v3512 = vld [vmem:[%s3 + $0x220] sm:$0xff]
  %v3513 = vld [vmem:[%s3 + $0x228] sm:$0xff]
  %v3514 = vld [vmem:[%s3 + $0x230] sm:$0xff]
  %v3515 = vld [vmem:[%s3 + $0x238] sm:$0xff]
  %v3516 = vld [vmem:[%s3 + $0x240] sm:$0xff]
  %v3517 = vld [vmem:[%s3 + $0x248] sm:$0xff]
  %v3518 = vld [vmem:[%s3 + $0x250] sm:$0xff]
  %v3519 = vld [vmem:[%s3 + $0x258] sm:$0xff]
  %v3520 = vld [vmem:[%s3 + $0x260] sm:$0xff]
  %v3521 = vld [vmem:[%s3 + $0x268] sm:$0xff]
  %v3522 = vld [vmem:[%s3 + $0x270] sm:$0xff]
  %v3523 = vld [vmem:[%s3 + $0x278] sm:$0xff]
  %v3524 = vld [vmem:[%s3 + $0x280] sm:$0xff]
  %v3525 = vld [vmem:[%s3 + $0x288] sm:$0xff]
  %v3526 = vld [vmem:[%s3 + $0x290] sm:$0xff]
  %v3527 = vld [vmem:[%s3 + $0x298] sm:$0xff]
  %v3528 = vld [vmem:[%s3 + $0x2a0] sm:$0xff]
  %v3529 = vld [vmem:[%s3 + $0x2a8] sm:$0xff]
  %v3530 = vld [vmem:[%s3 + $0x2b0] sm:$0xff]
  %v3531 = vld [vmem:[%s3 + $0x2b8] sm:$0xff]
  %v3532 = vld [vmem:[%s3 + $0x2c0] sm:$0xff]
  %v3533 = vld [vmem:[%s3 + $0x2c8] sm:$0xff]
  %v3534 = vld [vmem:[%s3 + $0x2d0] sm:$0xff]
  %v3535 = vld [vmem:[%s3 + $0x2d8] sm:$0xff]
  %v3536 = vld [vmem:[%s3 + $0x2e0] sm:$0xff]
  %v3537 = vld [vmem:[%s3 + $0x2e8] sm:$0xff]
  %v3538 = vld [vmem:[%s3 + $0x2f0] sm:$0xff]
  %v3539 = vld [vmem:[%s3 + $0x2f8] sm:$0xff]
  %v3540 = vld [vmem:[%s3 + $0x300] sm:$0xff]
  %v3541 = vld [vmem:[%s3 + $0x308] sm:$0xff]
  %v3542 = vld [vmem:[%s3 + $0x310] sm:$0xff]
  %v3543 = vld [vmem:[%s3 + $0x318] sm:$0xff]
  %v3544 = vld [vmem:[%s3 + $0x320] sm:$0xff]
  %v3545 = vld [vmem:[%s3 + $0x328] sm:$0xff]
  %v3546 = vld [vmem:[%s3 + $0x330] sm:$0xff]
  %v3547 = vld [vmem:[%s3 + $0x338] sm:$0xff]
  %v3548 = vld [vmem:[%s3 + $0x340] sm:$0xff]
  %v3549 = vld [vmem:[%s3 + $0x348] sm:$0xff]
  %v3550 = vld [vmem:[%s3 + $0x350] sm:$0xff]
  %v3551 = vld [vmem:[%s3 + $0x358] sm:$0xff]
  %v3552 = vld [vmem:[%s3 + $0x360] sm:$0xff]
  %v3553 = vld [vmem:[%s3 + $0x368] sm:$0xff]
  %v3554 = vld [vmem:[%s3 + $0x370] sm:$0xff]
  %v3555 = vld [vmem:[%s3 + $0x378] sm:$0xff]
  %v3556 = vld [vmem:[%s3 + $0x380] sm:$0xff]
  %v3557 = vld [vmem:[%s3 + $0x388] sm:$0xff]
  %v3558 = vld [vmem:[%s3 + $0x390] sm:$0xff]
  %v3559 = vld [vmem:[%s3 + $0x398] sm:$0xff]
  %v3560 = vld [vmem:[%s3 + $0x3a0] sm:$0xff]
  %v3561 = vld [vmem:[%s3 + $0x3a8] sm:$0xff]
  %v3562 = vld [vmem:[%s3 + $0x3b0] sm:$0xff]
  %v3563 = vld [vmem:[%s3 + $0x3b8] sm:$0xff]
  %v3564 = vmul.f32 %v3444, %v3324
  %v3565 = vmul.f32 %v3445, %v3325
  %v3566 = vmul.f32 %v3446, %v3326
  %v3567 = vmul.f32 %v3447, %v3327
  %v3568 = vmul.f32 %v3448, %v3328
  %v3569 = vmul.f32 %v3449, %v3329
  %v3570 = vmul.f32 %v3450, %v3330
  %v3571 = vmul.f32 %v3451, %v3331
  %v3572 = vmul.f32 %v3452, %v3332
  %v3573 = vmul.f32 %v3453, %v3333
  %v3574 = vmul.f32 %v3454, %v3334
  %v3575 = vmul.f32 %v3455, %v3335
  %v3576 = vmul.f32 %v3456, %v3336
  %v3577 = vmul.f32 %v3457, %v3337
  %v3578 = vmul.f32 %v3458, %v3338
  %v3579 = vmul.f32 %v3459, %v3339
  %v3580 = vmul.f32 %v3460, %v3340
  %v3581 = vmul.f32 %v3461, %v3341
  %v3582 = vmul.f32 %v3462, %v3342
  %v3583 = vmul.f32 %v3463, %v3343
  %v3584 = vmul.f32 %v3464, %v3344
  %v3585 = vmul.f32 %v3465, %v3345
  %v3586 = vmul.f32 %v3466, %v3346
  %v3587 = vmul.f32 %v3467, %v3347
  %v3588 = vmul.f32 %v3468, %v3348
  %v3589 = vmul.f32 %v3469, %v3349
  %v3590 = vmul.f32 %v3470, %v3350
  %v3591 = vmul.f32 %v3471, %v3351
  %v3592 = vmul.f32 %v3472, %v3352
  %v3593 = vmul.f32 %v3473, %v3353
  %v3594 = vmul.f32 %v3474, %v3354
  %v3595 = vmul.f32 %v3475, %v3355
  %v3596 = vmul.f32 %v3476, %v3356
  %v3597 = vmul.f32 %v3477, %v3357
  %v3598 = vmul.f32 %v3478, %v3358
  %v3599 = vmul.f32 %v3479, %v3359
  %v3600 = vmul.f32 %v3480, %v3360
  %v3601 = vmul.f32 %v3481, %v3361
  %v3602 = vmul.f32 %v3482, %v3362
  %v3603 = vmul.f32 %v3483, %v3363
  %v3604 = vmul.f32 %v3484, %v3364
  %v3605 = vmul.f32 %v3485, %v3365
  %v3606 = vmul.f32 %v3486, %v3366
  %v3607 = vmul.f32 %v3487, %v3367
  %v3608 = vmul.f32 %v3488, %v3368
  %v3609 = vmul.f32 %v3489, %v3369
  %v3610 = vmul.f32 %v3490, %v3370
  %v3611 = vmul.f32 %v3491, %v3371
  %v3612 = vmul.f32 %v3492, %v3372
  %v3613 = vmul.f32 %v3493, %v3373
  %v3614 = vmul.f32 %v3494, %v3374
  %v3615 = vmul.f32 %v3495, %v3375
  %v3616 = vmul.f32 %v3496, %v3376
  %v3617 = vmul.f32 %v3497, %v3377
  %v3618 = vmul.f32 %v3498, %v3378
  %v3619 = vmul.f32 %v3499, %v3379
  %v3620 = vmul.f32 %v3500, %v3380
  %v3621 = vmul.f32 %v3501, %v3381
  %v3622 = vmul.f32 %v3502, %v3382
  %v3623 = vmul.f32 %v3503, %v3383
  %v3624 = vmul.f32 %v3504, %v3384
  %v3625 = vmul.f32 %v3505, %v3385
  %v3626 = vmul.f32 %v3506, %v3386
  %v3627 = vmul.f32 %v3507, %v3387
  %v3628 = vmul.f32 %v3508, %v3388
  %v3629 = vmul.f32 %v3509, %v3389
  %v3630 = vmul.f32 %v3510, %v3390
  %v3631 = vmul.f32 %v3511, %v3391
  %v3632 = vmul.f32 %v3512, %v3392
  %v3633 = vmul.f32 %v3513, %v3393
  %v3634 = vmul.f32 %v3514, %v3394
  %v3635 = vmul.f32 %v3515, %v3395
  %v3636 = vmul.f32 %v3516, %v3396
  %v3637 = vmul.f32 %v3517, %v3397
  %v3638 = vmul.f32 %v3518, %v3398
  %v3639 = vmul.f32 %v3519, %v3399
  %v3640 = vmul.f32 %v3520, %v3400
  %v3641 = vmul.f32 %v3521, %v3401
  %v3642 = vmul.f32 %v3522, %v3402
  %v3643 = vmul.f32 %v3523, %v3403
  %v3644 = vmul.f32 %v3524, %v3404
  %v3645 = vmul.f32 %v3525, %v3405
  %v3646 = vmul.f32 %v3526, %v3406
  %v3647 = vmul.f32 %v3527, %v3407
  %v3648 = vmul.f32 %v3528, %v3408
  %v3649 = vmul.f32 %v3529, %v3409
  %v3650 = vmul.f32 %v3530, %v3410
  %v3651 = vmul.f32 %v3531, %v3411
  %v3652 = vmul.f32 %v3532, %v3412
  %v3653 = vmul.f32 %v3533, %v3413
  %v3654 = vmul.f32 %v3534, %v3414
  %v3655 = vmul.f32 %v3535, %v3415
  %v3656 = vmul.f32 %v3536, %v3416
  %v3657 = vmul.f32 %v3537, %v3417
  %v3658 = vmul.f32 %v3538, %v3418
  %v3659 = vmul.f32 %v3539, %v3419
  %v3660 = vmul.f32 %v3540, %v3420
  %v3661 = vmul.f32 %v3541, %v3421
  %v3662 = vmul.f32 %v3542, %v3422
  %v3663 = vmul.f32 %v3543, %v3423
  %v3664 = vmul.f32 %v3544, %v3424
  %v3665 = vmul.f32 %v3545, %v3425
  %v3666 = vmul.f32 %v3546, %v3426
  %v3667 = vmul.f32 %v3547, %v3427
  %v3668 = vmul.f32 %v3548, %v3428
  %v3669 = vmul.f32 %v3549, %v3429
  %v3670 = vmul.f32 %v3550, %v3430
  %v3671 = vmul.f32 %v3551, %v3431
  %v3672 = vmul.f32 %v3552, %v3432
  %v3673 = vmul.f32 %v3553, %v3433
  %v3674 = vmul.f32 %v3554, %v3434
  %v3675 = vmul.f32 %v3555, %v3435
  %v3676 = vmul.f32 %v3556, %v3436
  %v3677 = vmul.f32 %v3557, %v3437
  %v3678 = vmul.f32 %v3558, %v3438
  %v3679 = vmul.f32 %v3559, %v3439
  %v3680 = vmul.f32 %v3560, %v3440
  %v3681 = vmul.f32 %v3561, %v3441
  %v3682 = vmul.f32 %v3562, %v3442
  %v3683 = vmul.f32 %v3563, %v3443
  %3685 = vset.pattern.permute.xlu0 0
  %3686 = vperm.xlu0 %3685, %v3564
  %v3687 = vpop.permute.xlu0 %3686
  %3690 = vset.pattern.permute.xlu0 0
  %3691 = vperm.xlu0 %3690, %v3565
  %v3692 = vpop.permute.xlu0 %3691
  %3695 = vset.pattern.permute.xlu0 0
  %3696 = vperm.xlu0 %3695, %v3566
  %v3697 = vpop.permute.xlu0 %3696
  %3700 = vset.pattern.permute.xlu0 0
  %3701 = vperm.xlu0 %3700, %v3567
  %v3702 = vpop.permute.xlu0 %3701
  %3705 = vset.pattern.permute.xlu0 0
  %3706 = vperm.xlu0 %3705, %v3568
  %v3707 = vpop.permute.xlu0 %3706
  %3710 = vset.pattern.permute.xlu0 0
  %3711 = vperm.xlu0 %3710, %v3569
  %v3712 = vpop.permute.xlu0 %3711
  %3715 = vset.pattern.permute.xlu0 0
  %3716 = vperm.xlu0 %3715, %v3570
  %v3717 = vpop.permute.xlu0 %3716
  %3720 = vset.pattern.permute.xlu0 0
  %3721 = vperm.xlu0 %3720, %v3571
  %v3722 = vpop.permute.xlu0 %3721
  %3725 = vset.pattern.permute.xlu0 0
  %3726 = vperm.xlu0 %3725, %v3572
  %v3727 = vpop.permute.xlu0 %3726
  %3730 = vset.pattern.permute.xlu0 0
  %3731 = vperm.xlu0 %3730, %v3573
  %v3732 = vpop.permute.xlu0 %3731
  %3735 = vset.pattern.permute.xlu0 0
  %3736 = vperm.xlu0 %3735, %v3574
  %v3737 = vpop.permute.xlu0 %3736
  %3740 = vset.pattern.permute.xlu0 0
  %3741 = vperm.xlu0 %3740, %v3575
  %v3742 = vpop.permute.xlu0 %3741
  %3745 = vset.pattern.permute.xlu0 0
  %3746 = vperm.xlu0 %3745, %v3576
  %v3747 = vpop.permute.xlu0 %3746
  %3750 = vset.pattern.permute.xlu0 0
  %3751 = vperm.xlu0 %3750, %v3577
  %v3752 = vpop.permute.xlu0 %3751
  %3755 = vset.pattern.permute.xlu0 0
  %3756 = vperm.xlu0 %3755, %v3578
  %v3757 = vpop.permute.xlu0 %3756
  %3760 = vset.pattern.permute.xlu0 0
  %3761 = vperm.xlu0 %3760, %v3579
  %v3762 = vpop.permute.xlu0 %3761
  %3765 = vset.pattern.permute.xlu0 0
  %3766 = vperm.xlu0 %3765, %v3580
  %v3767 = vpop.permute.xlu0 %3766
  %3770 = vset.pattern.permute.xlu0 0
  %3771 = vperm.xlu0 %3770, %v3581
  %v3772 = vpop.permute.xlu0 %3771
  %3775 = vset.pattern.permute.xlu0 0
  %3776 = vperm.xlu0 %3775, %v3582
  %v3777 = vpop.permute.xlu0 %3776
  %3780 = vset.pattern.permute.xlu0 0
  %3781 = vperm.xlu0 %3780, %v3583
  %v3782 = vpop.permute.xlu0 %3781
  %3785 = vset.pattern.permute.xlu0 0
  %3786 = vperm.xlu0 %3785, %v3584
  %v3787 = vpop.permute.xlu0 %3786
  %3790 = vset.pattern.permute.xlu0 0
  %3791 = vperm.xlu0 %3790, %v3585
  %v3792 = vpop.permute.xlu0 %3791
  %3795 = vset.pattern.permute.xlu0 0
  %3796 = vperm.xlu0 %3795, %v3586
  %v3797 = vpop.permute.xlu0 %3796
  %3800 = vset.pattern.permute.xlu0 0
  %3801 = vperm.xlu0 %3800, %v3587
  %v3802 = vpop.permute.xlu0 %3801
  %3805 = vset.pattern.permute.xlu0 0
  %3806 = vperm.xlu0 %3805, %v3588
  %v3807 = vpop.permute.xlu0 %3806
  %3810 = vset.pattern.permute.xlu0 0
  %3811 = vperm.xlu0 %3810, %v3589
  %v3812 = vpop.permute.xlu0 %3811
  %3815 = vset.pattern.permute.xlu0 0
  %3816 = vperm.xlu0 %3815, %v3590
  %v3817 = vpop.permute.xlu0 %3816
  %3820 = vset.pattern.permute.xlu0 0
  %3821 = vperm.xlu0 %3820, %v3591
  %v3822 = vpop.permute.xlu0 %3821
  %3825 = vset.pattern.permute.xlu0 0
  %3826 = vperm.xlu0 %3825, %v3592
  %v3827 = vpop.permute.xlu0 %3826
  %3830 = vset.pattern.permute.xlu0 0
  %3831 = vperm.xlu0 %3830, %v3593
  %v3832 = vpop.permute.xlu0 %3831
  %3835 = vset.pattern.permute.xlu0 0
  %3836 = vperm.xlu0 %3835, %v3594
  %v3837 = vpop.permute.xlu0 %3836
  %3840 = vset.pattern.permute.xlu0 0
  %3841 = vperm.xlu0 %3840, %v3595
  %v3842 = vpop.permute.xlu0 %3841
  %3845 = vset.pattern.permute.xlu0 0
  %3846 = vperm.xlu0 %3845, %v3596
  %v3847 = vpop.permute.xlu0 %3846
  %3850 = vset.pattern.permute.xlu0 0
  %3851 = vperm.xlu0 %3850, %v3597
  %v3852 = vpop.permute.xlu0 %3851
  %3855 = vset.pattern.permute.xlu0 0
  %3856 = vperm.xlu0 %3855, %v3598
  %v3857 = vpop.permute.xlu0 %3856
  %3860 = vset.pattern.permute.xlu0 0
  %3861 = vperm.xlu0 %3860, %v3599
  %v3862 = vpop.permute.xlu0 %3861
  %3865 = vset.pattern.permute.xlu0 0
  %3866 = vperm.xlu0 %3865, %v3600
  %v3867 = vpop.permute.xlu0 %3866
  %3870 = vset.pattern.permute.xlu0 0
  %3871 = vperm.xlu0 %3870, %v3601
  %v3872 = vpop.permute.xlu0 %3871
  %3875 = vset.pattern.permute.xlu0 0
  %3876 = vperm.xlu0 %3875, %v3602
  %v3877 = vpop.permute.xlu0 %3876
  %3880 = vset.pattern.permute.xlu0 0
  %3881 = vperm.xlu0 %3880, %v3603
  %v3882 = vpop.permute.xlu0 %3881
  %3885 = vset.pattern.permute.xlu0 0
  %3886 = vperm.xlu0 %3885, %v3604
  %v3887 = vpop.permute.xlu0 %3886
  %3890 = vset.pattern.permute.xlu0 0
  %3891 = vperm.xlu0 %3890, %v3605
  %v3892 = vpop.permute.xlu0 %3891
  %3895 = vset.pattern.permute.xlu0 0
  %3896 = vperm.xlu0 %3895, %v3606
  %v3897 = vpop.permute.xlu0 %3896
  %3900 = vset.pattern.permute.xlu0 0
  %3901 = vperm.xlu0 %3900, %v3607
  %v3902 = vpop.permute.xlu0 %3901
  %3905 = vset.pattern.permute.xlu0 0
  %3906 = vperm.xlu0 %3905, %v3608
  %v3907 = vpop.permute.xlu0 %3906
  %3910 = vset.pattern.permute.xlu0 0
  %3911 = vperm.xlu0 %3910, %v3609
  %v3912 = vpop.permute.xlu0 %3911
  %3915 = vset.pattern.permute.xlu0 0
  %3916 = vperm.xlu0 %3915, %v3610
  %v3917 = vpop.permute.xlu0 %3916
  %3920 = vset.pattern.permute.xlu0 0
  %3921 = vperm.xlu0 %3920, %v3611
  %v3922 = vpop.permute.xlu0 %3921
  %3925 = vset.pattern.permute.xlu0 0
  %3926 = vperm.xlu0 %3925, %v3612
  %v3927 = vpop.permute.xlu0 %3926
  %3930 = vset.pattern.permute.xlu0 0
  %3931 = vperm.xlu0 %3930, %v3613
  %v3932 = vpop.permute.xlu0 %3931
  %3935 = vset.pattern.permute.xlu0 0
  %3936 = vperm.xlu0 %3935, %v3614
  %v3937 = vpop.permute.xlu0 %3936
  %3940 = vset.pattern.permute.xlu0 0
  %3941 = vperm.xlu0 %3940, %v3615
  %v3942 = vpop.permute.xlu0 %3941
  %3945 = vset.pattern.permute.xlu0 0
  %3946 = vperm.xlu0 %3945, %v3616
  %v3947 = vpop.permute.xlu0 %3946
  %3950 = vset.pattern.permute.xlu0 0
  %3951 = vperm.xlu0 %3950, %v3617
  %v3952 = vpop.permute.xlu0 %3951
  %3955 = vset.pattern.permute.xlu0 0
  %3956 = vperm.xlu0 %3955, %v3618
  %v3957 = vpop.permute.xlu0 %3956
  %3960 = vset.pattern.permute.xlu0 0
  %3961 = vperm.xlu0 %3960, %v3619
  %v3962 = vpop.permute.xlu0 %3961
  %3965 = vset.pattern.permute.xlu0 0
  %3966 = vperm.xlu0 %3965, %v3620
  %v3967 = vpop.permute.xlu0 %3966
  %3970 = vset.pattern.permute.xlu0 0
  %3971 = vperm.xlu0 %3970, %v3621
  %v3972 = vpop.permute.xlu0 %3971
  %3975 = vset.pattern.permute.xlu0 0
  %3976 = vperm.xlu0 %3975, %v3622
  %v3977 = vpop.permute.xlu0 %3976
  %3980 = vset.pattern.permute.xlu0 0
  %3981 = vperm.xlu0 %3980, %v3623
  %v3982 = vpop.permute.xlu0 %3981
  %3985 = vset.pattern.permute.xlu0 0
  %3986 = vperm.xlu0 %3985, %v3624
  %v3987 = vpop.permute.xlu0 %3986
  %3990 = vset.pattern.permute.xlu0 0
  %3991 = vperm.xlu0 %3990, %v3625
  %v3992 = vpop.permute.xlu0 %3991
  %3995 = vset.pattern.permute.xlu0 0
  %3996 = vperm.xlu0 %3995, %v3626
  %v3997 = vpop.permute.xlu0 %3996
  %4000 = vset.pattern.permute.xlu0 0
  %4001 = vperm.xlu0 %4000, %v3627
  %v4002 = vpop.permute.xlu0 %4001
  %4005 = vset.pattern.permute.xlu0 0
  %4006 = vperm.xlu0 %4005, %v3628
  %v4007 = vpop.permute.xlu0 %4006
  %4010 = vset.pattern.permute.xlu0 0
  %4011 = vperm.xlu0 %4010, %v3629
  %v4012 = vpop.permute.xlu0 %4011
  %4015 = vset.pattern.permute.xlu0 0
  %4016 = vperm.xlu0 %4015, %v3630
  %v4017 = vpop.permute.xlu0 %4016
  %4020 = vset.pattern.permute.xlu0 0
  %4021 = vperm.xlu0 %4020, %v3631
  %v4022 = vpop.permute.xlu0 %4021
  %4025 = vset.pattern.permute.xlu0 0
  %4026 = vperm.xlu0 %4025, %v3632
  %v4027 = vpop.permute.xlu0 %4026
  %4030 = vset.pattern.permute.xlu0 0
  %4031 = vperm.xlu0 %4030, %v3633
  %v4032 = vpop.permute.xlu0 %4031
  %4035 = vset.pattern.permute.xlu0 0
  %4036 = vperm.xlu0 %4035, %v3634
  %v4037 = vpop.permute.xlu0 %4036
  %4040 = vset.pattern.permute.xlu0 0
  %4041 = vperm.xlu0 %4040, %v3635
  %v4042 = vpop.permute.xlu0 %4041
  %4045 = vset.pattern.permute.xlu0 0
  %4046 = vperm.xlu0 %4045, %v3636
  %v4047 = vpop.permute.xlu0 %4046
  %4050 = vset.pattern.permute.xlu0 0
  %4051 = vperm.xlu0 %4050, %v3637
  %v4052 = vpop.permute.xlu0 %4051
  %4055 = vset.pattern.permute.xlu0 0
  %4056 = vperm.xlu0 %4055, %v3638
  %v4057 = vpop.permute.xlu0 %4056
  %4060 = vset.pattern.permute.xlu0 0
  %4061 = vperm.xlu0 %4060, %v3639
  %v4062 = vpop.permute.xlu0 %4061
  %4065 = vset.pattern.permute.xlu0 0
  %4066 = vperm.xlu0 %4065, %v3640
  %v4067 = vpop.permute.xlu0 %4066
  %4070 = vset.pattern.permute.xlu0 0
  %4071 = vperm.xlu0 %4070, %v3641
  %v4072 = vpop.permute.xlu0 %4071
  %4075 = vset.pattern.permute.xlu0 0
  %4076 = vperm.xlu0 %4075, %v3642
  %v4077 = vpop.permute.xlu0 %4076
  %4080 = vset.pattern.permute.xlu0 0
  %4081 = vperm.xlu0 %4080, %v3643
  %v4082 = vpop.permute.xlu0 %4081
  %4085 = vset.pattern.permute.xlu0 0
  %4086 = vperm.xlu0 %4085, %v3644
  %v4087 = vpop.permute.xlu0 %4086
  %4090 = vset.pattern.permute.xlu0 0
  %4091 = vperm.xlu0 %4090, %v3645
  %v4092 = vpop.permute.xlu0 %4091
  %4095 = vset.pattern.permute.xlu0 0
  %4096 = vperm.xlu0 %4095, %v3646
  %v4097 = vpop.permute.xlu0 %4096
  %4100 = vset.pattern.permute.xlu0 0
  %4101 = vperm.xlu0 %4100, %v3647
  %v4102 = vpop.permute.xlu0 %4101
  %4105 = vset.pattern.permute.xlu0 0
  %4106 = vperm.xlu0 %4105, %v3648
  %v4107 = vpop.permute.xlu0 %4106
  %4110 = vset.pattern.permute.xlu0 0
  %4111 = vperm.xlu0 %4110, %v3649
  %v4112 = vpop.permute.xlu0 %4111
  %4115 = vset.pattern.permute.xlu0 0
  %4116 = vperm.xlu0 %4115, %v3650
  %v4117 = vpop.permute.xlu0 %4116
  %4120 = vset.pattern.permute.xlu0 0
  %4121 = vperm.xlu0 %4120, %v3651
  %v4122 = vpop.permute.xlu0 %4121
  %4125 = vset.pattern.permute.xlu0 0
  %4126 = vperm.xlu0 %4125, %v3652
  %v4127 = vpop.permute.xlu0 %4126
  %4130 = vset.pattern.permute.xlu0 0
  %4131 = vperm.xlu0 %4130, %v3653
  %v4132 = vpop.permute.xlu0 %4131
  %4135 = vset.pattern.permute.xlu0 0
  %4136 = vperm.xlu0 %4135, %v3654
  %v4137 = vpop.permute.xlu0 %4136
  %4140 = vset.pattern.permute.xlu0 0
  %4141 = vperm.xlu0 %4140, %v3655
  %v4142 = vpop.permute.xlu0 %4141
  %4145 = vset.pattern.permute.xlu0 0
  %4146 = vperm.xlu0 %4145, %v3656
  %v4147 = vpop.permute.xlu0 %4146
  %4150 = vset.pattern.permute.xlu0 0
  %4151 = vperm.xlu0 %4150, %v3657
  %v4152 = vpop.permute.xlu0 %4151
  %4155 = vset.pattern.permute.xlu0 0
  %4156 = vperm.xlu0 %4155, %v3658
  %v4157 = vpop.permute.xlu0 %4156
  %4160 = vset.pattern.permute.xlu0 0
  %4161 = vperm.xlu0 %4160, %v3659
  %v4162 = vpop.permute.xlu0 %4161
  %4165 = vset.pattern.permute.xlu0 0
  %4166 = vperm.xlu0 %4165, %v3660
  %v4167 = vpop.permute.xlu0 %4166
  %4170 = vset.pattern.permute.xlu0 0
  %4171 = vperm.xlu0 %4170, %v3661
  %v4172 = vpop.permute.xlu0 %4171
  %4175 = vset.pattern.permute.xlu0 0
  %4176 = vperm.xlu0 %4175, %v3662
  %v4177 = vpop.permute.xlu0 %4176
  %4180 = vset.pattern.permute.xlu0 0
  %4181 = vperm.xlu0 %4180, %v3663
  %v4182 = vpop.permute.xlu0 %4181
  %4185 = vset.pattern.permute.xlu0 0
  %4186 = vperm.xlu0 %4185, %v3664
  %v4187 = vpop.permute.xlu0 %4186
  %4190 = vset.pattern.permute.xlu0 0
  %4191 = vperm.xlu0 %4190, %v3665
  %v4192 = vpop.permute.xlu0 %4191
  %4195 = vset.pattern.permute.xlu0 0
  %4196 = vperm.xlu0 %4195, %v3666
  %v4197 = vpop.permute.xlu0 %4196
  %4200 = vset.pattern.permute.xlu0 0
  %4201 = vperm.xlu0 %4200, %v3667
  %v4202 = vpop.permute.xlu0 %4201
  %4205 = vset.pattern.permute.xlu0 0
  %4206 = vperm.xlu0 %4205, %v3668
  %v4207 = vpop.permute.xlu0 %4206
  %4210 = vset.pattern.permute.xlu0 0
  %4211 = vperm.xlu0 %4210, %v3669
  %v4212 = vpop.permute.xlu0 %4211
  %4215 = vset.pattern.permute.xlu0 0
  %4216 = vperm.xlu0 %4215, %v3670
  %v4217 = vpop.permute.xlu0 %4216
  %4220 = vset.pattern.permute.xlu0 0
  %4221 = vperm.xlu0 %4220, %v3671
  %v4222 = vpop.permute.xlu0 %4221
  %4225 = vset.pattern.permute.xlu0 0
  %4226 = vperm.xlu0 %4225, %v3672
  %v4227 = vpop.permute.xlu0 %4226
  %4230 = vset.pattern.permute.xlu0 0
  %4231 = vperm.xlu0 %4230, %v3673
  %v4232 = vpop.permute.xlu0 %4231
  %4235 = vset.pattern.permute.xlu0 0
  %4236 = vperm.xlu0 %4235, %v3674
  %v4237 = vpop.permute.xlu0 %4236
  %4240 = vset.pattern.permute.xlu0 0
  %4241 = vperm.xlu0 %4240, %v3675
  %v4242 = vpop.permute.xlu0 %4241
  %4245 = vset.pattern.permute.xlu0 0
  %4246 = vperm.xlu0 %4245, %v3676
  %v4247 = vpop.permute.xlu0 %4246
  %4250 = vset.pattern.permute.xlu0 0
  %4251 = vperm.xlu0 %4250, %v3677
  %v4252 = vpop.permute.xlu0 %4251
  %4255 = vset.pattern.permute.xlu0 0
  %4256 = vperm.xlu0 %4255, %v3678
  %v4257 = vpop.permute.xlu0 %4256
  %4260 = vset.pattern.permute.xlu0 0
  %4261 = vperm.xlu0 %4260, %v3679
  %v4262 = vpop.permute.xlu0 %4261
  %4265 = vset.pattern.permute.xlu0 0
  %4266 = vperm.xlu0 %4265, %v3680
  %v4267 = vpop.permute.xlu0 %4266
  %4270 = vset.pattern.permute.xlu0 0
  %4271 = vperm.xlu0 %4270, %v3681
  %v4272 = vpop.permute.xlu0 %4271
  %4275 = vset.pattern.permute.xlu0 0
  %4276 = vperm.xlu0 %4275, %v3682
  %v4277 = vpop.permute.xlu0 %4276
  %4280 = vset.pattern.permute.xlu0 0
  %4281 = vperm.xlu0 %4280, %v3683
  %v4282 = vpop.permute.xlu0 %4281
  %v4284 = vmul.f32 %v2124, %v3687
  %v4285 = vmul.f32 %v2125, %v3687
  %v4286 = vmul.f32 %v2126, %v3692
  %v4287 = vmul.f32 %v2127, %v3692
  %v4288 = vmul.f32 %v2128, %v3697
  %v4289 = vmul.f32 %v2129, %v3697
  %v4290 = vmul.f32 %v2130, %v3702
  %v4291 = vmul.f32 %v2131, %v3702
  %v4292 = vmul.f32 %v2132, %v3707
  %v4293 = vmul.f32 %v2133, %v3707
  %v4294 = vmul.f32 %v2134, %v3712
  %v4295 = vmul.f32 %v2135, %v3712
  %v4296 = vmul.f32 %v2136, %v3717
  %v4297 = vmul.f32 %v2137, %v3717
  %v4298 = vmul.f32 %v2138, %v3722
  %v4299 = vmul.f32 %v2139, %v3722
  %v4300 = vmul.f32 %v2140, %v3727
  %v4301 = vmul.f32 %v2141, %v3727
  %v4302 = vmul.f32 %v2142, %v3732
  %v4303 = vmul.f32 %v2143, %v3732
  %v4304 = vmul.f32 %v2144, %v3737
  %v4305 = vmul.f32 %v2145, %v3737
  %v4306 = vmul.f32 %v2146, %v3742
  %v4307 = vmul.f32 %v2147, %v3742
  %v4308 = vmul.f32 %v2148, %v3747
  %v4309 = vmul.f32 %v2149, %v3747
  %v4310 = vmul.f32 %v2150, %v3752
  %v4311 = vmul.f32 %v2151, %v3752
  %v4312 = vmul.f32 %v2152, %v3757
  %v4313 = vmul.f32 %v2153, %v3757
  %v4314 = vmul.f32 %v2154, %v3762
  %v4315 = vmul.f32 %v2155, %v3762
  %v4316 = vmul.f32 %v2156, %v3767
  %v4317 = vmul.f32 %v2157, %v3767
  %v4318 = vmul.f32 %v2158, %v3772
  %v4319 = vmul.f32 %v2159, %v3772
  %v4320 = vmul.f32 %v2160, %v3777
  %v4321 = vmul.f32 %v2161, %v3777
  %v4322 = vmul.f32 %v2162, %v3782
  %v4323 = vmul.f32 %v2163, %v3782
  %v4324 = vmul.f32 %v2164, %v3787
  %v4325 = vmul.f32 %v2165, %v3787
  %v4326 = vmul.f32 %v2166, %v3792
  %v4327 = vmul.f32 %v2167, %v3792
  %v4328 = vmul.f32 %v2168, %v3797
  %v4329 = vmul.f32 %v2169, %v3797
  %v4330 = vmul.f32 %v2170, %v3802
  %v4331 = vmul.f32 %v2171, %v3802
  %v4332 = vmul.f32 %v2172, %v3807
  %v4333 = vmul.f32 %v2173, %v3807
  %v4334 = vmul.f32 %v2174, %v3812
  %v4335 = vmul.f32 %v2175, %v3812
  %v4336 = vmul.f32 %v2176, %v3817
  %v4337 = vmul.f32 %v2177, %v3817
  %v4338 = vmul.f32 %v2178, %v3822
  %v4339 = vmul.f32 %v2179, %v3822
  %v4340 = vmul.f32 %v2180, %v3827
  %v4341 = vmul.f32 %v2181, %v3827
  %v4342 = vmul.f32 %v2182, %v3832
  %v4343 = vmul.f32 %v2183, %v3832
  %v4344 = vmul.f32 %v2184, %v3837
  %v4345 = vmul.f32 %v2185, %v3837
  %v4346 = vmul.f32 %v2186, %v3842
  %v4347 = vmul.f32 %v2187, %v3842
  %v4348 = vmul.f32 %v2188, %v3847
  %v4349 = vmul.f32 %v2189, %v3847
  %v4350 = vmul.f32 %v2190, %v3852
  %v4351 = vmul.f32 %v2191, %v3852
  %v4352 = vmul.f32 %v2192, %v3857
  %v4353 = vmul.f32 %v2193, %v3857
  %v4354 = vmul.f32 %v2194, %v3862
  %v4355 = vmul.f32 %v2195, %v3862
  %v4356 = vmul.f32 %v2196, %v3867
  %v4357 = vmul.f32 %v2197, %v3867
  %v4358 = vmul.f32 %v2198, %v3872
  %v4359 = vmul.f32 %v2199, %v3872
  %v4360 = vmul.f32 %v2200, %v3877
  %v4361 = vmul.f32 %v2201, %v3877
  %v4362 = vmul.f32 %v2202, %v3882
  %v4363 = vmul.f32 %v2203, %v3882
  %v4364 = vmul.f32 %v2204, %v3887
  %v4365 = vmul.f32 %v2205, %v3887
  %v4366 = vmul.f32 %v2206, %v3892
  %v4367 = vmul.f32 %v2207, %v3892
  %v4368 = vmul.f32 %v2208, %v3897
  %v4369 = vmul.f32 %v2209, %v3897
  %v4370 = vmul.f32 %v2210, %v3902
  %v4371 = vmul.f32 %v2211, %v3902
  %v4372 = vmul.f32 %v2212, %v3907
  %v4373 = vmul.f32 %v2213, %v3907
  %v4374 = vmul.f32 %v2214, %v3912
  %v4375 = vmul.f32 %v2215, %v3912
  %v4376 = vmul.f32 %v2216, %v3917
  %v4377 = vmul.f32 %v2217, %v3917
  %v4378 = vmul.f32 %v2218, %v3922
  %v4379 = vmul.f32 %v2219, %v3922
  %v4380 = vmul.f32 %v2220, %v3927
  %v4381 = vmul.f32 %v2221, %v3927
  %v4382 = vmul.f32 %v2222, %v3932
  %v4383 = vmul.f32 %v2223, %v3932
  %v4384 = vmul.f32 %v2224, %v3937
  %v4385 = vmul.f32 %v2225, %v3937
  %v4386 = vmul.f32 %v2226, %v3942
  %v4387 = vmul.f32 %v2227, %v3942
  %v4388 = vmul.f32 %v2228, %v3947
  %v4389 = vmul.f32 %v2229, %v3947
  %v4390 = vmul.f32 %v2230, %v3952
  %v4391 = vmul.f32 %v2231, %v3952
  %v4392 = vmul.f32 %v2232, %v3957
  %v4393 = vmul.f32 %v2233, %v3957
  %v4394 = vmul.f32 %v2234, %v3962
  %v4395 = vmul.f32 %v2235, %v3962
  %v4396 = vmul.f32 %v2236, %v3967
  %v4397 = vmul.f32 %v2237, %v3967
  %v4398 = vmul.f32 %v2238, %v3972
  %v4399 = vmul.f32 %v2239, %v3972
  %v4400 = vmul.f32 %v2240, %v3977
  %v4401 = vmul.f32 %v2241, %v3977
  %v4402 = vmul.f32 %v2242, %v3982
  %v4403 = vmul.f32 %v2243, %v3982
  %v4404 = vmul.f32 %v2244, %v3987
  %v4405 = vmul.f32 %v2245, %v3987
  %v4406 = vmul.f32 %v2246, %v3992
  %v4407 = vmul.f32 %v2247, %v3992
  %v4408 = vmul.f32 %v2248, %v3997
  %v4409 = vmul.f32 %v2249, %v3997
  %v4410 = vmul.f32 %v2250, %v4002
  %v4411 = vmul.f32 %v2251, %v4002
  %v4412 = vmul.f32 %v2252, %v4007
  %v4413 = vmul.f32 %v2253, %v4007
  %v4414 = vmul.f32 %v2254, %v4012
  %v4415 = vmul.f32 %v2255, %v4012
  %v4416 = vmul.f32 %v2256, %v4017
  %v4417 = vmul.f32 %v2257, %v4017
  %v4418 = vmul.f32 %v2258, %v4022
  %v4419 = vmul.f32 %v2259, %v4022
  %v4420 = vmul.f32 %v2260, %v4027
  %v4421 = vmul.f32 %v2261, %v4027
  %v4422 = vmul.f32 %v2262, %v4032
  %v4423 = vmul.f32 %v2263, %v4032
  %v4424 = vmul.f32 %v2264, %v4037
  %v4425 = vmul.f32 %v2265, %v4037
  %v4426 = vmul.f32 %v2266, %v4042
  %v4427 = vmul.f32 %v2267, %v4042
  %v4428 = vmul.f32 %v2268, %v4047
  %v4429 = vmul.f32 %v2269, %v4047
  %v4430 = vmul.f32 %v2270, %v4052
  %v4431 = vmul.f32 %v2271, %v4052
  %v4432 = vmul.f32 %v2272, %v4057
  %v4433 = vmul.f32 %v2273, %v4057
  %v4434 = vmul.f32 %v2274, %v4062
  %v4435 = vmul.f32 %v2275, %v4062
  %v4436 = vmul.f32 %v2276, %v4067
  %v4437 = vmul.f32 %v2277, %v4067
  %v4438 = vmul.f32 %v2278, %v4072
  %v4439 = vmul.f32 %v2279, %v4072
  %v4440 = vmul.f32 %v2280, %v4077
  %v4441 = vmul.f32 %v2281, %v4077
  %v4442 = vmul.f32 %v2282, %v4082
  %v4443 = vmul.f32 %v2283, %v4082
  %v4444 = vmul.f32 %v2284, %v4087
  %v4445 = vmul.f32 %v2285, %v4087
  %v4446 = vmul.f32 %v2286, %v4092
  %v4447 = vmul.f32 %v2287, %v4092
  %v4448 = vmul.f32 %v2288, %v4097
  %v4449 = vmul.f32 %v2289, %v4097
  %v4450 = vmul.f32 %v2290, %v4102
  %v4451 = vmul.f32 %v2291, %v4102
  %v4452 = vmul.f32 %v2292, %v4107
  %v4453 = vmul.f32 %v2293, %v4107
  %v4454 = vmul.f32 %v2294, %v4112
  %v4455 = vmul.f32 %v2295, %v4112
  %v4456 = vmul.f32 %v2296, %v4117
  %v4457 = vmul.f32 %v2297, %v4117
  %v4458 = vmul.f32 %v2298, %v4122
  %v4459 = vmul.f32 %v2299, %v4122
  %v4460 = vmul.f32 %v2300, %v4127
  %v4461 = vmul.f32 %v2301, %v4127
  %v4462 = vmul.f32 %v2302, %v4132
  %v4463 = vmul.f32 %v2303, %v4132
  %v4464 = vmul.f32 %v2304, %v4137
  %v4465 = vmul.f32 %v2305, %v4137
  %v4466 = vmul.f32 %v2306, %v4142
  %v4467 = vmul.f32 %v2307, %v4142
  %v4468 = vmul.f32 %v2308, %v4147
  %v4469 = vmul.f32 %v2309, %v4147
  %v4470 = vmul.f32 %v2310, %v4152
  %v4471 = vmul.f32 %v2311, %v4152
  %v4472 = vmul.f32 %v2312, %v4157
  %v4473 = vmul.f32 %v2313, %v4157
  %v4474 = vmul.f32 %v2314, %v4162
  %v4475 = vmul.f32 %v2315, %v4162
  %v4476 = vmul.f32 %v2316, %v4167
  %v4477 = vmul.f32 %v2317, %v4167
  %v4478 = vmul.f32 %v2318, %v4172
  %v4479 = vmul.f32 %v2319, %v4172
  %v4480 = vmul.f32 %v2320, %v4177
  %v4481 = vmul.f32 %v2321, %v4177
  %v4482 = vmul.f32 %v2322, %v4182
  %v4483 = vmul.f32 %v2323, %v4182
  %v4484 = vmul.f32 %v2324, %v4187
  %v4485 = vmul.f32 %v2325, %v4187
  %v4486 = vmul.f32 %v2326, %v4192
  %v4487 = vmul.f32 %v2327, %v4192
  %v4488 = vmul.f32 %v2328, %v4197
  %v4489 = vmul.f32 %v2329, %v4197
  %v4490 = vmul.f32 %v2330, %v4202
  %v4491 = vmul.f32 %v2331, %v4202
  %v4492 = vmul.f32 %v2332, %v4207
  %v4493 = vmul.f32 %v2333, %v4207
  %v4494 = vmul.f32 %v2334, %v4212
  %v4495 = vmul.f32 %v2335, %v4212
  %v4496 = vmul.f32 %v2336, %v4217
  %v4497 = vmul.f32 %v2337, %v4217
  %v4498 = vmul.f32 %v2338, %v4222
  %v4499 = vmul.f32 %v2339, %v4222
  %v4500 = vmul.f32 %v2340, %v4227
  %v4501 = vmul.f32 %v2341, %v4227
  %v4502 = vmul.f32 %v2342, %v4232
  %v4503 = vmul.f32 %v2343, %v4232
  %v4504 = vmul.f32 %v2344, %v4237
  %v4505 = vmul.f32 %v2345, %v4237
  %v4506 = vmul.f32 %v2346, %v4242
  %v4507 = vmul.f32 %v2347, %v4242
  %v4508 = vmul.f32 %v2348, %v4247
  %v4509 = vmul.f32 %v2349, %v4247
  %v4510 = vmul.f32 %v2350, %v4252
  %v4511 = vmul.f32 %v2351, %v4252
  %v4512 = vmul.f32 %v2352, %v4257
  %v4513 = vmul.f32 %v2353, %v4257
  %v4514 = vmul.f32 %v2354, %v4262
  %v4515 = vmul.f32 %v2355, %v4262
  %v4516 = vmul.f32 %v2356, %v4267
  %v4517 = vmul.f32 %v2357, %v4267
  %v4518 = vmul.f32 %v2358, %v4272
  %v4519 = vmul.f32 %v2359, %v4272
  %v4520 = vmul.f32 %v2360, %v4277
  %v4521 = vmul.f32 %v2361, %v4277
  %v4522 = vmul.f32 %v2362, %v4282
  %v4523 = vmul.f32 %v2363, %v4282
  %4525 = vset.pattern.permute.xlu0 1
  %4526 = vperm.xlu0 %4525, %v3444
  %v4527 = vpop.permute.xlu0 %4526
  %4530 = vset.pattern.permute.xlu0 1
  %4531 = vperm.xlu0 %4530, %v3445
  %v4532 = vpop.permute.xlu0 %4531
  %4535 = vset.pattern.permute.xlu0 1
  %4536 = vperm.xlu0 %4535, %v3446
  %v4537 = vpop.permute.xlu0 %4536
  %4540 = vset.pattern.permute.xlu0 1
  %4541 = vperm.xlu0 %4540, %v3447
  %v4542 = vpop.permute.xlu0 %4541
  %4545 = vset.pattern.permute.xlu0 1
  %4546 = vperm.xlu0 %4545, %v3448
  %v4547 = vpop.permute.xlu0 %4546
  %4550 = vset.pattern.permute.xlu0 1
  %4551 = vperm.xlu0 %4550, %v3449
  %v4552 = vpop.permute.xlu0 %4551
  %4555 = vset.pattern.permute.xlu0 1
  %4556 = vperm.xlu0 %4555, %v3450
  %v4557 = vpop.permute.xlu0 %4556
  %4560 = vset.pattern.permute.xlu0 1
  %4561 = vperm.xlu0 %4560, %v3451
  %v4562 = vpop.permute.xlu0 %4561
  %4565 = vset.pattern.permute.xlu0 1
  %4566 = vperm.xlu0 %4565, %v3452
  %v4567 = vpop.permute.xlu0 %4566
  %4570 = vset.pattern.permute.xlu0 1
  %4571 = vperm.xlu0 %4570, %v3453
  %v4572 = vpop.permute.xlu0 %4571
  %4575 = vset.pattern.permute.xlu0 1
  %4576 = vperm.xlu0 %4575, %v3454
  %v4577 = vpop.permute.xlu0 %4576
  %4580 = vset.pattern.permute.xlu0 1
  %4581 = vperm.xlu0 %4580, %v3455
  %v4582 = vpop.permute.xlu0 %4581
  %4585 = vset.pattern.permute.xlu0 1
  %4586 = vperm.xlu0 %4585, %v3456
  %v4587 = vpop.permute.xlu0 %4586
  %4590 = vset.pattern.permute.xlu0 1
  %4591 = vperm.xlu0 %4590, %v3457
  %v4592 = vpop.permute.xlu0 %4591
  %4595 = vset.pattern.permute.xlu0 1
  %4596 = vperm.xlu0 %4595, %v3458
  %v4597 = vpop.permute.xlu0 %4596
  %4600 = vset.pattern.permute.xlu0 1
  %4601 = vperm.xlu0 %4600, %v3459
  %v4602 = vpop.permute.xlu0 %4601
  %4605 = vset.pattern.permute.xlu0 1
  %4606 = vperm.xlu0 %4605, %v3460
  %v4607 = vpop.permute.xlu0 %4606
  %4610 = vset.pattern.permute.xlu0 1
  %4611 = vperm.xlu0 %4610, %v3461
  %v4612 = vpop.permute.xlu0 %4611
  %4615 = vset.pattern.permute.xlu0 1
  %4616 = vperm.xlu0 %4615, %v3462
  %v4617 = vpop.permute.xlu0 %4616
  %4620 = vset.pattern.permute.xlu0 1
  %4621 = vperm.xlu0 %4620, %v3463
  %v4622 = vpop.permute.xlu0 %4621
  %4625 = vset.pattern.permute.xlu0 1
  %4626 = vperm.xlu0 %4625, %v3464
  %v4627 = vpop.permute.xlu0 %4626
  %4630 = vset.pattern.permute.xlu0 1
  %4631 = vperm.xlu0 %4630, %v3465
  %v4632 = vpop.permute.xlu0 %4631
  %4635 = vset.pattern.permute.xlu0 1
  %4636 = vperm.xlu0 %4635, %v3466
  %v4637 = vpop.permute.xlu0 %4636
  %4640 = vset.pattern.permute.xlu0 1
  %4641 = vperm.xlu0 %4640, %v3467
  %v4642 = vpop.permute.xlu0 %4641
  %4645 = vset.pattern.permute.xlu0 1
  %4646 = vperm.xlu0 %4645, %v3468
  %v4647 = vpop.permute.xlu0 %4646
  %4650 = vset.pattern.permute.xlu0 1
  %4651 = vperm.xlu0 %4650, %v3469
  %v4652 = vpop.permute.xlu0 %4651
  %4655 = vset.pattern.permute.xlu0 1
  %4656 = vperm.xlu0 %4655, %v3470
  %v4657 = vpop.permute.xlu0 %4656
  %4660 = vset.pattern.permute.xlu0 1
  %4661 = vperm.xlu0 %4660, %v3471
  %v4662 = vpop.permute.xlu0 %4661
  %4665 = vset.pattern.permute.xlu0 1
  %4666 = vperm.xlu0 %4665, %v3472
  %v4667 = vpop.permute.xlu0 %4666
  %4670 = vset.pattern.permute.xlu0 1
  %4671 = vperm.xlu0 %4670, %v3473
  %v4672 = vpop.permute.xlu0 %4671
  %4675 = vset.pattern.permute.xlu0 1
  %4676 = vperm.xlu0 %4675, %v3474
  %v4677 = vpop.permute.xlu0 %4676
  %4680 = vset.pattern.permute.xlu0 1
  %4681 = vperm.xlu0 %4680, %v3475
  %v4682 = vpop.permute.xlu0 %4681
  %4685 = vset.pattern.permute.xlu0 1
  %4686 = vperm.xlu0 %4685, %v3476
  %v4687 = vpop.permute.xlu0 %4686
  %4690 = vset.pattern.permute.xlu0 1
  %4691 = vperm.xlu0 %4690, %v3477
  %v4692 = vpop.permute.xlu0 %4691
  %4695 = vset.pattern.permute.xlu0 1
  %4696 = vperm.xlu0 %4695, %v3478
  %v4697 = vpop.permute.xlu0 %4696
  %4700 = vset.pattern.permute.xlu0 1
  %4701 = vperm.xlu0 %4700, %v3479
  %v4702 = vpop.permute.xlu0 %4701
  %4705 = vset.pattern.permute.xlu0 1
  %4706 = vperm.xlu0 %4705, %v3480
  %v4707 = vpop.permute.xlu0 %4706
  %4710 = vset.pattern.permute.xlu0 1
  %4711 = vperm.xlu0 %4710, %v3481
  %v4712 = vpop.permute.xlu0 %4711
  %4715 = vset.pattern.permute.xlu0 1
  %4716 = vperm.xlu0 %4715, %v3482
  %v4717 = vpop.permute.xlu0 %4716
  %4720 = vset.pattern.permute.xlu0 1
  %4721 = vperm.xlu0 %4720, %v3483
  %v4722 = vpop.permute.xlu0 %4721
  %4725 = vset.pattern.permute.xlu0 1
  %4726 = vperm.xlu0 %4725, %v3484
  %v4727 = vpop.permute.xlu0 %4726
  %4730 = vset.pattern.permute.xlu0 1
  %4731 = vperm.xlu0 %4730, %v3485
  %v4732 = vpop.permute.xlu0 %4731
  %4735 = vset.pattern.permute.xlu0 1
  %4736 = vperm.xlu0 %4735, %v3486
  %v4737 = vpop.permute.xlu0 %4736
  %4740 = vset.pattern.permute.xlu0 1
  %4741 = vperm.xlu0 %4740, %v3487
  %v4742 = vpop.permute.xlu0 %4741
  %4745 = vset.pattern.permute.xlu0 1
  %4746 = vperm.xlu0 %4745, %v3488
  %v4747 = vpop.permute.xlu0 %4746
  %4750 = vset.pattern.permute.xlu0 1
  %4751 = vperm.xlu0 %4750, %v3489
  %v4752 = vpop.permute.xlu0 %4751
  %4755 = vset.pattern.permute.xlu0 1
  %4756 = vperm.xlu0 %4755, %v3490
  %v4757 = vpop.permute.xlu0 %4756
  %4760 = vset.pattern.permute.xlu0 1
  %4761 = vperm.xlu0 %4760, %v3491
  %v4762 = vpop.permute.xlu0 %4761
  %4765 = vset.pattern.permute.xlu0 1
  %4766 = vperm.xlu0 %4765, %v3492
  %v4767 = vpop.permute.xlu0 %4766
  %4770 = vset.pattern.permute.xlu0 1
  %4771 = vperm.xlu0 %4770, %v3493
  %v4772 = vpop.permute.xlu0 %4771
  %4775 = vset.pattern.permute.xlu0 1
  %4776 = vperm.xlu0 %4775, %v3494
  %v4777 = vpop.permute.xlu0 %4776
  %4780 = vset.pattern.permute.xlu0 1
  %4781 = vperm.xlu0 %4780, %v3495
  %v4782 = vpop.permute.xlu0 %4781
  %4785 = vset.pattern.permute.xlu0 1
  %4786 = vperm.xlu0 %4785, %v3496
  %v4787 = vpop.permute.xlu0 %4786
  %4790 = vset.pattern.permute.xlu0 1
  %4791 = vperm.xlu0 %4790, %v3497
  %v4792 = vpop.permute.xlu0 %4791
  %4795 = vset.pattern.permute.xlu0 1
  %4796 = vperm.xlu0 %4795, %v3498
  %v4797 = vpop.permute.xlu0 %4796
  %4800 = vset.pattern.permute.xlu0 1
  %4801 = vperm.xlu0 %4800, %v3499
  %v4802 = vpop.permute.xlu0 %4801
  %4805 = vset.pattern.permute.xlu0 1
  %4806 = vperm.xlu0 %4805, %v3500
  %v4807 = vpop.permute.xlu0 %4806
  %4810 = vset.pattern.permute.xlu0 1
  %4811 = vperm.xlu0 %4810, %v3501
  %v4812 = vpop.permute.xlu0 %4811
  %4815 = vset.pattern.permute.xlu0 1
  %4816 = vperm.xlu0 %4815, %v3502
  %v4817 = vpop.permute.xlu0 %4816
  %4820 = vset.pattern.permute.xlu0 1
  %4821 = vperm.xlu0 %4820, %v3503
  %v4822 = vpop.permute.xlu0 %4821
  %4825 = vset.pattern.permute.xlu0 1
  %4826 = vperm.xlu0 %4825, %v3504
  %v4827 = vpop.permute.xlu0 %4826
  %4830 = vset.pattern.permute.xlu0 1
  %4831 = vperm.xlu0 %4830, %v3505
  %v4832 = vpop.permute.xlu0 %4831
  %4835 = vset.pattern.permute.xlu0 1
  %4836 = vperm.xlu0 %4835, %v3506
  %v4837 = vpop.permute.xlu0 %4836
  %4840 = vset.pattern.permute.xlu0 1
  %4841 = vperm.xlu0 %4840, %v3507
  %v4842 = vpop.permute.xlu0 %4841
  %4845 = vset.pattern.permute.xlu0 1
  %4846 = vperm.xlu0 %4845, %v3508
  %v4847 = vpop.permute.xlu0 %4846
  %4850 = vset.pattern.permute.xlu0 1
  %4851 = vperm.xlu0 %4850, %v3509
  %v4852 = vpop.permute.xlu0 %4851
  %4855 = vset.pattern.permute.xlu0 1
  %4856 = vperm.xlu0 %4855, %v3510
  %v4857 = vpop.permute.xlu0 %4856
  %4860 = vset.pattern.permute.xlu0 1
  %4861 = vperm.xlu0 %4860, %v3511
  %v4862 = vpop.permute.xlu0 %4861
  %4865 = vset.pattern.permute.xlu0 1
  %4866 = vperm.xlu0 %4865, %v3512
  %v4867 = vpop.permute.xlu0 %4866
  %4870 = vset.pattern.permute.xlu0 1
  %4871 = vperm.xlu0 %4870, %v3513
  %v4872 = vpop.permute.xlu0 %4871
  %4875 = vset.pattern.permute.xlu0 1
  %4876 = vperm.xlu0 %4875, %v3514
  %v4877 = vpop.permute.xlu0 %4876
  %4880 = vset.pattern.permute.xlu0 1
  %4881 = vperm.xlu0 %4880, %v3515
  %v4882 = vpop.permute.xlu0 %4881
  %4885 = vset.pattern.permute.xlu0 1
  %4886 = vperm.xlu0 %4885, %v3516
  %v4887 = vpop.permute.xlu0 %4886
  %4890 = vset.pattern.permute.xlu0 1
  %4891 = vperm.xlu0 %4890, %v3517
  %v4892 = vpop.permute.xlu0 %4891
  %4895 = vset.pattern.permute.xlu0 1
  %4896 = vperm.xlu0 %4895, %v3518
  %v4897 = vpop.permute.xlu0 %4896
  %4900 = vset.pattern.permute.xlu0 1
  %4901 = vperm.xlu0 %4900, %v3519
  %v4902 = vpop.permute.xlu0 %4901
  %4905 = vset.pattern.permute.xlu0 1
  %4906 = vperm.xlu0 %4905, %v3520
  %v4907 = vpop.permute.xlu0 %4906
  %4910 = vset.pattern.permute.xlu0 1
  %4911 = vperm.xlu0 %4910, %v3521
  %v4912 = vpop.permute.xlu0 %4911
  %4915 = vset.pattern.permute.xlu0 1
  %4916 = vperm.xlu0 %4915, %v3522
  %v4917 = vpop.permute.xlu0 %4916
  %4920 = vset.pattern.permute.xlu0 1
  %4921 = vperm.xlu0 %4920, %v3523
  %v4922 = vpop.permute.xlu0 %4921
  %4925 = vset.pattern.permute.xlu0 1
  %4926 = vperm.xlu0 %4925, %v3524
  %v4927 = vpop.permute.xlu0 %4926
  %4930 = vset.pattern.permute.xlu0 1
  %4931 = vperm.xlu0 %4930, %v3525
  %v4932 = vpop.permute.xlu0 %4931
  %4935 = vset.pattern.permute.xlu0 1
  %4936 = vperm.xlu0 %4935, %v3526
  %v4937 = vpop.permute.xlu0 %4936
  %4940 = vset.pattern.permute.xlu0 1
  %4941 = vperm.xlu0 %4940, %v3527
  %v4942 = vpop.permute.xlu0 %4941
  %4945 = vset.pattern.permute.xlu0 1
  %4946 = vperm.xlu0 %4945, %v3528
  %v4947 = vpop.permute.xlu0 %4946
  %4950 = vset.pattern.permute.xlu0 1
  %4951 = vperm.xlu0 %4950, %v3529
  %v4952 = vpop.permute.xlu0 %4951
  %4955 = vset.pattern.permute.xlu0 1
  %4956 = vperm.xlu0 %4955, %v3530
  %v4957 = vpop.permute.xlu0 %4956
  %4960 = vset.pattern.permute.xlu0 1
  %4961 = vperm.xlu0 %4960, %v3531
  %v4962 = vpop.permute.xlu0 %4961
  %4965 = vset.pattern.permute.xlu0 1
  %4966 = vperm.xlu0 %4965, %v3532
  %v4967 = vpop.permute.xlu0 %4966
  %4970 = vset.pattern.permute.xlu0 1
  %4971 = vperm.xlu0 %4970, %v3533
  %v4972 = vpop.permute.xlu0 %4971
  %4975 = vset.pattern.permute.xlu0 1
  %4976 = vperm.xlu0 %4975, %v3534
  %v4977 = vpop.permute.xlu0 %4976
  %4980 = vset.pattern.permute.xlu0 1
  %4981 = vperm.xlu0 %4980, %v3535
  %v4982 = vpop.permute.xlu0 %4981
  %4985 = vset.pattern.permute.xlu0 1
  %4986 = vperm.xlu0 %4985, %v3536
  %v4987 = vpop.permute.xlu0 %4986
  %4990 = vset.pattern.permute.xlu0 1
  %4991 = vperm.xlu0 %4990, %v3537
  %v4992 = vpop.permute.xlu0 %4991
  %4995 = vset.pattern.permute.xlu0 1
  %4996 = vperm.xlu0 %4995, %v3538
  %v4997 = vpop.permute.xlu0 %4996
  %5000 = vset.pattern.permute.xlu0 1
  %5001 = vperm.xlu0 %5000, %v3539
  %v5002 = vpop.permute.xlu0 %5001
  %5005 = vset.pattern.permute.xlu0 1
  %5006 = vperm.xlu0 %5005, %v3540
  %v5007 = vpop.permute.xlu0 %5006
  %5010 = vset.pattern.permute.xlu0 1
  %5011 = vperm.xlu0 %5010, %v3541
  %v5012 = vpop.permute.xlu0 %5011
  %5015 = vset.pattern.permute.xlu0 1
  %5016 = vperm.xlu0 %5015, %v3542
  %v5017 = vpop.permute.xlu0 %5016
  %5020 = vset.pattern.permute.xlu0 1
  %5021 = vperm.xlu0 %5020, %v3543
  %v5022 = vpop.permute.xlu0 %5021
  %5025 = vset.pattern.permute.xlu0 1
  %5026 = vperm.xlu0 %5025, %v3544
  %v5027 = vpop.permute.xlu0 %5026
  %5030 = vset.pattern.permute.xlu0 1
  %5031 = vperm.xlu0 %5030, %v3545
  %v5032 = vpop.permute.xlu0 %5031
  %5035 = vset.pattern.permute.xlu0 1
  %5036 = vperm.xlu0 %5035, %v3546
  %v5037 = vpop.permute.xlu0 %5036
  %5040 = vset.pattern.permute.xlu0 1
  %5041 = vperm.xlu0 %5040, %v3547
  %v5042 = vpop.permute.xlu0 %5041
  %5045 = vset.pattern.permute.xlu0 1
  %5046 = vperm.xlu0 %5045, %v3548
  %v5047 = vpop.permute.xlu0 %5046
  %5050 = vset.pattern.permute.xlu0 1
  %5051 = vperm.xlu0 %5050, %v3549
  %v5052 = vpop.permute.xlu0 %5051
  %5055 = vset.pattern.permute.xlu0 1
  %5056 = vperm.xlu0 %5055, %v3550
  %v5057 = vpop.permute.xlu0 %5056
  %5060 = vset.pattern.permute.xlu0 1
  %5061 = vperm.xlu0 %5060, %v3551
  %v5062 = vpop.permute.xlu0 %5061
  %5065 = vset.pattern.permute.xlu0 1
  %5066 = vperm.xlu0 %5065, %v3552
  %v5067 = vpop.permute.xlu0 %5066
  %5070 = vset.pattern.permute.xlu0 1
  %5071 = vperm.xlu0 %5070, %v3553
  %v5072 = vpop.permute.xlu0 %5071
  %5075 = vset.pattern.permute.xlu0 1
  %5076 = vperm.xlu0 %5075, %v3554
  %v5077 = vpop.permute.xlu0 %5076
  %5080 = vset.pattern.permute.xlu0 1
  %5081 = vperm.xlu0 %5080, %v3555
  %v5082 = vpop.permute.xlu0 %5081
  %5085 = vset.pattern.permute.xlu0 1
  %5086 = vperm.xlu0 %5085, %v3556
  %v5087 = vpop.permute.xlu0 %5086
  %5090 = vset.pattern.permute.xlu0 1
  %5091 = vperm.xlu0 %5090, %v3557
  %v5092 = vpop.permute.xlu0 %5091
  %5095 = vset.pattern.permute.xlu0 1
  %5096 = vperm.xlu0 %5095, %v3558
  %v5097 = vpop.permute.xlu0 %5096
  %5100 = vset.pattern.permute.xlu0 1
  %5101 = vperm.xlu0 %5100, %v3559
  %v5102 = vpop.permute.xlu0 %5101
  %5105 = vset.pattern.permute.xlu0 1
  %5106 = vperm.xlu0 %5105, %v3560
  %v5107 = vpop.permute.xlu0 %5106
  %5110 = vset.pattern.permute.xlu0 1
  %5111 = vperm.xlu0 %5110, %v3561
  %v5112 = vpop.permute.xlu0 %5111
  %5115 = vset.pattern.permute.xlu0 1
  %5116 = vperm.xlu0 %5115, %v3562
  %v5117 = vpop.permute.xlu0 %5116
  %5120 = vset.pattern.permute.xlu0 1
  %5121 = vperm.xlu0 %5120, %v3563
  %v5122 = vpop.permute.xlu0 %5121
  %v5124 = vadd.f32 %v4284, %v4527
  %v5125 = vadd.f32 %v4285, %v4527
  %v5126 = vadd.f32 %v4286, %v4532
  %v5127 = vadd.f32 %v4287, %v4532
  %v5128 = vadd.f32 %v4288, %v4537
  %v5129 = vadd.f32 %v4289, %v4537
  %v5130 = vadd.f32 %v4290, %v4542
  %v5131 = vadd.f32 %v4291, %v4542
  %v5132 = vadd.f32 %v4292, %v4547
  %v5133 = vadd.f32 %v4293, %v4547
  %v5134 = vadd.f32 %v4294, %v4552
  %v5135 = vadd.f32 %v4295, %v4552
  %v5136 = vadd.f32 %v4296, %v4557
  %v5137 = vadd.f32 %v4297, %v4557
  %v5138 = vadd.f32 %v4298, %v4562
  %v5139 = vadd.f32 %v4299, %v4562
  %v5140 = vadd.f32 %v4300, %v4567
  %v5141 = vadd.f32 %v4301, %v4567
  %v5142 = vadd.f32 %v4302, %v4572
  %v5143 = vadd.f32 %v4303, %v4572
  %v5144 = vadd.f32 %v4304, %v4577
  %v5145 = vadd.f32 %v4305, %v4577
  %v5146 = vadd.f32 %v4306, %v4582
  %v5147 = vadd.f32 %v4307, %v4582
  %v5148 = vadd.f32 %v4308, %v4587
  %v5149 = vadd.f32 %v4309, %v4587
  %v5150 = vadd.f32 %v4310, %v4592
  %v5151 = vadd.f32 %v4311, %v4592
  %v5152 = vadd.f32 %v4312, %v4597
  %v5153 = vadd.f32 %v4313, %v4597
  %v5154 = vadd.f32 %v4314, %v4602
  %v5155 = vadd.f32 %v4315, %v4602
  %v5156 = vadd.f32 %v4316, %v4607
  %v5157 = vadd.f32 %v4317, %v4607
  %v5158 = vadd.f32 %v4318, %v4612
  %v5159 = vadd.f32 %v4319, %v4612
  %v5160 = vadd.f32 %v4320, %v4617
  %v5161 = vadd.f32 %v4321, %v4617
  %v5162 = vadd.f32 %v4322, %v4622
  %v5163 = vadd.f32 %v4323, %v4622
  %v5164 = vadd.f32 %v4324, %v4627
  %v5165 = vadd.f32 %v4325, %v4627
  %v5166 = vadd.f32 %v4326, %v4632
  %v5167 = vadd.f32 %v4327, %v4632
  %v5168 = vadd.f32 %v4328, %v4637
  %v5169 = vadd.f32 %v4329, %v4637
  %v5170 = vadd.f32 %v4330, %v4642
  %v5171 = vadd.f32 %v4331, %v4642
  %v5172 = vadd.f32 %v4332, %v4647
  %v5173 = vadd.f32 %v4333, %v4647
  %v5174 = vadd.f32 %v4334, %v4652
  %v5175 = vadd.f32 %v4335, %v4652
  %v5176 = vadd.f32 %v4336, %v4657
  %v5177 = vadd.f32 %v4337, %v4657
  %v5178 = vadd.f32 %v4338, %v4662
  %v5179 = vadd.f32 %v4339, %v4662
  %v5180 = vadd.f32 %v4340, %v4667
  %v5181 = vadd.f32 %v4341, %v4667
  %v5182 = vadd.f32 %v4342, %v4672
  %v5183 = vadd.f32 %v4343, %v4672
  %v5184 = vadd.f32 %v4344, %v4677
  %v5185 = vadd.f32 %v4345, %v4677
  %v5186 = vadd.f32 %v4346, %v4682
  %v5187 = vadd.f32 %v4347, %v4682
  %v5188 = vadd.f32 %v4348, %v4687
  %v5189 = vadd.f32 %v4349, %v4687
  %v5190 = vadd.f32 %v4350, %v4692
  %v5191 = vadd.f32 %v4351, %v4692
  %v5192 = vadd.f32 %v4352, %v4697
  %v5193 = vadd.f32 %v4353, %v4697
  %v5194 = vadd.f32 %v4354, %v4702
  %v5195 = vadd.f32 %v4355, %v4702
  %v5196 = vadd.f32 %v4356, %v4707
  %v5197 = vadd.f32 %v4357, %v4707
  %v5198 = vadd.f32 %v4358, %v4712
  %v5199 = vadd.f32 %v4359, %v4712
  %v5200 = vadd.f32 %v4360, %v4717
  %v5201 = vadd.f32 %v4361, %v4717
  %v5202 = vadd.f32 %v4362, %v4722
  %v5203 = vadd.f32 %v4363, %v4722
  %v5204 = vadd.f32 %v4364, %v4727
  %v5205 = vadd.f32 %v4365, %v4727
  %v5206 = vadd.f32 %v4366, %v4732
  %v5207 = vadd.f32 %v4367, %v4732
  %v5208 = vadd.f32 %v4368, %v4737
  %v5209 = vadd.f32 %v4369, %v4737
  %v5210 = vadd.f32 %v4370, %v4742
  %v5211 = vadd.f32 %v4371, %v4742
  %v5212 = vadd.f32 %v4372, %v4747
  %v5213 = vadd.f32 %v4373, %v4747
  %v5214 = vadd.f32 %v4374, %v4752
  %v5215 = vadd.f32 %v4375, %v4752
  %v5216 = vadd.f32 %v4376, %v4757
  %v5217 = vadd.f32 %v4377, %v4757
  %v5218 = vadd.f32 %v4378, %v4762
  %v5219 = vadd.f32 %v4379, %v4762
  %v5220 = vadd.f32 %v4380, %v4767
  %v5221 = vadd.f32 %v4381, %v4767
  %v5222 = vadd.f32 %v4382, %v4772
  %v5223 = vadd.f32 %v4383, %v4772
  %v5224 = vadd.f32 %v4384, %v4777
  %v5225 = vadd.f32 %v4385, %v4777
  %v5226 = vadd.f32 %v4386, %v4782
  %v5227 = vadd.f32 %v4387, %v4782
  %v5228 = vadd.f32 %v4388, %v4787
  %v5229 = vadd.f32 %v4389, %v4787
  %v5230 = vadd.f32 %v4390, %v4792
  %v5231 = vadd.f32 %v4391, %v4792
  %v5232 = vadd.f32 %v4392, %v4797
  %v5233 = vadd.f32 %v4393, %v4797
  %v5234 = vadd.f32 %v4394, %v4802
  %v5235 = vadd.f32 %v4395, %v4802
  %v5236 = vadd.f32 %v4396, %v4807
  %v5237 = vadd.f32 %v4397, %v4807
  %v5238 = vadd.f32 %v4398, %v4812
  %v5239 = vadd.f32 %v4399, %v4812
  %v5240 = vadd.f32 %v4400, %v4817
  %v5241 = vadd.f32 %v4401, %v4817
  %v5242 = vadd.f32 %v4402, %v4822
  %v5243 = vadd.f32 %v4403, %v4822
  %v5244 = vadd.f32 %v4404, %v4827
  %v5245 = vadd.f32 %v4405, %v4827
  %v5246 = vadd.f32 %v4406, %v4832
  %v5247 = vadd.f32 %v4407, %v4832
  %v5248 = vadd.f32 %v4408, %v4837
  %v5249 = vadd.f32 %v4409, %v4837
  %v5250 = vadd.f32 %v4410, %v4842
  %v5251 = vadd.f32 %v4411, %v4842
  %v5252 = vadd.f32 %v4412, %v4847
  %v5253 = vadd.f32 %v4413, %v4847
  %v5254 = vadd.f32 %v4414, %v4852
  %v5255 = vadd.f32 %v4415, %v4852
  %v5256 = vadd.f32 %v4416, %v4857
  %v5257 = vadd.f32 %v4417, %v4857
  %v5258 = vadd.f32 %v4418, %v4862
  %v5259 = vadd.f32 %v4419, %v4862
  %v5260 = vadd.f32 %v4420, %v4867
  %v5261 = vadd.f32 %v4421, %v4867
  %v5262 = vadd.f32 %v4422, %v4872
  %v5263 = vadd.f32 %v4423, %v4872
  %v5264 = vadd.f32 %v4424, %v4877
  %v5265 = vadd.f32 %v4425, %v4877
  %v5266 = vadd.f32 %v4426, %v4882
  %v5267 = vadd.f32 %v4427, %v4882
  %v5268 = vadd.f32 %v4428, %v4887
  %v5269 = vadd.f32 %v4429, %v4887
  %v5270 = vadd.f32 %v4430, %v4892
  %v5271 = vadd.f32 %v4431, %v4892
  %v5272 = vadd.f32 %v4432, %v4897
  %v5273 = vadd.f32 %v4433, %v4897
  %v5274 = vadd.f32 %v4434, %v4902
  %v5275 = vadd.f32 %v4435, %v4902
  %v5276 = vadd.f32 %v4436, %v4907
  %v5277 = vadd.f32 %v4437, %v4907
  %v5278 = vadd.f32 %v4438, %v4912
  %v5279 = vadd.f32 %v4439, %v4912
  %v5280 = vadd.f32 %v4440, %v4917
  %v5281 = vadd.f32 %v4441, %v4917
  %v5282 = vadd.f32 %v4442, %v4922
  %v5283 = vadd.f32 %v4443, %v4922
  %v5284 = vadd.f32 %v4444, %v4927
  %v5285 = vadd.f32 %v4445, %v4927
  %v5286 = vadd.f32 %v4446, %v4932
  %v5287 = vadd.f32 %v4447, %v4932
  %v5288 = vadd.f32 %v4448, %v4937
  %v5289 = vadd.f32 %v4449, %v4937
  %v5290 = vadd.f32 %v4450, %v4942
  %v5291 = vadd.f32 %v4451, %v4942
  %v5292 = vadd.f32 %v4452, %v4947
  %v5293 = vadd.f32 %v4453, %v4947
  %v5294 = vadd.f32 %v4454, %v4952
  %v5295 = vadd.f32 %v4455, %v4952
  %v5296 = vadd.f32 %v4456, %v4957
  %v5297 = vadd.f32 %v4457, %v4957
  %v5298 = vadd.f32 %v4458, %v4962
  %v5299 = vadd.f32 %v4459, %v4962
  %v5300 = vadd.f32 %v4460, %v4967
  %v5301 = vadd.f32 %v4461, %v4967
  %v5302 = vadd.f32 %v4462, %v4972
  %v5303 = vadd.f32 %v4463, %v4972
  %v5304 = vadd.f32 %v4464, %v4977
  %v5305 = vadd.f32 %v4465, %v4977
  %v5306 = vadd.f32 %v4466, %v4982
  %v5307 = vadd.f32 %v4467, %v4982
  %v5308 = vadd.f32 %v4468, %v4987
  %v5309 = vadd.f32 %v4469, %v4987
  %v5310 = vadd.f32 %v4470, %v4992
  %v5311 = vadd.f32 %v4471, %v4992
  %v5312 = vadd.f32 %v4472, %v4997
  %v5313 = vadd.f32 %v4473, %v4997
  %v5314 = vadd.f32 %v4474, %v5002
  %v5315 = vadd.f32 %v4475, %v5002
  %v5316 = vadd.f32 %v4476, %v5007
  %v5317 = vadd.f32 %v4477, %v5007
  %v5318 = vadd.f32 %v4478, %v5012
  %v5319 = vadd.f32 %v4479, %v5012
  %v5320 = vadd.f32 %v4480, %v5017
  %v5321 = vadd.f32 %v4481, %v5017
  %v5322 = vadd.f32 %v4482, %v5022
  %v5323 = vadd.f32 %v4483, %v5022
  %v5324 = vadd.f32 %v4484, %v5027
  %v5325 = vadd.f32 %v4485, %v5027
  %v5326 = vadd.f32 %v4486, %v5032
  %v5327 = vadd.f32 %v4487, %v5032
  %v5328 = vadd.f32 %v4488, %v5037
  %v5329 = vadd.f32 %v4489, %v5037
  %v5330 = vadd.f32 %v4490, %v5042
  %v5331 = vadd.f32 %v4491, %v5042
  %v5332 = vadd.f32 %v4492, %v5047
  %v5333 = vadd.f32 %v4493, %v5047
  %v5334 = vadd.f32 %v4494, %v5052
  %v5335 = vadd.f32 %v4495, %v5052
  %v5336 = vadd.f32 %v4496, %v5057
  %v5337 = vadd.f32 %v4497, %v5057
  %v5338 = vadd.f32 %v4498, %v5062
  %v5339 = vadd.f32 %v4499, %v5062
  %v5340 = vadd.f32 %v4500, %v5067
  %v5341 = vadd.f32 %v4501, %v5067
  %v5342 = vadd.f32 %v4502, %v5072
  %v5343 = vadd.f32 %v4503, %v5072
  %v5344 = vadd.f32 %v4504, %v5077
  %v5345 = vadd.f32 %v4505, %v5077
  %v5346 = vadd.f32 %v4506, %v5082
  %v5347 = vadd.f32 %v4507, %v5082
  %v5348 = vadd.f32 %v4508, %v5087
  %v5349 = vadd.f32 %v4509, %v5087
  %v5350 = vadd.f32 %v4510, %v5092
  %v5351 = vadd.f32 %v4511, %v5092
  %v5352 = vadd.f32 %v4512, %v5097
  %v5353 = vadd.f32 %v4513, %v5097
  %v5354 = vadd.f32 %v4514, %v5102
  %v5355 = vadd.f32 %v4515, %v5102
  %v5356 = vadd.f32 %v4516, %v5107
  %v5357 = vadd.f32 %v4517, %v5107
  %v5358 = vadd.f32 %v4518, %v5112
  %v5359 = vadd.f32 %v4519, %v5112
  %v5360 = vadd.f32 %v4520, %v5117
  %v5361 = vadd.f32 %v4521, %v5117
  %v5362 = vadd.f32 %v4522, %v5122
  %v5363 = vadd.f32 %v4523, %v5122
  %5364 = vst [vmem:[%s4] sm:$0xff] %v5124
  %5365 = vst.msk [vmem:[%s4 + $0x8] sm:$0xff] %vm1523, %v5125
  %5366 = vst [vmem:[%s4 + $0x10] sm:$0xff] %v5126
  %5367 = vst.msk [vmem:[%s4 + $0x18] sm:$0xff] %vm1523, %v5127
  %5368 = vst [vmem:[%s4 + $0x20] sm:$0xff] %v5128
  %5369 = vst.msk [vmem:[%s4 + $0x28] sm:$0xff] %vm1523, %v5129
  %5370 = vst [vmem:[%s4 + $0x30] sm:$0xff] %v5130
  %5371 = vst.msk [vmem:[%s4 + $0x38] sm:$0xff] %vm1523, %v5131
  %5372 = vst [vmem:[%s4 + $0x40] sm:$0xff] %v5132
  %5373 = vst.msk [vmem:[%s4 + $0x48] sm:$0xff] %vm1523, %v5133
  %5374 = vst [vmem:[%s4 + $0x50] sm:$0xff] %v5134
  %5375 = vst.msk [vmem:[%s4 + $0x58] sm:$0xff] %vm1523, %v5135
  %5376 = vst [vmem:[%s4 + $0x60] sm:$0xff] %v5136
  %5377 = vst.msk [vmem:[%s4 + $0x68] sm:$0xff] %vm1523, %v5137
  %5378 = vst [vmem:[%s4 + $0x70] sm:$0xff] %v5138
  %5379 = vst.msk [vmem:[%s4 + $0x78] sm:$0xff] %vm1523, %v5139
  %5380 = vst [vmem:[%s4 + $0x80] sm:$0xff] %v5140
  %5381 = vst.msk [vmem:[%s4 + $0x88] sm:$0xff] %vm1523, %v5141
  %5382 = vst [vmem:[%s4 + $0x90] sm:$0xff] %v5142
  %5383 = vst.msk [vmem:[%s4 + $0x98] sm:$0xff] %vm1523, %v5143
  %5384 = vst [vmem:[%s4 + $0xa0] sm:$0xff] %v5144
  %5385 = vst.msk [vmem:[%s4 + $0xa8] sm:$0xff] %vm1523, %v5145
  %5386 = vst [vmem:[%s4 + $0xb0] sm:$0xff] %v5146
  %5387 = vst.msk [vmem:[%s4 + $0xb8] sm:$0xff] %vm1523, %v5147
  %5388 = vst [vmem:[%s4 + $0xc0] sm:$0xff] %v5148
  %5389 = vst.msk [vmem:[%s4 + $0xc8] sm:$0xff] %vm1523, %v5149
  %5390 = vst [vmem:[%s4 + $0xd0] sm:$0xff] %v5150
  %5391 = vst.msk [vmem:[%s4 + $0xd8] sm:$0xff] %vm1523, %v5151
  %5392 = vst [vmem:[%s4 + $0xe0] sm:$0xff] %v5152
  %5393 = vst.msk [vmem:[%s4 + $0xe8] sm:$0xff] %vm1523, %v5153
  %5394 = vst [vmem:[%s4 + $0xf0] sm:$0xff] %v5154
  %5395 = vst.msk [vmem:[%s4 + $0xf8] sm:$0xff] %vm1523, %v5155
  %5396 = vst [vmem:[%s4 + $0x100] sm:$0xff] %v5156
  %5397 = vst.msk [vmem:[%s4 + $0x108] sm:$0xff] %vm1523, %v5157
  %5398 = vst [vmem:[%s4 + $0x110] sm:$0xff] %v5158
  %5399 = vst.msk [vmem:[%s4 + $0x118] sm:$0xff] %vm1523, %v5159
  %5400 = vst [vmem:[%s4 + $0x120] sm:$0xff] %v5160
  %5401 = vst.msk [vmem:[%s4 + $0x128] sm:$0xff] %vm1523, %v5161
  %5402 = vst [vmem:[%s4 + $0x130] sm:$0xff] %v5162
  %5403 = vst.msk [vmem:[%s4 + $0x138] sm:$0xff] %vm1523, %v5163
  %5404 = vst [vmem:[%s4 + $0x140] sm:$0xff] %v5164
  %5405 = vst.msk [vmem:[%s4 + $0x148] sm:$0xff] %vm1523, %v5165
  %5406 = vst [vmem:[%s4 + $0x150] sm:$0xff] %v5166
  %5407 = vst.msk [vmem:[%s4 + $0x158] sm:$0xff] %vm1523, %v5167
  %5408 = vst [vmem:[%s4 + $0x160] sm:$0xff] %v5168
  %5409 = vst.msk [vmem:[%s4 + $0x168] sm:$0xff] %vm1523, %v5169
  %5410 = vst [vmem:[%s4 + $0x170] sm:$0xff] %v5170
  %5411 = vst.msk [vmem:[%s4 + $0x178] sm:$0xff] %vm1523, %v5171
  %5412 = vst [vmem:[%s4 + $0x180] sm:$0xff] %v5172
  %5413 = vst.msk [vmem:[%s4 + $0x188] sm:$0xff] %vm1523, %v5173
  %5414 = vst [vmem:[%s4 + $0x190] sm:$0xff] %v5174
  %5415 = vst.msk [vmem:[%s4 + $0x198] sm:$0xff] %vm1523, %v5175
  %5416 = vst [vmem:[%s4 + $0x1a0] sm:$0xff] %v5176
  %5417 = vst.msk [vmem:[%s4 + $0x1a8] sm:$0xff] %vm1523, %v5177
  %5418 = vst [vmem:[%s4 + $0x1b0] sm:$0xff] %v5178
  %5419 = vst.msk [vmem:[%s4 + $0x1b8] sm:$0xff] %vm1523, %v5179
  %5420 = vst [vmem:[%s4 + $0x1c0] sm:$0xff] %v5180
  %5421 = vst.msk [vmem:[%s4 + $0x1c8] sm:$0xff] %vm1523, %v5181
  %5422 = vst [vmem:[%s4 + $0x1d0] sm:$0xff] %v5182
  %5423 = vst.msk [vmem:[%s4 + $0x1d8] sm:$0xff] %vm1523, %v5183
  %5424 = vst [vmem:[%s4 + $0x1e0] sm:$0xff] %v5184
  %5425 = vst.msk [vmem:[%s4 + $0x1e8] sm:$0xff] %vm1523, %v5185
  %5426 = vst [vmem:[%s4 + $0x1f0] sm:$0xff] %v5186
  %5427 = vst.msk [vmem:[%s4 + $0x1f8] sm:$0xff] %vm1523, %v5187
  %5428 = vst [vmem:[%s4 + $0x200] sm:$0xff] %v5188
  %5429 = vst.msk [vmem:[%s4 + $0x208] sm:$0xff] %vm1523, %v5189
  %5430 = vst [vmem:[%s4 + $0x210] sm:$0xff] %v5190
  %5431 = vst.msk [vmem:[%s4 + $0x218] sm:$0xff] %vm1523, %v5191
  %5432 = vst [vmem:[%s4 + $0x220] sm:$0xff] %v5192
  %5433 = vst.msk [vmem:[%s4 + $0x228] sm:$0xff] %vm1523, %v5193
  %5434 = vst [vmem:[%s4 + $0x230] sm:$0xff] %v5194
  %5435 = vst.msk [vmem:[%s4 + $0x238] sm:$0xff] %vm1523, %v5195
  %5436 = vst [vmem:[%s4 + $0x240] sm:$0xff] %v5196
  %5437 = vst.msk [vmem:[%s4 + $0x248] sm:$0xff] %vm1523, %v5197
  %5438 = vst [vmem:[%s4 + $0x250] sm:$0xff] %v5198
  %5439 = vst.msk [vmem:[%s4 + $0x258] sm:$0xff] %vm1523, %v5199
  %5440 = vst [vmem:[%s4 + $0x260] sm:$0xff] %v5200
  %5441 = vst.msk [vmem:[%s4 + $0x268] sm:$0xff] %vm1523, %v5201
  %5442 = vst [vmem:[%s4 + $0x270] sm:$0xff] %v5202
  %5443 = vst.msk [vmem:[%s4 + $0x278] sm:$0xff] %vm1523, %v5203
  %5444 = vst [vmem:[%s4 + $0x280] sm:$0xff] %v5204
  %5445 = vst.msk [vmem:[%s4 + $0x288] sm:$0xff] %vm1523, %v5205
  %5446 = vst [vmem:[%s4 + $0x290] sm:$0xff] %v5206
  %5447 = vst.msk [vmem:[%s4 + $0x298] sm:$0xff] %vm1523, %v5207
  %5448 = vst [vmem:[%s4 + $0x2a0] sm:$0xff] %v5208
  %5449 = vst.msk [vmem:[%s4 + $0x2a8] sm:$0xff] %vm1523, %v5209
  %5450 = vst [vmem:[%s4 + $0x2b0] sm:$0xff] %v5210
  %5451 = vst.msk [vmem:[%s4 + $0x2b8] sm:$0xff] %vm1523, %v5211
  %5452 = vst [vmem:[%s4 + $0x2c0] sm:$0xff] %v5212
  %5453 = vst.msk [vmem:[%s4 + $0x2c8] sm:$0xff] %vm1523, %v5213
  %5454 = vst [vmem:[%s4 + $0x2d0] sm:$0xff] %v5214
  %5455 = vst.msk [vmem:[%s4 + $0x2d8] sm:$0xff] %vm1523, %v5215
  %5456 = vst [vmem:[%s4 + $0x2e0] sm:$0xff] %v5216
  %5457 = vst.msk [vmem:[%s4 + $0x2e8] sm:$0xff] %vm1523, %v5217
  %5458 = vst [vmem:[%s4 + $0x2f0] sm:$0xff] %v5218
  %5459 = vst.msk [vmem:[%s4 + $0x2f8] sm:$0xff] %vm1523, %v5219
  %5460 = vst [vmem:[%s4 + $0x300] sm:$0xff] %v5220
  %5461 = vst.msk [vmem:[%s4 + $0x308] sm:$0xff] %vm1523, %v5221
  %5462 = vst [vmem:[%s4 + $0x310] sm:$0xff] %v5222
  %5463 = vst.msk [vmem:[%s4 + $0x318] sm:$0xff] %vm1523, %v5223
  %5464 = vst [vmem:[%s4 + $0x320] sm:$0xff] %v5224
  %5465 = vst.msk [vmem:[%s4 + $0x328] sm:$0xff] %vm1523, %v5225
  %5466 = vst [vmem:[%s4 + $0x330] sm:$0xff] %v5226
  %5467 = vst.msk [vmem:[%s4 + $0x338] sm:$0xff] %vm1523, %v5227
  %5468 = vst [vmem:[%s4 + $0x340] sm:$0xff] %v5228
  %5469 = vst.msk [vmem:[%s4 + $0x348] sm:$0xff] %vm1523, %v5229
  %5470 = vst [vmem:[%s4 + $0x350] sm:$0xff] %v5230
  %5471 = vst.msk [vmem:[%s4 + $0x358] sm:$0xff] %vm1523, %v5231
  %5472 = vst [vmem:[%s4 + $0x360] sm:$0xff] %v5232
  %5473 = vst.msk [vmem:[%s4 + $0x368] sm:$0xff] %vm1523, %v5233
  %5474 = vst [vmem:[%s4 + $0x370] sm:$0xff] %v5234
  %5475 = vst.msk [vmem:[%s4 + $0x378] sm:$0xff] %vm1523, %v5235
  %5476 = vst [vmem:[%s4 + $0x380] sm:$0xff] %v5236
  %5477 = vst.msk [vmem:[%s4 + $0x388] sm:$0xff] %vm1523, %v5237
  %5478 = vst [vmem:[%s4 + $0x390] sm:$0xff] %v5238
  %5479 = vst.msk [vmem:[%s4 + $0x398] sm:$0xff] %vm1523, %v5239
  %5480 = vst [vmem:[%s4 + $0x3a0] sm:$0xff] %v5240
  %5481 = vst.msk [vmem:[%s4 + $0x3a8] sm:$0xff] %vm1523, %v5241
  %5482 = vst [vmem:[%s4 + $0x3b0] sm:$0xff] %v5242
  %5483 = vst.msk [vmem:[%s4 + $0x3b8] sm:$0xff] %vm1523, %v5243
  %5484 = vst [vmem:[%s4 + $0x3c0] sm:$0xff] %v5244
  %5485 = vst.msk [vmem:[%s4 + $0x3c8] sm:$0xff] %vm1523, %v5245
  %5486 = vst [vmem:[%s4 + $0x3d0] sm:$0xff] %v5246
  %5487 = vst.msk [vmem:[%s4 + $0x3d8] sm:$0xff] %vm1523, %v5247
  %5488 = vst [vmem:[%s4 + $0x3e0] sm:$0xff] %v5248
  %5489 = vst.msk [vmem:[%s4 + $0x3e8] sm:$0xff] %vm1523, %v5249
  %5490 = vst [vmem:[%s4 + $0x3f0] sm:$0xff] %v5250
  %5491 = vst.msk [vmem:[%s4 + $0x3f8] sm:$0xff] %vm1523, %v5251
  %5492 = vst [vmem:[%s4 + $0x400] sm:$0xff] %v5252
  %5493 = vst.msk [vmem:[%s4 + $0x408] sm:$0xff] %vm1523, %v5253
  %5494 = vst [vmem:[%s4 + $0x410] sm:$0xff] %v5254
  %5495 = vst.msk [vmem:[%s4 + $0x418] sm:$0xff] %vm1523, %v5255
  %5496 = vst [vmem:[%s4 + $0x420] sm:$0xff] %v5256
  %5497 = vst.msk [vmem:[%s4 + $0x428] sm:$0xff] %vm1523, %v5257
  %5498 = vst [vmem:[%s4 + $0x430] sm:$0xff] %v5258
  %5499 = vst.msk [vmem:[%s4 + $0x438] sm:$0xff] %vm1523, %v5259
  %5500 = vst [vmem:[%s4 + $0x440] sm:$0xff] %v5260
  %5501 = vst.msk [vmem:[%s4 + $0x448] sm:$0xff] %vm1523, %v5261
  %5502 = vst [vmem:[%s4 + $0x450] sm:$0xff] %v5262
  %5503 = vst.msk [vmem:[%s4 + $0x458] sm:$0xff] %vm1523, %v5263
  %5504 = vst [vmem:[%s4 + $0x460] sm:$0xff] %v5264
  %5505 = vst.msk [vmem:[%s4 + $0x468] sm:$0xff] %vm1523, %v5265
  %5506 = vst [vmem:[%s4 + $0x470] sm:$0xff] %v5266
  %5507 = vst.msk [vmem:[%s4 + $0x478] sm:$0xff] %vm1523, %v5267
  %5508 = vst [vmem:[%s4 + $0x480] sm:$0xff] %v5268
  %5509 = vst.msk [vmem:[%s4 + $0x488] sm:$0xff] %vm1523, %v5269
  %5510 = vst [vmem:[%s4 + $0x490] sm:$0xff] %v5270
  %5511 = vst.msk [vmem:[%s4 + $0x498] sm:$0xff] %vm1523, %v5271
  %5512 = vst [vmem:[%s4 + $0x4a0] sm:$0xff] %v5272
  %5513 = vst.msk [vmem:[%s4 + $0x4a8] sm:$0xff] %vm1523, %v5273
  %5514 = vst [vmem:[%s4 + $0x4b0] sm:$0xff] %v5274
  %5515 = vst.msk [vmem:[%s4 + $0x4b8] sm:$0xff] %vm1523, %v5275
  %5516 = vst [vmem:[%s4 + $0x4c0] sm:$0xff] %v5276
  %5517 = vst.msk [vmem:[%s4 + $0x4c8] sm:$0xff] %vm1523, %v5277
  %5518 = vst [vmem:[%s4 + $0x4d0] sm:$0xff] %v5278
  %5519 = vst.msk [vmem:[%s4 + $0x4d8] sm:$0xff] %vm1523, %v5279
  %5520 = vst [vmem:[%s4 + $0x4e0] sm:$0xff] %v5280
  %5521 = vst.msk [vmem:[%s4 + $0x4e8] sm:$0xff] %vm1523, %v5281
  %5522 = vst [vmem:[%s4 + $0x4f0] sm:$0xff] %v5282
  %5523 = vst.msk [vmem:[%s4 + $0x4f8] sm:$0xff] %vm1523, %v5283
  %5524 = vst [vmem:[%s4 + $0x500] sm:$0xff] %v5284
  %5525 = vst.msk [vmem:[%s4 + $0x508] sm:$0xff] %vm1523, %v5285
  %5526 = vst [vmem:[%s4 + $0x510] sm:$0xff] %v5286
  %5527 = vst.msk [vmem:[%s4 + $0x518] sm:$0xff] %vm1523, %v5287
  %5528 = vst [vmem:[%s4 + $0x520] sm:$0xff] %v5288
  %5529 = vst.msk [vmem:[%s4 + $0x528] sm:$0xff] %vm1523, %v5289
  %5530 = vst [vmem:[%s4 + $0x530] sm:$0xff] %v5290
  %5531 = vst.msk [vmem:[%s4 + $0x538] sm:$0xff] %vm1523, %v5291
  %5532 = vst [vmem:[%s4 + $0x540] sm:$0xff] %v5292
  %5533 = vst.msk [vmem:[%s4 + $0x548] sm:$0xff] %vm1523, %v5293
  %5534 = vst [vmem:[%s4 + $0x550] sm:$0xff] %v5294
  %5535 = vst.msk [vmem:[%s4 + $0x558] sm:$0xff] %vm1523, %v5295
  %5536 = vst [vmem:[%s4 + $0x560] sm:$0xff] %v5296
  %5537 = vst.msk [vmem:[%s4 + $0x568] sm:$0xff] %vm1523, %v5297
  %5538 = vst [vmem:[%s4 + $0x570] sm:$0xff] %v5298
  %5539 = vst.msk [vmem:[%s4 + $0x578] sm:$0xff] %vm1523, %v5299
  %5540 = vst [vmem:[%s4 + $0x580] sm:$0xff] %v5300
  %5541 = vst.msk [vmem:[%s4 + $0x588] sm:$0xff] %vm1523, %v5301
  %5542 = vst [vmem:[%s4 + $0x590] sm:$0xff] %v5302
  %5543 = vst.msk [vmem:[%s4 + $0x598] sm:$0xff] %vm1523, %v5303
  %5544 = vst [vmem:[%s4 + $0x5a0] sm:$0xff] %v5304
  %5545 = vst.msk [vmem:[%s4 + $0x5a8] sm:$0xff] %vm1523, %v5305
  %5546 = vst [vmem:[%s4 + $0x5b0] sm:$0xff] %v5306
  %5547 = vst.msk [vmem:[%s4 + $0x5b8] sm:$0xff] %vm1523, %v5307
  %5548 = vst [vmem:[%s4 + $0x5c0] sm:$0xff] %v5308
  %5549 = vst.msk [vmem:[%s4 + $0x5c8] sm:$0xff] %vm1523, %v5309
  %5550 = vst [vmem:[%s4 + $0x5d0] sm:$0xff] %v5310
  %5551 = vst.msk [vmem:[%s4 + $0x5d8] sm:$0xff] %vm1523, %v5311
  %5552 = vst [vmem:[%s4 + $0x5e0] sm:$0xff] %v5312
  %5553 = vst.msk [vmem:[%s4 + $0x5e8] sm:$0xff] %vm1523, %v5313
  %5554 = vst [vmem:[%s4 + $0x5f0] sm:$0xff] %v5314
  %5555 = vst.msk [vmem:[%s4 + $0x5f8] sm:$0xff] %vm1523, %v5315
  %5556 = vst [vmem:[%s4 + $0x600] sm:$0xff] %v5316
  %5557 = vst.msk [vmem:[%s4 + $0x608] sm:$0xff] %vm1523, %v5317
  %5558 = vst [vmem:[%s4 + $0x610] sm:$0xff] %v5318
  %5559 = vst.msk [vmem:[%s4 + $0x618] sm:$0xff] %vm1523, %v5319
  %5560 = vst [vmem:[%s4 + $0x620] sm:$0xff] %v5320
  %5561 = vst.msk [vmem:[%s4 + $0x628] sm:$0xff] %vm1523, %v5321
  %5562 = vst [vmem:[%s4 + $0x630] sm:$0xff] %v5322
  %5563 = vst.msk [vmem:[%s4 + $0x638] sm:$0xff] %vm1523, %v5323
  %5564 = vst [vmem:[%s4 + $0x640] sm:$0xff] %v5324
  %5565 = vst.msk [vmem:[%s4 + $0x648] sm:$0xff] %vm1523, %v5325
  %5566 = vst [vmem:[%s4 + $0x650] sm:$0xff] %v5326
  %5567 = vst.msk [vmem:[%s4 + $0x658] sm:$0xff] %vm1523, %v5327
  %5568 = vst [vmem:[%s4 + $0x660] sm:$0xff] %v5328
  %5569 = vst.msk [vmem:[%s4 + $0x668] sm:$0xff] %vm1523, %v5329
  %5570 = vst [vmem:[%s4 + $0x670] sm:$0xff] %v5330
  %5571 = vst.msk [vmem:[%s4 + $0x678] sm:$0xff] %vm1523, %v5331
  %5572 = vst [vmem:[%s4 + $0x680] sm:$0xff] %v5332
  %5573 = vst.msk [vmem:[%s4 + $0x688] sm:$0xff] %vm1523, %v5333
  %5574 = vst [vmem:[%s4 + $0x690] sm:$0xff] %v5334
  %5575 = vst.msk [vmem:[%s4 + $0x698] sm:$0xff] %vm1523, %v5335
  %5576 = vst [vmem:[%s4 + $0x6a0] sm:$0xff] %v5336
  %5577 = vst.msk [vmem:[%s4 + $0x6a8] sm:$0xff] %vm1523, %v5337
  %5578 = vst [vmem:[%s4 + $0x6b0] sm:$0xff] %v5338
  %5579 = vst.msk [vmem:[%s4 + $0x6b8] sm:$0xff] %vm1523, %v5339
  %5580 = vst [vmem:[%s4 + $0x6c0] sm:$0xff] %v5340
  %5581 = vst.msk [vmem:[%s4 + $0x6c8] sm:$0xff] %vm1523, %v5341
  %5582 = vst [vmem:[%s4 + $0x6d0] sm:$0xff] %v5342
  %5583 = vst.msk [vmem:[%s4 + $0x6d8] sm:$0xff] %vm1523, %v5343
  %5584 = vst [vmem:[%s4 + $0x6e0] sm:$0xff] %v5344
  %5585 = vst.msk [vmem:[%s4 + $0x6e8] sm:$0xff] %vm1523, %v5345
  %5586 = vst [vmem:[%s4 + $0x6f0] sm:$0xff] %v5346
  %5587 = vst.msk [vmem:[%s4 + $0x6f8] sm:$0xff] %vm1523, %v5347
  %5588 = vst [vmem:[%s4 + $0x700] sm:$0xff] %v5348
  %5589 = vst.msk [vmem:[%s4 + $0x708] sm:$0xff] %vm1523, %v5349
  %5590 = vst [vmem:[%s4 + $0x710] sm:$0xff] %v5350
  %5591 = vst.msk [vmem:[%s4 + $0x718] sm:$0xff] %vm1523, %v5351
  %5592 = vst [vmem:[%s4 + $0x720] sm:$0xff] %v5352
  %5593 = vst.msk [vmem:[%s4 + $0x728] sm:$0xff] %vm1523, %v5353
  %5594 = vst [vmem:[%s4 + $0x730] sm:$0xff] %v5354
  %5595 = vst.msk [vmem:[%s4 + $0x738] sm:$0xff] %vm1523, %v5355
  %5596 = vst [vmem:[%s4 + $0x740] sm:$0xff] %v5356
  %5597 = vst.msk [vmem:[%s4 + $0x748] sm:$0xff] %vm1523, %v5357
  %5598 = vst [vmem:[%s4 + $0x750] sm:$0xff] %v5358
  %5599 = vst.msk [vmem:[%s4 + $0x758] sm:$0xff] %vm1523, %v5359
  %5600 = vst [vmem:[%s4 + $0x760] sm:$0xff] %v5360
  %5601 = vst.msk [vmem:[%s4 + $0x768] sm:$0xff] %vm1523, %v5361
  %5602 = vst [vmem:[%s4 + $0x770] sm:$0xff] %v5362
  %5603 = vst.msk [vmem:[%s4 + $0x778] sm:$0xff] %vm1523, %v5363
  // Predicated region
  $region18: #{tpu_custom_call.1} parent=0 // pred_check
    _
  $region19: #{tpu_custom_call.1} parent=0 // pred_check_branch
    %5605 = sbr.rel (0) target = $region21
  $region20: #{tpu_custom_call.1} parent=0 // pred_region
    _
  $region21: #{tpu_custom_call.1} parent=0 // pred_fallthru
    _
  // Predicated region
  $region22: #{tpu_custom_call.1} parent=0 // pred_check
    _
  $region23: #{tpu_custom_call.1} parent=0 // pred_check_branch
    %5607 = sbr.rel (0) target = $region25
  $region24: #{tpu_custom_call.1} parent=0 // pred_region
    _
  $region25: #{tpu_custom_call.1} parent=0 // pred_fallthru
    _

</llo_original>
